<compile_context>
chip_gen: v6e
topology: v6e:2x2x1
jax: 0.10.0
libtpu: 0.0.40
codegen_flags: <defaults>
</compile_context>

<pallas_src>
import functools
import math

import jax
import jax.numpy as jnp
from jax.experimental import pallas as pl
from jax.experimental.pallas import tpu as pltpu

BN_EPS = 1e-5


# ----------------------------- Pallas kernels ------------------------------ #

def matmul_kernel(a_ref, b_ref, o_ref):
    # bf16 x bf16 -> f32 accumulation on the MXU.  No bias: BN layers drop it
    # (cancelled by mean subtraction); the last layer adds it post-col2im.
    o_ref[...] = jnp.dot(a_ref[...], b_ref[...], preferred_element_type=jnp.float32)


def col_stats_kernel(x_ref, sum_ref, sq_ref):
    # Per-column sum and sum-of-squares accumulated across the M (row) grid axis.
    @pl.when(pl.program_id(0) == 0)
    def _():
        sum_ref[...] = jnp.zeros_like(sum_ref)
        sq_ref[...] = jnp.zeros_like(sq_ref)

    x = x_ref[...]
    sum_ref[...] += jnp.sum(x, axis=0, keepdims=True)
    sq_ref[...] += jnp.sum(x * x, axis=0, keepdims=True)


def affine_act_kernel(x_ref, scale_ref, shift_ref, o_ref, *, act):
    # Affine (BN scale/shift or final bias) + activation; math in f32,
    # output cast to o_ref.dtype (bf16 for inter-layer activations).
    y = x_ref[...].astype(jnp.float32) * scale_ref[...] + shift_ref[...]
    if act == "relu":
        y = jnp.maximum(y, 0.0)
    elif act == "tanh":
        y = jnp.tanh(y)
    o_ref[...] = y.astype(o_ref.dtype)


# ------------------------------ Pallas wrappers ---------------------------- #

def _pick_tm(m, cap=1024):
    """Largest tile <= cap that divides M and is a multiple of 8 (sublane);
    falls back to the full extent (a full-dim block is always legal)."""
    if m <= cap:
        return m
    tm = cap - (cap % 8)
    while tm >= 8:
        if m % tm == 0:
            return tm
        tm -= 8
    return m


def _fold_shape(m, c):
    """Reinterpret a row-major (m, c) activation as (rows, width) with width a
    multiple of 128 and width % c == 0, so lane j always holds channel j % c.
    Pure metadata (reshape of a contiguous array).  Makes elementwise / stats
    kernels lane-dense (unmasked vst) even for narrow channel counts like C=3.
    Falls back to (m, c) when no legal fold exists."""
    if c % 128 == 0:
        return m, c
    width = c * 128 // math.gcd(c, 128)        # lcm(c, 128)
    total = m * c
    if total % width != 0:
        return m, c                            # fall back (masked stores)
    return total // width, width


def matmul(a, b, tm):
    m, k = a.shape
    _, n = b.shape
    return pl.pallas_call(
        matmul_kernel,
        out_shape=jax.ShapeDtypeStruct((m, n), jnp.float32),
        grid_spec=pltpu.PrefetchScalarGridSpec(
            num_scalar_prefetch=0,
            grid=(m // tm,),
            in_specs=[
                pl.BlockSpec((tm, k), lambda i: (i, 0)),
                pl.BlockSpec((k, n), lambda i: (0, 0)),   # constant index_map
            ],
            out_specs=pl.BlockSpec((tm, n), lambda i: (i, 0)),
        ),
        compiler_params=pltpu.CompilerParams(dimension_semantics=("parallel",)),
    )(a, b)


def col_stats(x, tm):
    m, n = x.shape
    return pl.pallas_call(
        col_stats_kernel,
        out_shape=(
            jax.ShapeDtypeStruct((1, n), jnp.float32),
            jax.ShapeDtypeStruct((1, n), jnp.float32),
        ),
        grid_spec=pltpu.PrefetchScalarGridSpec(
            num_scalar_prefetch=0,
            grid=(m // tm,),
            in_specs=[pl.BlockSpec((tm, n), lambda i: (i, 0))],
            out_specs=(
                pl.BlockSpec((1, n), lambda i: (0, 0)),
                pl.BlockSpec((1, n), lambda i: (0, 0)),
            ),
        ),
        compiler_params=pltpu.CompilerParams(dimension_semantics=("arbitrary",)),
    )(x)


def affine_act(x, scale, shift, act, tm, out_dtype):
    m, n = x.shape
    kernel = functools.partial(affine_act_kernel, act=act)
    return pl.pallas_call(
        kernel,
        out_shape=jax.ShapeDtypeStruct((m, n), out_dtype),
        grid_spec=pltpu.PrefetchScalarGridSpec(
            num_scalar_prefetch=0,
            grid=(m // tm,),
            in_specs=[
                pl.BlockSpec((tm, n), lambda i: (i, 0)),
                pl.BlockSpec((1, n), lambda i: (0, 0)),
                pl.BlockSpec((1, n), lambda i: (0, 0)),
            ],
            out_specs=pl.BlockSpec((tm, n), lambda i: (i, 0)),
        ),
        compiler_params=pltpu.CompilerParams(dimension_semantics=("parallel",)),
    )(x, scale, shift)


# --------------------------- ConvTranspose as GEMM ------------------------- #

def _col2im(c, n, h, w, cout, k, s, p):
    """Scatter-add the (N*H*W, Cout*k*k) GEMM result into the transposed-conv
    output: out[n, h*s - p + ky, w*s - p + kx, co] += c[n,h,w,(co,ky,kx)].
    Plain XLA glue (16 strided adds), output kept NHWC."""
    # TODO(synk): strided scatter-add has no clean lane-aligned Pallas mapping;
    # left as XLA glue between the GEMM and BN/activation kernels.
    y = c.reshape(n, h, w, cout, k, k)
    zh = (h - 1) * s + k
    zw = (w - 1) * s + k
    canvas = jnp.zeros((n, zh, zw, cout), c.dtype)
    for ky in range(k):
        for kx in range(k):
            canvas = canvas.at[
                :, ky:ky + (h - 1) * s + 1:s, kx:kx + (w - 1) * s + 1:s, :
            ].add(y[:, :, :, :, ky, kx])
    if p:
        canvas = canvas[:, p:zh - p, p:zw - p, :]
    return canvas


def tconv_layer(a_flat, hw, n, w_gemm, bias, k, s, p, use_bn, act):
    """One ConvTranspose2d (+ optional BatchNorm, training mode) + activation.
    a_flat: (N*H*W, Cin) activation in NHWC-flat layout (bf16)."""
    h, w = hw
    m_in = a_flat.shape[0]
    cout = w_gemm.shape[1] // (k * k)

    # 1) Direct transposed-conv GEMM on the MXU: (M, Cin) @ (Cin, Cout*k*k).
    #    Pad M up to a multiple of 8 (sublane) with zero rows if needed.
    m_gemm = -(-m_in // 8) * 8
    a_in = a_flat if m_gemm == m_in else jnp.pad(a_flat, ((0, m_gemm - m_in), (0, 0)))
    c = matmul(a_in.astype(jnp.bfloat16), w_gemm, _pick_tm(m_gemm))
    if m_gemm != m_in:
        c = c[:m_in]

    # 2) col2im scatter-add -> (N, OH, OW, Cout) f32.
    out = _col2im(c, n, h, w, cout, k, s, p)
    oh, ow = out.shape[1], out.shape[2]
    m_out = n * oh * ow

    # Lane-dense view for all elementwise / stats passes.
    rows, width = _fold_shape(m_out, cout)
    xf = out.reshape(rows, width)
    tm = _pick_tm(rows)
    reps = width // cout

    if use_bn:
        # ConvTranspose bias omitted: BatchNorm with beta=0 cancels it exactly.
        csum, csq = col_stats(xf, tm)
        csum = csum.reshape(reps, cout).sum(axis=0)
        csq = csq.reshape(reps, cout).sum(axis=0)
        mean = csum / m_out
        # Biased batch variance (training-mode BatchNorm2d); clamp guards the
        # E[x^2]-E[x]^2 cancellation.  gamma=1, beta=0, eps=1e-5.
        var = jnp.maximum(csq / m_out - mean * mean, 0.0)
        scale = jax.lax.rsqrt(var + BN_EPS)
        shift = -mean * scale
        out_dtype = jnp.bfloat16           # next layer's GEMM operand
    else:
        # Final layer: bias + tanh fused in the elementwise kernel (f32 out).
        scale = jnp.ones((cout,), jnp.float32)
        shift = bias.astype(jnp.float32)
        out_dtype = jnp.float32

    # Per-lane scale/shift rows (channel j % cout at lane j of the folded view).
    scale_f = jnp.tile(scale.reshape(1, cout), (1, reps))
    shift_f = jnp.tile(shift.reshape(1, cout), (1, reps))
    yf = affine_act(xf, scale_f, shift_f, act, tm, out_dtype)
    y_flat = yf.reshape(m_out, cout)

    return y_flat, (oh, ow)


# ------------------------------- Generator --------------------------------- #

def init_generator_params(key, channels, std=0.02):
    """ConvTranspose2d weights ~ N(0, std) with shape (Cin, Cout, 4, 4), bias = 0.
    Weights are stored in GEMM layout (Cin, Cout*16) and cast to bf16 for the MXU."""
    keys = jax.random.split(key, 5)
    params = []
    for i in range(5):
        cin, cout = channels[i], channels[i + 1]
        w = jax.random.normal(keys[i], (cin, cout, 4, 4), jnp.float32) * std
        w_gemm = w.reshape(cin, cout * 16).astype(jnp.bfloat16)
        b = jnp.zeros((cout,), jnp.float32)
        params.append((w_gemm, b))
    return params


def generator_forward(params, x_nchw):
    # (kernel, stride, pad, use_bn, activation) for tconv1..tconv5
    cfgs = [
        (4, 1, 0, True, "relu"),
        (4, 2, 1, True, "relu"),
        (4, 2, 1, True, "relu"),
        (4, 2, 1, True, "relu"),
        (4, 2, 1, False, "tanh"),
    ]
    n, cin, h, w = x_nchw.shape
    # NCHW -> NHWC-flat (M, C); this layout is kept across all layers.
    a = jnp.transpose(x_nchw, (0, 2, 3, 1)).reshape(n * h * w, cin).astype(jnp.bfloat16)
    for (wg, b), (k, s, p, bn, act) in zip(params, cfgs):
        a, (h, w) = tconv_layer(a, (h, w), n, wg, b, k, s, p, bn, act)
    cout = a.shape[1]
    y = a.reshape(n, h, w, cout)
    return jnp.transpose(y, (0, 3, 1, 2))  # NCHW only at the network boundary


if __name__ == "__main__":
    key = jax.random.PRNGKey(0)
    k_params, k_x = jax.random.split(key)

    # Scaled-down channel widths (16x smaller than the PyTorch defaults).
    latent_sz = 64
    channels = (latent_sz, 64, 32, 16, 8, 3)

    params = init_generator_params(k_params, channels, std=0.02)
    x = jax.random.normal(k_x, (2, latent_sz, 1, 1), jnp.float32)

    y = jax.jit(generator_forward)(params, x)
    y = jax.block_until_ready(y)

    assert y.shape == (2, 3, 64, 64), y.shape
    assert bool(jnp.all(jnp.isfinite(y)))
    assert float(jnp.max(jnp.abs(y))) <= 1.0 + 1e-6  # tanh range
    print("KERNEL_OK")
</pallas_src>

<mosaic_0001>
module attributes {stable_mosaic.version = 11 : i64} {
  func.func @matmul_kernel(%arg0: i32, %arg1: memref<8x64xbf16, #tpu.memory_space<vmem>>, %arg2: memref<64x1024xbf16, #tpu.memory_space<vmem>>, %arg3: memref<8x1024xf32, #tpu.memory_space<vmem>>) attributes {dimension_semantics = [#tpu.dimension_semantics<parallel>], iteration_bounds = array<i64: 1>, scalar_prefetch = 0 : i64, scratch_operands = 0 : i64, tpu.core_type = #tpu.core_type<tc>, window_params = [{transform_indices = @transform_0, window_bounds = array<i64: 8, 64>}, {pipeline_mode = #tpu.pipeline_mode<synchronous>, transform_indices = @transform_1, window_bounds = array<i64: 64, 1024>}, {transform_indices = @transform_2, window_bounds = array<i64: 8, 1024>}]} {
    %c0 = arith.constant 0 : index
    %c0_0 = arith.constant 0 : index
    %0 = vector.load %arg1[%c0, %c0_0] : memref<8x64xbf16, #tpu.memory_space<vmem>>, vector<8x64xbf16>
    %c0_1 = arith.constant 0 : index
    %c0_2 = arith.constant 0 : index
    %1 = vector.load %arg2[%c0_1, %c0_2] : memref<64x1024xbf16, #tpu.memory_space<vmem>>, vector<64x1024xbf16>
    %cst = arith.constant dense<0.000000e+00> : vector<8x1024xf32>
    %2 = tpu.matmul %0, %1, %cst {dimension_numbers = #tpu.dot_dimension_numbers<[1], [0], [0], [1], [0, 0, 1, 1], [], []>} : vector<8x64xbf16>, vector<64x1024xbf16>, vector<8x1024xf32> -> vector<8x1024xf32>
    %c0_3 = arith.constant 0 : index
    %c0_4 = arith.constant 0 : index
    %3 = vector.load %arg3[%c0_3, %c0_4] : memref<8x1024xf32, #tpu.memory_space<vmem>>, vector<8x1024xf32>
    tpu.vector_store %arg3[%c0_3, %c0_4], %2 {strides = array<i32>} : memref<8x1024xf32, #tpu.memory_space<vmem>>, vector<8x1024xf32>,
    return
  }
  func.func @transform_0(%arg0: i32) -> (i32, i32) {
    %c0_i32 = arith.constant 0 : i32
    %c0_i32_0 = arith.constant 0 : i32
    return %arg0, %c0_i32 : i32, i32
  }
  func.func @transform_1(%arg0: i32) -> (i32, i32) {
    %c0_i32 = arith.constant 0 : i32
    %c0_i32_0 = arith.constant 0 : i32
    %c0_i32_1 = arith.constant 0 : i32
    return %c0_i32, %c0_i32_0 : i32, i32
  }
  func.func @transform_2(%arg0: i32) -> (i32, i32) {
    %c0_i32 = arith.constant 0 : i32
    %c0_i32_0 = arith.constant 0 : i32
    return %arg0, %c0_i32 : i32, i32
  }
}

module attributes {stable_mosaic.version = 11 : i64} {
  func.func @col_stats_kernel(%arg0: i32, %arg1: memref<16x128xf32, #tpu.memory_space<vmem>>, %arg2: memref<1x128xf32, #tpu.memory_space<vmem>>, %arg3: memref<1x128xf32, #tpu.memory_space<vmem>>) attributes {dimension_semantics = [#tpu.dimension_semantics<arbitrary>], iteration_bounds = array<i64: 1>, scalar_prefetch = 0 : i64, scratch_operands = 0 : i64, tpu.core_type = #tpu.core_type<tc>, window_params = [{transform_indices = @transform_0, window_bounds = array<i64: 16, 128>}, {pipeline_mode = #tpu.pipeline_mode<synchronous>, transform_indices = @transform_1, window_bounds = array<i64: 1, 128>}, {pipeline_mode = #tpu.pipeline_mode<synchronous>, transform_indices = @transform_2, window_bounds = array<i64: 1, 128>}]} {
    %c0_i32 = arith.constant 0 : i32
    %0 = arith.cmpi eq, %arg0, %c0_i32 : i32
    %1 = arith.extui %0 : i1 to i32
    %c0_i32_0 = arith.constant 0 : i32
    %2 = arith.cmpi ne, %1, %c0_i32_0 : i32
    scf.if %2 {
      %cst_11 = arith.constant 0.000000e+00 : f32
      %15 = vector.broadcast %cst_11 : f32 to vector<1x128xf32>
      %c0_12 = arith.constant 0 : index
      %c0_13 = arith.constant 0 : index
      %16 = vector.load %arg2[%c0_12, %c0_13] : memref<1x128xf32, #tpu.memory_space<vmem>>, vector<1x128xf32>
      tpu.vector_store %arg2[%c0_12, %c0_13], %15 {strides = array<i32>} : memref<1x128xf32, #tpu.memory_space<vmem>>, vector<1x128xf32>,
      %cst_14 = arith.constant 0.000000e+00 : f32
      %17 = vector.broadcast %cst_14 : f32 to vector<1x128xf32>
      %c0_15 = arith.constant 0 : index
      %c0_16 = arith.constant 0 : index
      %18 = vector.load %arg3[%c0_15, %c0_16] : memref<1x128xf32, #tpu.memory_space<vmem>>, vector<1x128xf32>
      tpu.vector_store %arg3[%c0_15, %c0_16], %17 {strides = array<i32>} : memref<1x128xf32, #tpu.memory_space<vmem>>, vector<1x128xf32>,
    } else {
    }
    %c0 = arith.constant 0 : index
    %c0_1 = arith.constant 0 : index
    %3 = vector.load %arg1[%c0, %c0_1] : memref<16x128xf32, #tpu.memory_space<vmem>>, vector<16x128xf32>
    %c0_2 = arith.constant 0 : index
    %c0_3 = arith.constant 0 : index
    %4 = vector.load %arg2[%c0_2, %c0_3] : memref<1x128xf32, #tpu.memory_space<vmem>>, vector<1x128xf32>
    %cst = arith.constant dense<0.000000e+00> : vector<128xf32>
    %5 = vector.multi_reduction <add>, %3, %cst [0] : vector<16x128xf32> to vector<128xf32>
    %6 = vector.shape_cast %5 : vector<128xf32> to vector<1x128xf32>
    %7 = arith.addf %4, %6 : vector<1x128xf32>
    %c0_4 = arith.constant 0 : index
    %c0_5 = arith.constant 0 : index
    %8 = vector.load %arg2[%c0_4, %c0_5] : memref<1x128xf32, #tpu.memory_space<vmem>>, vector<1x128xf32>
    tpu.vector_store %arg2[%c0_4, %c0_5], %7 {strides = array<i32>} : memref<1x128xf32, #tpu.memory_space<vmem>>, vector<1x128xf32>,
    %c0_6 = arith.constant 0 : index
    %c0_7 = arith.constant 0 : index
    %9 = vector.load %arg3[%c0_6, %c0_7] : memref<1x128xf32, #tpu.memory_space<vmem>>, vector<1x128xf32>
    %10 = arith.mulf %3, %3 : vector<16x128xf32>
    %cst_8 = arith.constant dense<0.000000e+00> : vector<128xf32>
    %11 = vector.multi_reduction <add>, %10, %cst_8 [0] : vector<16x128xf32> to vector<128xf32>
    %12 = vector.shape_cast %11 : vector<128xf32> to vector<1x128xf32>
    %13 = arith.addf %9, %12 : vector<1x128xf32>
    %c0_9 = arith.constant 0 : index
    %c0_10 = arith.constant 0 : index
    %14 = vector.load %arg3[%c0_9, %c0_10] : memref<1x128xf32, #tpu.memory_space<vmem>>, vector<1x128xf32>
    tpu.vector_store %arg3[%c0_9, %c0_10], %13 {strides = array<i32>} : memref<1x128xf32, #tpu.memory_space<vmem>>, vector<1x128xf32>,
    return
  }
  func.func @transform_0(%arg0: i32) -> (i32, i32) {
    %c0_i32 = arith.constant 0 : i32
    %c0_i32_0 = arith.constant 0 : i32
    return %arg0, %c0_i32 : i32, i32
  }
  func.func @transform_1(%arg0: i32) -> (i32, i32) {
    %c0_i32 = arith.constant 0 : i32
    %c0_i32_0 = arith.constant 0 : i32
    %c0_i32_1 = arith.constant 0 : i32
    return %c0_i32, %c0_i32_0 : i32, i32
  }
  func.func @transform_2(%arg0: i32) -> (i32, i32) {
    %c0_i32 = arith.constant 0 : i32
    %c0_i32_0 = arith.constant 0 : i32
    %c0_i32_1 = arith.constant 0 : i32
    return %c0_i32, %c0_i32_0 : i32, i32
  }
}

module attributes {stable_mosaic.version = 11 : i64} {
  func.func @affine_act_kernel(%arg0: i32, %arg1: memref<16x128xf32, #tpu.memory_space<vmem>>, %arg2: memref<1x128xf32, #tpu.memory_space<vmem>>, %arg3: memref<1x128xf32, #tpu.memory_space<vmem>>, %arg4: memref<16x128xbf16, #tpu.memory_space<vmem>>) attributes {dimension_semantics = [#tpu.dimension_semantics<parallel>], iteration_bounds = array<i64: 1>, scalar_prefetch = 0 : i64, scratch_operands = 0 : i64, tpu.core_type = #tpu.core_type<tc>, window_params = [{transform_indices = @transform_0, window_bounds = array<i64: 16, 128>}, {pipeline_mode = #tpu.pipeline_mode<synchronous>, transform_indices = @transform_1, window_bounds = array<i64: 1, 128>}, {pipeline_mode = #tpu.pipeline_mode<synchronous>, transform_indices = @transform_2, window_bounds = array<i64: 1, 128>}, {transform_indices = @transform_3, window_bounds = array<i64: 16, 128>}]} {
    %c0 = arith.constant 0 : index
    %c0_0 = arith.constant 0 : index
    %0 = vector.load %arg1[%c0, %c0_0] : memref<16x128xf32, #tpu.memory_space<vmem>>, vector<16x128xf32>
    %c0_1 = arith.constant 0 : index
    %c0_2 = arith.constant 0 : index
    %1 = vector.load %arg2[%c0_1, %c0_2] : memref<1x128xf32, #tpu.memory_space<vmem>>, vector<1x128xf32>
    %2 = vector.broadcast %1 : vector<1x128xf32> to vector<16x128xf32>
    %3 = arith.mulf %0, %2 : vector<16x128xf32>
    %c0_3 = arith.constant 0 : index
    %c0_4 = arith.constant 0 : index
    %4 = vector.load %arg3[%c0_3, %c0_4] : memref<1x128xf32, #tpu.memory_space<vmem>>, vector<1x128xf32>
    %5 = vector.broadcast %4 : vector<1x128xf32> to vector<16x128xf32>
    %6 = arith.addf %3, %5 : vector<16x128xf32>
    %cst = arith.constant 0.000000e+00 : f32
    %7 = vector.broadcast %cst : f32 to vector<16x128xf32>
    %8 = arith.maximumf %6, %7 : vector<16x128xf32>
    %9 = arith.truncf %8 : vector<16x128xf32> to vector<16x128xbf16>
    %c0_5 = arith.constant 0 : index
    %c0_6 = arith.constant 0 : index
    %10 = vector.load %arg4[%c0_5, %c0_6] : memref<16x128xbf16, #tpu.memory_space<vmem>>, vector<16x128xbf16>
    tpu.vector_store %arg4[%c0_5, %c0_6], %9 {strides = array<i32>} : memref<16x128xbf16, #tpu.memory_space<vmem>>, vector<16x128xbf16>,
    return
  }
  func.func @transform_0(%arg0: i32) -> (i32, i32) {
    %c0_i32 = arith.constant 0 : i32
    %c0_i32_0 = arith.constant 0 : i32
    return %arg0, %c0_i32 : i32, i32
  }
  func.func @transform_1(%arg0: i32) -> (i32, i32) {
    %c0_i32 = arith.constant 0 : i32
    %c0_i32_0 = arith.constant 0 : i32
    %c0_i32_1 = arith.constant 0 : i32
    return %c0_i32, %c0_i32_0 : i32, i32
  }
  func.func @transform_2(%arg0: i32) -> (i32, i32) {
    %c0_i32 = arith.constant 0 : i32
    %c0_i32_0 = arith.constant 0 : i32
    %c0_i32_1 = arith.constant 0 : i32
    return %c0_i32, %c0_i32_0 : i32, i32
  }
  func.func @transform_3(%arg0: i32) -> (i32, i32) {
    %c0_i32 = arith.constant 0 : i32
    %c0_i32_0 = arith.constant 0 : i32
    return %arg0, %c0_i32 : i32, i32
  }
}

module attributes {stable_mosaic.version = 11 : i64} {
  func.func @matmul_kernel(%arg0: i32, %arg1: memref<32x64xbf16, #tpu.memory_space<vmem>>, %arg2: memref<64x512xbf16, #tpu.memory_space<vmem>>, %arg3: memref<32x512xf32, #tpu.memory_space<vmem>>) attributes {dimension_semantics = [#tpu.dimension_semantics<parallel>], iteration_bounds = array<i64: 1>, scalar_prefetch = 0 : i64, scratch_operands = 0 : i64, tpu.core_type = #tpu.core_type<tc>, window_params = [{transform_indices = @transform_0, window_bounds = array<i64: 32, 64>}, {pipeline_mode = #tpu.pipeline_mode<synchronous>, transform_indices = @transform_1, window_bounds = array<i64: 64, 512>}, {transform_indices = @transform_2, window_bounds = array<i64: 32, 512>}]} {
    %c0 = arith.constant 0 : index
    %c0_0 = arith.constant 0 : index
    %0 = vector.load %arg1[%c0, %c0_0] : memref<32x64xbf16, #tpu.memory_space<vmem>>, vector<32x64xbf16>
    %c0_1 = arith.constant 0 : index
    %c0_2 = arith.constant 0 : index
    %1 = vector.load %arg2[%c0_1, %c0_2] : memref<64x512xbf16, #tpu.memory_space<vmem>>, vector<64x512xbf16>
    %cst = arith.constant dense<0.000000e+00> : vector<32x512xf32>
    %2 = tpu.matmul %0, %1, %cst {dimension_numbers = #tpu.dot_dimension_numbers<[1], [0], [0], [1], [0, 0, 1, 1], [], []>} : vector<32x64xbf16>, vector<64x512xbf16>, vector<32x512xf32> -> vector<32x512xf32>
    %c0_3 = arith.constant 0 : index
    %c0_4 = arith.constant 0 : index
    %3 = vector.load %arg3[%c0_3, %c0_4] : memref<32x512xf32, #tpu.memory_space<vmem>>, vector<32x512xf32>
    tpu.vector_store %arg3[%c0_3, %c0_4], %2 {strides = array<i32>} : memref<32x512xf32, #tpu.memory_space<vmem>>, vector<32x512xf32>,
    return
  }
  func.func @transform_0(%arg0: i32) -> (i32, i32) {
    %c0_i32 = arith.constant 0 : i32
    %c0_i32_0 = arith.constant 0 : i32
    return %arg0, %c0_i32 : i32, i32
  }
  func.func @transform_1(%arg0: i32) -> (i32, i32) {
    %c0_i32 = arith.constant 0 : i32
    %c0_i32_0 = arith.constant 0 : i32
    %c0_i32_1 = arith.constant 0 : i32
    return %c0_i32, %c0_i32_0 : i32, i32
  }
  func.func @transform_2(%arg0: i32) -> (i32, i32) {
    %c0_i32 = arith.constant 0 : i32
    %c0_i32_0 = arith.constant 0 : i32
    return %arg0, %c0_i32 : i32, i32
  }
}

module attributes {stable_mosaic.version = 11 : i64} {
  func.func @col_stats_kernel(%arg0: i32, %arg1: memref<32x128xf32, #tpu.memory_space<vmem>>, %arg2: memref<1x128xf32, #tpu.memory_space<vmem>>, %arg3: memref<1x128xf32, #tpu.memory_space<vmem>>) attributes {dimension_semantics = [#tpu.dimension_semantics<arbitrary>], iteration_bounds = array<i64: 1>, scalar_prefetch = 0 : i64, scratch_operands = 0 : i64, tpu.core_type = #tpu.core_type<tc>, window_params = [{transform_indices = @transform_0, window_bounds = array<i64: 32, 128>}, {pipeline_mode = #tpu.pipeline_mode<synchronous>, transform_indices = @transform_1, window_bounds = array<i64: 1, 128>}, {pipeline_mode = #tpu.pipeline_mode<synchronous>, transform_indices = @transform_2, window_bounds = array<i64: 1, 128>}]} {
    %c0_i32 = arith.constant 0 : i32
    %0 = arith.cmpi eq, %arg0, %c0_i32 : i32
    %1 = arith.extui %0 : i1 to i32
    %c0_i32_0 = arith.constant 0 : i32
    %2 = arith.cmpi ne, %1, %c0_i32_0 : i32
    scf.if %2 {
      %cst_11 = arith.constant 0.000000e+00 : f32
      %15 = vector.broadcast %cst_11 : f32 to vector<1x128xf32>
      %c0_12 = arith.constant 0 : index
      %c0_13 = arith.constant 0 : index
      %16 = vector.load %arg2[%c0_12, %c0_13] : memref<1x128xf32, #tpu.memory_space<vmem>>, vector<1x128xf32>
      tpu.vector_store %arg2[%c0_12, %c0_13], %15 {strides = array<i32>} : memref<1x128xf32, #tpu.memory_space<vmem>>, vector<1x128xf32>,
      %cst_14 = arith.constant 0.000000e+00 : f32
      %17 = vector.broadcast %cst_14 : f32 to vector<1x128xf32>
      %c0_15 = arith.constant 0 : index
      %c0_16 = arith.constant 0 : index
      %18 = vector.load %arg3[%c0_15, %c0_16] : memref<1x128xf32, #tpu.memory_space<vmem>>, vector<1x128xf32>
      tpu.vector_store %arg3[%c0_15, %c0_16], %17 {strides = array<i32>} : memref<1x128xf32, #tpu.memory_space<vmem>>, vector<1x128xf32>,
    } else {
    }
    %c0 = arith.constant 0 : index
    %c0_1 = arith.constant 0 : index
    %3 = vector.load %arg1[%c0, %c0_1] : memref<32x128xf32, #tpu.memory_space<vmem>>, vector<32x128xf32>
    %c0_2 = arith.constant 0 : index
    %c0_3 = arith.constant 0 : index
    %4 = vector.load %arg2[%c0_2, %c0_3] : memref<1x128xf32, #tpu.memory_space<vmem>>, vector<1x128xf32>
    %cst = arith.constant dense<0.000000e+00> : vector<128xf32>
    %5 = vector.multi_reduction <add>, %3, %cst [0] : vector<32x128xf32> to vector<128xf32>
    %6 = vector.shape_cast %5 : vector<128xf32> to vector<1x128xf32>
    %7 = arith.addf %4, %6 : vector<1x128xf32>
    %c0_4 = arith.constant 0 : index
    %c0_5 = arith.constant 0 : index
    %8 = vector.load %arg2[%c0_4, %c0_5] : memref<1x128xf32, #tpu.memory_space<vmem>>, vector<1x128xf32>
    tpu.vector_store %arg2[%c0_4, %c0_5], %7 {strides = array<i32>} : memref<1x128xf32, #tpu.memory_space<vmem>>, vector<1x128xf32>,
    %c0_6 = arith.constant 0 : index
    %c0_7 = arith.constant 0 : index
    %9 = vector.load %arg3[%c0_6, %c0_7] : memref<1x128xf32, #tpu.memory_space<vmem>>, vector<1x128xf32>
    %10 = arith.mulf %3, %3 : vector<32x128xf32>
    %cst_8 = arith.constant dense<0.000000e+00> : vector<128xf32>
    %11 = vector.multi_reduction <add>, %10, %cst_8 [0] : vector<32x128xf32> to vector<128xf32>
    %12 = vector.shape_cast %11 : vector<128xf32> to vector<1x128xf32>
    %13 = arith.addf %9, %12 : vector<1x128xf32>
    %c0_9 = arith.constant 0 : index
    %c0_10 = arith.constant 0 : index
    %14 = vector.load %arg3[%c0_9, %c0_10] : memref<1x128xf32, #tpu.memory_space<vmem>>, vector<1x128xf32>
    tpu.vector_store %arg3[%c0_9, %c0_10], %13 {strides = array<i32>} : memref<1x128xf32, #tpu.memory_space<vmem>>, vector<1x128xf32>,
    return
  }
  func.func @transform_0(%arg0: i32) -> (i32, i32) {
    %c0_i32 = arith.constant 0 : i32
    %c0_i32_0 = arith.constant 0 : i32
    return %arg0, %c0_i32 : i32, i32
  }
  func.func @transform_1(%arg0: i32) -> (i32, i32) {
    %c0_i32 = arith.constant 0 : i32
    %c0_i32_0 = arith.constant 0 : i32
    %c0_i32_1 = arith.constant 0 : i32
    return %c0_i32, %c0_i32_0 : i32, i32
  }
  func.func @transform_2(%arg0: i32) -> (i32, i32) {
    %c0_i32 = arith.constant 0 : i32
    %c0_i32_0 = arith.constant 0 : i32
    %c0_i32_1 = arith.constant 0 : i32
    return %c0_i32, %c0_i32_0 : i32, i32
  }
}

module attributes {stable_mosaic.version = 11 : i64} {
  func.func @affine_act_kernel(%arg0: i32, %arg1: memref<32x128xf32, #tpu.memory_space<vmem>>, %arg2: memref<1x128xf32, #tpu.memory_space<vmem>>, %arg3: memref<1x128xf32, #tpu.memory_space<vmem>>, %arg4: memref<32x128xbf16, #tpu.memory_space<vmem>>) attributes {dimension_semantics = [#tpu.dimension_semantics<parallel>], iteration_bounds = array<i64: 1>, scalar_prefetch = 0 : i64, scratch_operands = 0 : i64, tpu.core_type = #tpu.core_type<tc>, window_params = [{transform_indices = @transform_0, window_bounds = array<i64: 32, 128>}, {pipeline_mode = #tpu.pipeline_mode<synchronous>, transform_indices = @transform_1, window_bounds = array<i64: 1, 128>}, {pipeline_mode = #tpu.pipeline_mode<synchronous>, transform_indices = @transform_2, window_bounds = array<i64: 1, 128>}, {transform_indices = @transform_3, window_bounds = array<i64: 32, 128>}]} {
    %c0 = arith.constant 0 : index
    %c0_0 = arith.constant 0 : index
    %0 = vector.load %arg1[%c0, %c0_0] : memref<32x128xf32, #tpu.memory_space<vmem>>, vector<32x128xf32>
    %c0_1 = arith.constant 0 : index
    %c0_2 = arith.constant 0 : index
    %1 = vector.load %arg2[%c0_1, %c0_2] : memref<1x128xf32, #tpu.memory_space<vmem>>, vector<1x128xf32>
    %2 = vector.broadcast %1 : vector<1x128xf32> to vector<32x128xf32>
    %3 = arith.mulf %0, %2 : vector<32x128xf32>
    %c0_3 = arith.constant 0 : index
    %c0_4 = arith.constant 0 : index
    %4 = vector.load %arg3[%c0_3, %c0_4] : memref<1x128xf32, #tpu.memory_space<vmem>>, vector<1x128xf32>
    %5 = vector.broadcast %4 : vector<1x128xf32> to vector<32x128xf32>
    %6 = arith.addf %3, %5 : vector<32x128xf32>
    %cst = arith.constant 0.000000e+00 : f32
    %7 = vector.broadcast %cst : f32 to vector<32x128xf32>
    %8 = arith.maximumf %6, %7 : vector<32x128xf32>
    %9 = arith.truncf %8 : vector<32x128xf32> to vector<32x128xbf16>
    %c0_5 = arith.constant 0 : index
    %c0_6 = arith.constant 0 : index
    %10 = vector.load %arg4[%c0_5, %c0_6] : memref<32x128xbf16, #tpu.memory_space<vmem>>, vector<32x128xbf16>
    tpu.vector_store %arg4[%c0_5, %c0_6], %9 {strides = array<i32>} : memref<32x128xbf16, #tpu.memory_space<vmem>>, vector<32x128xbf16>,
    return
  }
  func.func @transform_0(%arg0: i32) -> (i32, i32) {
    %c0_i32 = arith.constant 0 : i32
    %c0_i32_0 = arith.constant 0 : i32
    return %arg0, %c0_i32 : i32, i32
  }
  func.func @transform_1(%arg0: i32) -> (i32, i32) {
    %c0_i32 = arith.constant 0 : i32
    %c0_i32_0 = arith.constant 0 : i32
    %c0_i32_1 = arith.constant 0 : i32
    return %c0_i32, %c0_i32_0 : i32, i32
  }
  func.func @transform_2(%arg0: i32) -> (i32, i32) {
    %c0_i32 = arith.constant 0 : i32
    %c0_i32_0 = arith.constant 0 : i32
    %c0_i32_1 = arith.constant 0 : i32
    return %c0_i32, %c0_i32_0 : i32, i32
  }
  func.func @transform_3(%arg0: i32) -> (i32, i32) {
    %c0_i32 = arith.constant 0 : i32
    %c0_i32_0 = arith.constant 0 : i32
    return %arg0, %c0_i32 : i32, i32
  }
}

module attributes {stable_mosaic.version = 11 : i64} {
  func.func @matmul_kernel(%arg0: i32, %arg1: memref<128x32xbf16, #tpu.memory_space<vmem>>, %arg2: memref<32x256xbf16, #tpu.memory_space<vmem>>, %arg3: memref<128x256xf32, #tpu.memory_space<vmem>>) attributes {dimension_semantics = [#tpu.dimension_semantics<parallel>], iteration_bounds = array<i64: 1>, scalar_prefetch = 0 : i64, scratch_operands = 0 : i64, tpu.core_type = #tpu.core_type<tc>, window_params = [{transform_indices = @transform_0, window_bounds = array<i64: 128, 32>}, {pipeline_mode = #tpu.pipeline_mode<synchronous>, transform_indices = @transform_1, window_bounds = array<i64: 32, 256>}, {transform_indices = @transform_2, window_bounds = array<i64: 128, 256>}]} {
    %c0 = arith.constant 0 : index
    %c0_0 = arith.constant 0 : index
    %0 = vector.load %arg1[%c0, %c0_0] : memref<128x32xbf16, #tpu.memory_space<vmem>>, vector<128x32xbf16>
    %c0_1 = arith.constant 0 : index
    %c0_2 = arith.constant 0 : index
    %1 = vector.load %arg2[%c0_1, %c0_2] : memref<32x256xbf16, #tpu.memory_space<vmem>>, vector<32x256xbf16>
    %cst = arith.constant dense<0.000000e+00> : vector<128x256xf32>
    %2 = tpu.matmul %0, %1, %cst {dimension_numbers = #tpu.dot_dimension_numbers<[1], [0], [0], [1], [0, 0, 1, 1], [], []>} : vector<128x32xbf16>, vector<32x256xbf16>, vector<128x256xf32> -> vector<128x256xf32>
    %c0_3 = arith.constant 0 : index
    %c0_4 = arith.constant 0 : index
    %3 = vector.load %arg3[%c0_3, %c0_4] : memref<128x256xf32, #tpu.memory_space<vmem>>, vector<128x256xf32>
    tpu.vector_store %arg3[%c0_3, %c0_4], %2 {strides = array<i32>} : memref<128x256xf32, #tpu.memory_space<vmem>>, vector<128x256xf32>,
    return
  }
  func.func @transform_0(%arg0: i32) -> (i32, i32) {
    %c0_i32 = arith.constant 0 : i32
    %c0_i32_0 = arith.constant 0 : i32
    return %arg0, %c0_i32 : i32, i32
  }
  func.func @transform_1(%arg0: i32) -> (i32, i32) {
    %c0_i32 = arith.constant 0 : i32
    %c0_i32_0 = arith.constant 0 : i32
    %c0_i32_1 = arith.constant 0 : i32
    return %c0_i32, %c0_i32_0 : i32, i32
  }
  func.func @transform_2(%arg0: i32) -> (i32, i32) {
    %c0_i32 = arith.constant 0 : i32
    %c0_i32_0 = arith.constant 0 : i32
    return %arg0, %c0_i32 : i32, i32
  }
}

module attributes {stable_mosaic.version = 11 : i64} {
  func.func @col_stats_kernel(%arg0: i32, %arg1: memref<64x128xf32, #tpu.memory_space<vmem>>, %arg2: memref<1x128xf32, #tpu.memory_space<vmem>>, %arg3: memref<1x128xf32, #tpu.memory_space<vmem>>) attributes {dimension_semantics = [#tpu.dimension_semantics<arbitrary>], iteration_bounds = array<i64: 1>, scalar_prefetch = 0 : i64, scratch_operands = 0 : i64, tpu.core_type = #tpu.core_type<tc>, window_params = [{transform_indices = @transform_0, window_bounds = array<i64: 64, 128>}, {pipeline_mode = #tpu.pipeline_mode<synchronous>, transform_indices = @transform_1, window_bounds = array<i64: 1, 128>}, {pipeline_mode = #tpu.pipeline_mode<synchronous>, transform_indices = @transform_2, window_bounds = array<i64: 1, 128>}]} {
    %c0_i32 = arith.constant 0 : i32
    %0 = arith.cmpi eq, %arg0, %c0_i32 : i32
    %1 = arith.extui %0 : i1 to i32
    %c0_i32_0 = arith.constant 0 : i32
    %2 = arith.cmpi ne, %1, %c0_i32_0 : i32
    scf.if %2 {
      %cst_11 = arith.constant 0.000000e+00 : f32
      %15 = vector.broadcast %cst_11 : f32 to vector<1x128xf32>
      %c0_12 = arith.constant 0 : index
      %c0_13 = arith.constant 0 : index
      %16 = vector.load %arg2[%c0_12, %c0_13] : memref<1x128xf32, #tpu.memory_space<vmem>>, vector<1x128xf32>
      tpu.vector_store %arg2[%c0_12, %c0_13], %15 {strides = array<i32>} : memref<1x128xf32, #tpu.memory_space<vmem>>, vector<1x128xf32>,
      %cst_14 = arith.constant 0.000000e+00 : f32
      %17 = vector.broadcast %cst_14 : f32 to vector<1x128xf32>
      %c0_15 = arith.constant 0 : index
      %c0_16 = arith.constant 0 : index
      %18 = vector.load %arg3[%c0_15, %c0_16] : memref<1x128xf32, #tpu.memory_space<vmem>>, vector<1x128xf32>
      tpu.vector_store %arg3[%c0_15, %c0_16], %17 {strides = array<i32>} : memref<1x128xf32, #tpu.memory_space<vmem>>, vector<1x128xf32>,
    } else {
    }
    %c0 = arith.constant 0 : index
    %c0_1 = arith.constant 0 : index
    %3 = vector.load %arg1[%c0, %c0_1] : memref<64x128xf32, #tpu.memory_space<vmem>>, vector<64x128xf32>
    %c0_2 = arith.constant 0 : index
    %c0_3 = arith.constant 0 : index
    %4 = vector.load %arg2[%c0_2, %c0_3] : memref<1x128xf32, #tpu.memory_space<vmem>>, vector<1x128xf32>
    %cst = arith.constant dense<0.000000e+00> : vector<128xf32>
    %5 = vector.multi_reduction <add>, %3, %cst [0] : vector<64x128xf32> to vector<128xf32>
    %6 = vector.shape_cast %5 : vector<128xf32> to vector<1x128xf32>
    %7 = arith.addf %4, %6 : vector<1x128xf32>
    %c0_4 = arith.constant 0 : index
    %c0_5 = arith.constant 0 : index
    %8 = vector.load %arg2[%c0_4, %c0_5] : memref<1x128xf32, #tpu.memory_space<vmem>>, vector<1x128xf32>
    tpu.vector_store %arg2[%c0_4, %c0_5], %7 {strides = array<i32>} : memref<1x128xf32, #tpu.memory_space<vmem>>, vector<1x128xf32>,
    %c0_6 = arith.constant 0 : index
    %c0_7 = arith.constant 0 : index
    %9 = vector.load %arg3[%c0_6, %c0_7] : memref<1x128xf32, #tpu.memory_space<vmem>>, vector<1x128xf32>
    %10 = arith.mulf %3, %3 : vector<64x128xf32>
    %cst_8 = arith.constant dense<0.000000e+00> : vector<128xf32>
    %11 = vector.multi_reduction <add>, %10, %cst_8 [0] : vector<64x128xf32> to vector<128xf32>
    %12 = vector.shape_cast %11 : vector<128xf32> to vector<1x128xf32>
    %13 = arith.addf %9, %12 : vector<1x128xf32>
    %c0_9 = arith.constant 0 : index
    %c0_10 = arith.constant 0 : index
    %14 = vector.load %arg3[%c0_9, %c0_10] : memref<1x128xf32, #tpu.memory_space<vmem>>, vector<1x128xf32>
    tpu.vector_store %arg3[%c0_9, %c0_10], %13 {strides = array<i32>} : memref<1x128xf32, #tpu.memory_space<vmem>>, vector<1x128xf32>,
    return
  }
  func.func @transform_0(%arg0: i32) -> (i32, i32) {
    %c0_i32 = arith.constant 0 : i32
    %c0_i32_0 = arith.constant 0 : i32
    return %arg0, %c0_i32 : i32, i32
  }
  func.func @transform_1(%arg0: i32) -> (i32, i32) {
    %c0_i32 = arith.constant 0 : i32
    %c0_i32_0 = arith.constant 0 : i32
    %c0_i32_1 = arith.constant 0 : i32
    return %c0_i32, %c0_i32_0 : i32, i32
  }
  func.func @transform_2(%arg0: i32) -> (i32, i32) {
    %c0_i32 = arith.constant 0 : i32
    %c0_i32_0 = arith.constant 0 : i32
    %c0_i32_1 = arith.constant 0 : i32
    return %c0_i32, %c0_i32_0 : i32, i32
  }
}

module attributes {stable_mosaic.version = 11 : i64} {
  func.func @affine_act_kernel(%arg0: i32, %arg1: memref<64x128xf32, #tpu.memory_space<vmem>>, %arg2: memref<1x128xf32, #tpu.memory_space<vmem>>, %arg3: memref<1x128xf32, #tpu.memory_space<vmem>>, %arg4: memref<64x128xbf16, #tpu.memory_space<vmem>>) attributes {dimension_semantics = [#tpu.dimension_semantics<parallel>], iteration_bounds = array<i64: 1>, scalar_prefetch = 0 : i64, scratch_operands = 0 : i64, tpu.core_type = #tpu.core_type<tc>, window_params = [{transform_indices = @transform_0, window_bounds = array<i64: 64, 128>}, {pipeline_mode = #tpu.pipeline_mode<synchronous>, transform_indices = @transform_1, window_bounds = array<i64: 1, 128>}, {pipeline_mode = #tpu.pipeline_mode<synchronous>, transform_indices = @transform_2, window_bounds = array<i64: 1, 128>}, {transform_indices = @transform_3, window_bounds = array<i64: 64, 128>}]} {
    %c0 = arith.constant 0 : index
    %c0_0 = arith.constant 0 : index
    %0 = vector.load %arg1[%c0, %c0_0] : memref<64x128xf32, #tpu.memory_space<vmem>>, vector<64x128xf32>
    %c0_1 = arith.constant 0 : index
    %c0_2 = arith.constant 0 : index
    %1 = vector.load %arg2[%c0_1, %c0_2] : memref<1x128xf32, #tpu.memory_space<vmem>>, vector<1x128xf32>
    %2 = vector.broadcast %1 : vector<1x128xf32> to vector<64x128xf32>
    %3 = arith.mulf %0, %2 : vector<64x128xf32>
    %c0_3 = arith.constant 0 : index
    %c0_4 = arith.constant 0 : index
    %4 = vector.load %arg3[%c0_3, %c0_4] : memref<1x128xf32, #tpu.memory_space<vmem>>, vector<1x128xf32>
    %5 = vector.broadcast %4 : vector<1x128xf32> to vector<64x128xf32>
    %6 = arith.addf %3, %5 : vector<64x128xf32>
    %cst = arith.constant 0.000000e+00 : f32
    %7 = vector.broadcast %cst : f32 to vector<64x128xf32>
    %8 = arith.maximumf %6, %7 : vector<64x128xf32>
    %9 = arith.truncf %8 : vector<64x128xf32> to vector<64x128xbf16>
    %c0_5 = arith.constant 0 : index
    %c0_6 = arith.constant 0 : index
    %10 = vector.load %arg4[%c0_5, %c0_6] : memref<64x128xbf16, #tpu.memory_space<vmem>>, vector<64x128xbf16>
    tpu.vector_store %arg4[%c0_5, %c0_6], %9 {strides = array<i32>} : memref<64x128xbf16, #tpu.memory_space<vmem>>, vector<64x128xbf16>,
    return
  }
  func.func @transform_0(%arg0: i32) -> (i32, i32) {
    %c0_i32 = arith.constant 0 : i32
    %c0_i32_0 = arith.constant 0 : i32
    return %arg0, %c0_i32 : i32, i32
  }
  func.func @transform_1(%arg0: i32) -> (i32, i32) {
    %c0_i32 = arith.constant 0 : i32
    %c0_i32_0 = arith.constant 0 : i32
    %c0_i32_1 = arith.constant 0 : i32
    return %c0_i32, %c0_i32_0 : i32, i32
  }
  func.func @transform_2(%arg0: i32) -> (i32, i32) {
    %c0_i32 = arith.constant 0 : i32
    %c0_i32_0 = arith.constant 0 : i32
    %c0_i32_1 = arith.constant 0 : i32
    return %c0_i32, %c0_i32_0 : i32, i32
  }
  func.func @transform_3(%arg0: i32) -> (i32, i32) {
    %c0_i32 = arith.constant 0 : i32
    %c0_i32_0 = arith.constant 0 : i32
    return %arg0, %c0_i32 : i32, i32
  }
}

module attributes {stable_mosaic.version = 11 : i64} {
  func.func @matmul_kernel(%arg0: i32, %arg1: memref<512x16xbf16, #tpu.memory_space<vmem>>, %arg2: memref<16x128xbf16, #tpu.memory_space<vmem>>, %arg3: memref<512x128xf32, #tpu.memory_space<vmem>>) attributes {dimension_semantics = [#tpu.dimension_semantics<parallel>], iteration_bounds = array<i64: 1>, scalar_prefetch = 0 : i64, scratch_operands = 0 : i64, tpu.core_type = #tpu.core_type<tc>, window_params = [{transform_indices = @transform_0, window_bounds = array<i64: 512, 16>}, {pipeline_mode = #tpu.pipeline_mode<synchronous>, transform_indices = @transform_1, window_bounds = array<i64: 16, 128>}, {transform_indices = @transform_2, window_bounds = array<i64: 512, 128>}]} {
    %c0 = arith.constant 0 : index
    %c0_0 = arith.constant 0 : index
    %0 = vector.load %arg1[%c0, %c0_0] : memref<512x16xbf16, #tpu.memory_space<vmem>>, vector<512x16xbf16>
    %c0_1 = arith.constant 0 : index
    %c0_2 = arith.constant 0 : index
    %1 = vector.load %arg2[%c0_1, %c0_2] : memref<16x128xbf16, #tpu.memory_space<vmem>>, vector<16x128xbf16>
    %cst = arith.constant dense<0.000000e+00> : vector<512x128xf32>
    %2 = tpu.matmul %0, %1, %cst {dimension_numbers = #tpu.dot_dimension_numbers<[1], [0], [0], [1], [0, 0, 1, 1], [], []>} : vector<512x16xbf16>, vector<16x128xbf16>, vector<512x128xf32> -> vector<512x128xf32>
    %c0_3 = arith.constant 0 : index
    %c0_4 = arith.constant 0 : index
    %3 = vector.load %arg3[%c0_3, %c0_4] : memref<512x128xf32, #tpu.memory_space<vmem>>, vector<512x128xf32>
    tpu.vector_store %arg3[%c0_3, %c0_4], %2 {strides = array<i32>} : memref<512x128xf32, #tpu.memory_space<vmem>>, vector<512x128xf32>,
    return
  }
  func.func @transform_0(%arg0: i32) -> (i32, i32) {
    %c0_i32 = arith.constant 0 : i32
    %c0_i32_0 = arith.constant 0 : i32
    return %arg0, %c0_i32 : i32, i32
  }
  func.func @transform_1(%arg0: i32) -> (i32, i32) {
    %c0_i32 = arith.constant 0 : i32
    %c0_i32_0 = arith.constant 0 : i32
    %c0_i32_1 = arith.constant 0 : i32
    return %c0_i32, %c0_i32_0 : i32, i32
  }
  func.func @transform_2(%arg0: i32) -> (i32, i32) {
    %c0_i32 = arith.constant 0 : i32
    %c0_i32_0 = arith.constant 0 : i32
    return %arg0, %c0_i32 : i32, i32
  }
}

module attributes {stable_mosaic.version = 11 : i64} {
  func.func @col_stats_kernel(%arg0: i32, %arg1: memref<128x128xf32, #tpu.memory_space<vmem>>, %arg2: memref<1x128xf32, #tpu.memory_space<vmem>>, %arg3: memref<1x128xf32, #tpu.memory_space<vmem>>) attributes {dimension_semantics = [#tpu.dimension_semantics<arbitrary>], iteration_bounds = array<i64: 1>, scalar_prefetch = 0 : i64, scratch_operands = 0 : i64, tpu.core_type = #tpu.core_type<tc>, window_params = [{transform_indices = @transform_0, window_bounds = array<i64: 128, 128>}, {pipeline_mode = #tpu.pipeline_mode<synchronous>, transform_indices = @transform_1, window_bounds = array<i64: 1, 128>}, {pipeline_mode = #tpu.pipeline_mode<synchronous>, transform_indices = @transform_2, window_bounds = array<i64: 1, 128>}]} {
    %c0_i32 = arith.constant 0 : i32
    %0 = arith.cmpi eq, %arg0, %c0_i32 : i32
    %1 = arith.extui %0 : i1 to i32
    %c0_i32_0 = arith.constant 0 : i32
    %2 = arith.cmpi ne, %1, %c0_i32_0 : i32
    scf.if %2 {
      %cst_11 = arith.constant 0.000000e+00 : f32
      %15 = vector.broadcast %cst_11 : f32 to vector<1x128xf32>
      %c0_12 = arith.constant 0 : index
      %c0_13 = arith.constant 0 : index
      %16 = vector.load %arg2[%c0_12, %c0_13] : memref<1x128xf32, #tpu.memory_space<vmem>>, vector<1x128xf32>
      tpu.vector_store %arg2[%c0_12, %c0_13], %15 {strides = array<i32>} : memref<1x128xf32, #tpu.memory_space<vmem>>, vector<1x128xf32>,
      %cst_14 = arith.constant 0.000000e+00 : f32
      %17 = vector.broadcast %cst_14 : f32 to vector<1x128xf32>
      %c0_15 = arith.constant 0 : index
      %c0_16 = arith.constant 0 : index
      %18 = vector.load %arg3[%c0_15, %c0_16] : memref<1x128xf32, #tpu.memory_space<vmem>>, vector<1x128xf32>
      tpu.vector_store %arg3[%c0_15, %c0_16], %17 {strides = array<i32>} : memref<1x128xf32, #tpu.memory_space<vmem>>, vector<1x128xf32>,
    } else {
    }
    %c0 = arith.constant 0 : index
    %c0_1 = arith.constant 0 : index
    %3 = vector.load %arg1[%c0, %c0_1] : memref<128x128xf32, #tpu.memory_space<vmem>>, vector<128x128xf32>
    %c0_2 = arith.constant 0 : index
    %c0_3 = arith.constant 0 : index
    %4 = vector.load %arg2[%c0_2, %c0_3] : memref<1x128xf32, #tpu.memory_space<vmem>>, vector<1x128xf32>
    %cst = arith.constant dense<0.000000e+00> : vector<128xf32>
    %5 = vector.multi_reduction <add>, %3, %cst [0] : vector<128x128xf32> to vector<128xf32>
    %6 = vector.shape_cast %5 : vector<128xf32> to vector<1x128xf32>
    %7 = arith.addf %4, %6 : vector<1x128xf32>
    %c0_4 = arith.constant 0 : index
    %c0_5 = arith.constant 0 : index
    %8 = vector.load %arg2[%c0_4, %c0_5] : memref<1x128xf32, #tpu.memory_space<vmem>>, vector<1x128xf32>
    tpu.vector_store %arg2[%c0_4, %c0_5], %7 {strides = array<i32>} : memref<1x128xf32, #tpu.memory_space<vmem>>, vector<1x128xf32>,
    %c0_6 = arith.constant 0 : index
    %c0_7 = arith.constant 0 : index
    %9 = vector.load %arg3[%c0_6, %c0_7] : memref<1x128xf32, #tpu.memory_space<vmem>>, vector<1x128xf32>
    %10 = arith.mulf %3, %3 : vector<128x128xf32>
    %cst_8 = arith.constant dense<0.000000e+00> : vector<128xf32>
    %11 = vector.multi_reduction <add>, %10, %cst_8 [0] : vector<128x128xf32> to vector<128xf32>
    %12 = vector.shape_cast %11 : vector<128xf32> to vector<1x128xf32>
    %13 = arith.addf %9, %12 : vector<1x128xf32>
    %c0_9 = arith.constant 0 : index
    %c0_10 = arith.constant 0 : index
    %14 = vector.load %arg3[%c0_9, %c0_10] : memref<1x128xf32, #tpu.memory_space<vmem>>, vector<1x128xf32>
    tpu.vector_store %arg3[%c0_9, %c0_10], %13 {strides = array<i32>} : memref<1x128xf32, #tpu.memory_space<vmem>>, vector<1x128xf32>,
    return
  }
  func.func @transform_0(%arg0: i32) -> (i32, i32) {
    %c0_i32 = arith.constant 0 : i32
    %c0_i32_0 = arith.constant 0 : i32
    return %arg0, %c0_i32 : i32, i32
  }
  func.func @transform_1(%arg0: i32) -> (i32, i32) {
    %c0_i32 = arith.constant 0 : i32
    %c0_i32_0 = arith.constant 0 : i32
    %c0_i32_1 = arith.constant 0 : i32
    return %c0_i32, %c0_i32_0 : i32, i32
  }
  func.func @transform_2(%arg0: i32) -> (i32, i32) {
    %c0_i32 = arith.constant 0 : i32
    %c0_i32_0 = arith.constant 0 : i32
    %c0_i32_1 = arith.constant 0 : i32
    return %c0_i32, %c0_i32_0 : i32, i32
  }
}

module attributes {stable_mosaic.version = 11 : i64} {
  func.func @affine_act_kernel(%arg0: i32, %arg1: memref<128x128xf32, #tpu.memory_space<vmem>>, %arg2: memref<1x128xf32, #tpu.memory_space<vmem>>, %arg3: memref<1x128xf32, #tpu.memory_space<vmem>>, %arg4: memref<128x128xbf16, #tpu.memory_space<vmem>>) attributes {dimension_semantics = [#tpu.dimension_semantics<parallel>], iteration_bounds = array<i64: 1>, scalar_prefetch = 0 : i64, scratch_operands = 0 : i64, tpu.core_type = #tpu.core_type<tc>, window_params = [{transform_indices = @transform_0, window_bounds = array<i64: 128, 128>}, {pipeline_mode = #tpu.pipeline_mode<synchronous>, transform_indices = @transform_1, window_bounds = array<i64: 1, 128>}, {pipeline_mode = #tpu.pipeline_mode<synchronous>, transform_indices = @transform_2, window_bounds = array<i64: 1, 128>}, {transform_indices = @transform_3, window_bounds = array<i64: 128, 128>}]} {
    %c0 = arith.constant 0 : index
    %c0_0 = arith.constant 0 : index
    %0 = vector.load %arg1[%c0, %c0_0] : memref<128x128xf32, #tpu.memory_space<vmem>>, vector<128x128xf32>
    %c0_1 = arith.constant 0 : index
    %c0_2 = arith.constant 0 : index
    %1 = vector.load %arg2[%c0_1, %c0_2] : memref<1x128xf32, #tpu.memory_space<vmem>>, vector<1x128xf32>
    %2 = vector.broadcast %1 : vector<1x128xf32> to vector<128x128xf32>
    %3 = arith.mulf %0, %2 : vector<128x128xf32>
    %c0_3 = arith.constant 0 : index
    %c0_4 = arith.constant 0 : index
    %4 = vector.load %arg3[%c0_3, %c0_4] : memref<1x128xf32, #tpu.memory_space<vmem>>, vector<1x128xf32>
    %5 = vector.broadcast %4 : vector<1x128xf32> to vector<128x128xf32>
    %6 = arith.addf %3, %5 : vector<128x128xf32>
    %cst = arith.constant 0.000000e+00 : f32
    %7 = vector.broadcast %cst : f32 to vector<128x128xf32>
    %8 = arith.maximumf %6, %7 : vector<128x128xf32>
    %9 = arith.truncf %8 : vector<128x128xf32> to vector<128x128xbf16>
    %c0_5 = arith.constant 0 : index
    %c0_6 = arith.constant 0 : index
    %10 = vector.load %arg4[%c0_5, %c0_6] : memref<128x128xbf16, #tpu.memory_space<vmem>>, vector<128x128xbf16>
    tpu.vector_store %arg4[%c0_5, %c0_6], %9 {strides = array<i32>} : memref<128x128xbf16, #tpu.memory_space<vmem>>, vector<128x128xbf16>,
    return
  }
  func.func @transform_0(%arg0: i32) -> (i32, i32) {
    %c0_i32 = arith.constant 0 : i32
    %c0_i32_0 = arith.constant 0 : i32
    return %arg0, %c0_i32 : i32, i32
  }
  func.func @transform_1(%arg0: i32) -> (i32, i32) {
    %c0_i32 = arith.constant 0 : i32
    %c0_i32_0 = arith.constant 0 : i32
    %c0_i32_1 = arith.constant 0 : i32
    return %c0_i32, %c0_i32_0 : i32, i32
  }
  func.func @transform_2(%arg0: i32) -> (i32, i32) {
    %c0_i32 = arith.constant 0 : i32
    %c0_i32_0 = arith.constant 0 : i32
    %c0_i32_1 = arith.constant 0 : i32
    return %c0_i32, %c0_i32_0 : i32, i32
  }
  func.func @transform_3(%arg0: i32) -> (i32, i32) {
    %c0_i32 = arith.constant 0 : i32
    %c0_i32_0 = arith.constant 0 : i32
    return %arg0, %c0_i32 : i32, i32
  }
}

module attributes {stable_mosaic.version = 11 : i64} {
  func.func @matmul_kernel(%arg0: i32, %arg1: memref<1024x8xbf16, #tpu.memory_space<vmem>>, %arg2: memref<8x48xbf16, #tpu.memory_space<vmem>>, %arg3: memref<1024x48xf32, #tpu.memory_space<vmem>>) attributes {dimension_semantics = [#tpu.dimension_semantics<parallel>], iteration_bounds = array<i64: 2>, scalar_prefetch = 0 : i64, scratch_operands = 0 : i64, tpu.core_type = #tpu.core_type<tc>, window_params = [{transform_indices = @transform_0, window_bounds = array<i64: 1024, 8>}, {pipeline_mode = #tpu.pipeline_mode<synchronous>, transform_indices = @transform_1, window_bounds = array<i64: 8, 48>}, {transform_indices = @transform_2, window_bounds = array<i64: 1024, 48>}]} {
    %c0 = arith.constant 0 : index
    %c0_0 = arith.constant 0 : index
    %0 = vector.load %arg1[%c0, %c0_0] : memref<1024x8xbf16, #tpu.memory_space<vmem>>, vector<1024x8xbf16>
    %c0_1 = arith.constant 0 : index
    %c0_2 = arith.constant 0 : index
    %1 = vector.load %arg2[%c0_1, %c0_2] : memref<8x48xbf16, #tpu.memory_space<vmem>>, vector<8x48xbf16>
    %cst = arith.constant dense<0.000000e+00> : vector<1024x48xf32>
    %2 = tpu.matmul %0, %1, %cst {dimension_numbers = #tpu.dot_dimension_numbers<[1], [0], [0], [1], [0, 0, 1, 1], [], []>} : vector<1024x8xbf16>, vector<8x48xbf16>, vector<1024x48xf32> -> vector<1024x48xf32>
    %c0_3 = arith.constant 0 : index
    %c0_4 = arith.constant 0 : index
    %3 = vector.load %arg3[%c0_3, %c0_4] : memref<1024x48xf32, #tpu.memory_space<vmem>>, vector<1024x48xf32>
    tpu.vector_store %arg3[%c0_3, %c0_4], %2 {strides = array<i32>} : memref<1024x48xf32, #tpu.memory_space<vmem>>, vector<1024x48xf32>,
    return
  }
  func.func @transform_0(%arg0: i32) -> (i32, i32) {
    %c0_i32 = arith.constant 0 : i32
    %c0_i32_0 = arith.constant 0 : i32
    return %arg0, %c0_i32 : i32, i32
  }
  func.func @transform_1(%arg0: i32) -> (i32, i32) {
    %c0_i32 = arith.constant 0 : i32
    %c0_i32_0 = arith.constant 0 : i32
    %c0_i32_1 = arith.constant 0 : i32
    return %c0_i32, %c0_i32_0 : i32, i32
  }
  func.func @transform_2(%arg0: i32) -> (i32, i32) {
    %c0_i32 = arith.constant 0 : i32
    %c0_i32_0 = arith.constant 0 : i32
    return %arg0, %c0_i32 : i32, i32
  }
}

module attributes {stable_mosaic.version = 11 : i64} {
  func.func @affine_act_kernel(%arg0: i32, %arg1: memref<64x384xf32, #tpu.memory_space<vmem>>, %arg2: memref<1x384xf32, #tpu.memory_space<vmem>>, %arg3: memref<1x384xf32, #tpu.memory_space<vmem>>, %arg4: memref<64x384xf32, #tpu.memory_space<vmem>>) attributes {dimension_semantics = [#tpu.dimension_semantics<parallel>], iteration_bounds = array<i64: 1>, scalar_prefetch = 0 : i64, scratch_operands = 0 : i64, tpu.core_type = #tpu.core_type<tc>, window_params = [{transform_indices = @transform_0, window_bounds = array<i64: 64, 384>}, {pipeline_mode = #tpu.pipeline_mode<synchronous>, transform_indices = @transform_1, window_bounds = array<i64: 1, 384>}, {pipeline_mode = #tpu.pipeline_mode<synchronous>, transform_indices = @transform_2, window_bounds = array<i64: 1, 384>}, {transform_indices = @transform_3, window_bounds = array<i64: 64, 384>}]} {
    %c0 = arith.constant 0 : index
    %c0_0 = arith.constant 0 : index
    %0 = vector.load %arg1[%c0, %c0_0] : memref<64x384xf32, #tpu.memory_space<vmem>>, vector<64x384xf32>
    %c0_1 = arith.constant 0 : index
    %c0_2 = arith.constant 0 : index
    %1 = vector.load %arg2[%c0_1, %c0_2] : memref<1x384xf32, #tpu.memory_space<vmem>>, vector<1x384xf32>
    %2 = vector.broadcast %1 : vector<1x384xf32> to vector<64x384xf32>
    %3 = arith.mulf %0, %2 : vector<64x384xf32>
    %c0_3 = arith.constant 0 : index
    %c0_4 = arith.constant 0 : index
    %4 = vector.load %arg3[%c0_3, %c0_4] : memref<1x384xf32, #tpu.memory_space<vmem>>, vector<1x384xf32>
    %5 = vector.broadcast %4 : vector<1x384xf32> to vector<64x384xf32>
    %6 = arith.addf %3, %5 : vector<64x384xf32>
    %7 = math.tanh %6 : vector<64x384xf32>
    %c0_5 = arith.constant 0 : index
    %c0_6 = arith.constant 0 : index
    %8 = vector.load %arg4[%c0_5, %c0_6] : memref<64x384xf32, #tpu.memory_space<vmem>>, vector<64x384xf32>
    tpu.vector_store %arg4[%c0_5, %c0_6], %7 {strides = array<i32>} : memref<64x384xf32, #tpu.memory_space<vmem>>, vector<64x384xf32>,
    return
  }
  func.func @transform_0(%arg0: i32) -> (i32, i32) {
    %c0_i32 = arith.constant 0 : i32
    %c0_i32_0 = arith.constant 0 : i32
    return %arg0, %c0_i32 : i32, i32
  }
  func.func @transform_1(%arg0: i32) -> (i32, i32) {
    %c0_i32 = arith.constant 0 : i32
    %c0_i32_0 = arith.constant 0 : i32
    %c0_i32_1 = arith.constant 0 : i32
    return %c0_i32, %c0_i32_0 : i32, i32
  }
  func.func @transform_2(%arg0: i32) -> (i32, i32) {
    %c0_i32 = arith.constant 0 : i32
    %c0_i32_0 = arith.constant 0 : i32
    %c0_i32_1 = arith.constant 0 : i32
    return %c0_i32, %c0_i32_0 : i32, i32
  }
  func.func @transform_3(%arg0: i32) -> (i32, i32) {
    %c0_i32 = arith.constant 0 : i32
    %c0_i32_0 = arith.constant 0 : i32
    return %arg0, %c0_i32 : i32, i32
  }
}

</mosaic_0001>

<llo_original>
// kernel: generator_forward.14
$region0: #{generator_forward.14}
  #allocation0 [shape = 'u32[]', space=smem, size = 0x4, offset = 0x4, fixed_abs, tag = 'smem constant byte address 0x4 - core index']
  #allocation1 [shape = 'u32[144,128]{1,0:T(1,128)}', space=vmem, size = 0x12000, scoped, tag = 'internal scratch']
  %s0 = inlined_call_operand.vmem [shape: bf16[8,64], index: 0, kind: input, shape index: {}]
  %s1 = inlined_call_operand.hbm [shape: bf16[64,1024], index: 1, kind: input, shape index: {}]
  %s2 = inlined_call_operand.vmem [shape: f32[8,1024], index: 2, kind: output, shape index: {}]
  %s3 = sld [smem:[#allocation0]]
  $region22: #{generator_forward.14} parent=0
    _
  %s5 = ssub.s32 1, %s3
  %s6 = scalar_select 0, %s5, %s3
  $region1: #{generator_forward.14} parent=0
    #allocation2 [shape = 'u8[131072]{0}', space=vmem, size = 0x20000, scoped, tag = 'input window, operand 1, single buffered']
    #allocation3 [shape = 's32[1]{0}', space=sflag, size = 0x4, scoped, tag = 'scoped memory for generator_forward.14']
    %7 = vsyncpa [#allocation3], 0
    // Predicated region
    $region2: #{generator_forward.14} parent=1 // pred_check
      _
    $region3: #{generator_forward.14} parent=1 // pred_check_branch
      %9 = sbr.rel (0) target = $region5
    $region4: #{generator_forward.14} parent=1 // pred_region
      _
    $region5: #{generator_forward.14} parent=1 // pred_fallthru
      _
    // Predicated region
    $region6: #{generator_forward.14} parent=1 // pred_check
      _
    $region7: #{generator_forward.14} parent=1 // pred_check_branch
      %11 = sbr.rel (0) target = $region9
    $region8: #{generator_forward.14} parent=1 // pred_region
      %s13 = ssub.s32 4096, 4096
      %14 = vsyncadd [#allocation3], %s13
      %s15 = sshll.u32 [#allocation2], 4
      %s16 = int_to_ptr.vmem [resolvable:$true] %s15
      %21 = dma.hbm_to_vmem [thread:$0]  %s1, 4096, %s16, [#allocation3], 512, 512, 32
    $region9: #{generator_forward.14} parent=1 // pred_fallthru
      _
    // Predicated region
    $region10: #{generator_forward.14} parent=1 // pred_check
      _
    $region11: #{generator_forward.14} parent=1 // pred_check_branch
      %23 = sbr.rel (0) target = $region13
    $region12: #{generator_forward.14} parent=1 // pred_region
      %24 = dma.done [#allocation3], 4096
    $region13: #{generator_forward.14} parent=1 // pred_fallthru
      _
    %v26 = vld [vmem:[%s0] sm:$0xf]
    %v27 = vld [vmem:[#allocation2] sm:$0xff]
    %v28 = vld [vmem:[#allocation2 + $0x8] sm:$0xff]
    %v29 = vld [vmem:[#allocation2 + $0x10] sm:$0xff]
    %v30 = vld [vmem:[#allocation2 + $0x18] sm:$0xff]
    %v31 = vld [vmem:[#allocation2 + $0x20] sm:$0xff]
    %v32 = vld [vmem:[#allocation2 + $0x28] sm:$0xff]
    %v33 = vld [vmem:[#allocation2 + $0x30] sm:$0xff]
    %v34 = vld [vmem:[#allocation2 + $0x38] sm:$0xff]
    %v35 = vld [vmem:[#allocation2 + $0x40] sm:$0xff]
    %v36 = vld [vmem:[#allocation2 + $0x48] sm:$0xff]
    %v37 = vld [vmem:[#allocation2 + $0x50] sm:$0xff]
    %v38 = vld [vmem:[#allocation2 + $0x58] sm:$0xff]
    %v39 = vld [vmem:[#allocation2 + $0x60] sm:$0xff]
    %v40 = vld [vmem:[#allocation2 + $0x68] sm:$0xff]
    %v41 = vld [vmem:[#allocation2 + $0x70] sm:$0xff]
    %v42 = vld [vmem:[#allocation2 + $0x78] sm:$0xff]
    %v43 = vld [vmem:[#allocation2 + $0x80] sm:$0xff]
    %v44 = vld [vmem:[#allocation2 + $0x88] sm:$0xff]
    %v45 = vld [vmem:[#allocation2 + $0x90] sm:$0xff]
    %v46 = vld [vmem:[#allocation2 + $0x98] sm:$0xff]
    %v47 = vld [vmem:[#allocation2 + $0xa0] sm:$0xff]
    %v48 = vld [vmem:[#allocation2 + $0xa8] sm:$0xff]
    %v49 = vld [vmem:[#allocation2 + $0xb0] sm:$0xff]
    %v50 = vld [vmem:[#allocation2 + $0xb8] sm:$0xff]
    %v51 = vld [vmem:[#allocation2 + $0xc0] sm:$0xff]
    %v52 = vld [vmem:[#allocation2 + $0xc8] sm:$0xff]
    %v53 = vld [vmem:[#allocation2 + $0xd0] sm:$0xff]
    %v54 = vld [vmem:[#allocation2 + $0xd8] sm:$0xff]
    %v55 = vld [vmem:[#allocation2 + $0xe0] sm:$0xff]
    %v56 = vld [vmem:[#allocation2 + $0xe8] sm:$0xff]
    %v57 = vld [vmem:[#allocation2 + $0xf0] sm:$0xff]
    %v58 = vld [vmem:[#allocation2 + $0xf8] sm:$0xff]
    %v91 = vunpack.c.l.b16 %v27
    %v92 = vunpack.c.h.b16 %v27
    %v93 = vunpack.c.l.b16 %v28
    %v94 = vunpack.c.h.b16 %v28
    %v95 = vunpack.c.l.b16 %v29
    %v96 = vunpack.c.h.b16 %v29
    %v97 = vunpack.c.l.b16 %v30
    %v98 = vunpack.c.h.b16 %v30
    %v99 = vunpack.c.l.b16 %v31
    %v100 = vunpack.c.h.b16 %v31
    %v101 = vunpack.c.l.b16 %v32
    %v102 = vunpack.c.h.b16 %v32
    %v103 = vunpack.c.l.b16 %v33
    %v104 = vunpack.c.h.b16 %v33
    %v105 = vunpack.c.l.b16 %v34
    %v106 = vunpack.c.h.b16 %v34
    %v107 = vunpack.c.l.b16 %v35
    %v108 = vunpack.c.h.b16 %v35
    %v109 = vunpack.c.l.b16 %v36
    %v110 = vunpack.c.h.b16 %v36
    %v111 = vunpack.c.l.b16 %v37
    %v112 = vunpack.c.h.b16 %v37
    %v113 = vunpack.c.l.b16 %v38
    %v114 = vunpack.c.h.b16 %v38
    %v115 = vunpack.c.l.b16 %v39
    %v116 = vunpack.c.h.b16 %v39
    %v117 = vunpack.c.l.b16 %v40
    %v118 = vunpack.c.h.b16 %v40
    %v119 = vunpack.c.l.b16 %v41
    %v120 = vunpack.c.h.b16 %v41
    %v121 = vunpack.c.l.b16 %v42
    %v122 = vunpack.c.h.b16 %v42
    %v123 = vunpack.c.l.b16 %v43
    %v124 = vunpack.c.h.b16 %v43
    %v125 = vunpack.c.l.b16 %v44
    %v126 = vunpack.c.h.b16 %v44
    %v127 = vunpack.c.l.b16 %v45
    %v128 = vunpack.c.h.b16 %v45
    %v129 = vunpack.c.l.b16 %v46
    %v130 = vunpack.c.h.b16 %v46
    %v131 = vunpack.c.l.b16 %v47
    %v132 = vunpack.c.h.b16 %v47
    %v133 = vunpack.c.l.b16 %v48
    %v134 = vunpack.c.h.b16 %v48
    %v135 = vunpack.c.l.b16 %v49
    %v136 = vunpack.c.h.b16 %v49
    %v137 = vunpack.c.l.b16 %v50
    %v138 = vunpack.c.h.b16 %v50
    %v139 = vunpack.c.l.b16 %v51
    %v140 = vunpack.c.h.b16 %v51
    %v141 = vunpack.c.l.b16 %v52
    %v142 = vunpack.c.h.b16 %v52
    %v143 = vunpack.c.l.b16 %v53
    %v144 = vunpack.c.h.b16 %v53
    %v145 = vunpack.c.l.b16 %v54
    %v146 = vunpack.c.h.b16 %v54
    %v147 = vunpack.c.l.b16 %v55
    %v148 = vunpack.c.h.b16 %v55
    %v149 = vunpack.c.l.b16 %v56
    %v150 = vunpack.c.h.b16 %v56
    %v151 = vunpack.c.l.b16 %v57
    %v152 = vunpack.c.h.b16 %v57
    %v153 = vunpack.c.l.b16 %v58
    %v154 = vunpack.c.h.b16 %v58
    %v155 = vpack.c.b16 %v99, %v91
    %v156 = vpack.c.b16 %v100, %v92
    %v157 = vpack.c.b16 %v101, %v93
    %v158 = vpack.c.b16 %v102, %v94
    %v159 = vpack.c.b16 %v103, %v95
    %v160 = vpack.c.b16 %v104, %v96
    %v161 = vpack.c.b16 %v105, %v97
    %v162 = vpack.c.b16 %v106, %v98
    %v163 = vpack.c.b16 %v115, %v107
    %v164 = vpack.c.b16 %v116, %v108
    %v165 = vpack.c.b16 %v117, %v109
    %v166 = vpack.c.b16 %v118, %v110
    %v167 = vpack.c.b16 %v119, %v111
    %v168 = vpack.c.b16 %v120, %v112
    %v169 = vpack.c.b16 %v121, %v113
    %v170 = vpack.c.b16 %v122, %v114
    %v171 = vpack.c.b16 %v131, %v123
    %v172 = vpack.c.b16 %v132, %v124
    %v173 = vpack.c.b16 %v133, %v125
    %v174 = vpack.c.b16 %v134, %v126
    %v175 = vpack.c.b16 %v135, %v127
    %v176 = vpack.c.b16 %v136, %v128
    %v177 = vpack.c.b16 %v137, %v129
    %v178 = vpack.c.b16 %v138, %v130
    %v179 = vpack.c.b16 %v147, %v139
    %v180 = vpack.c.b16 %v148, %v140
    %v181 = vpack.c.b16 %v149, %v141
    %v182 = vpack.c.b16 %v150, %v142
    %v183 = vpack.c.b16 %v151, %v143
    %v184 = vpack.c.b16 %v152, %v144
    %v185 = vpack.c.b16 %v153, %v145
    %v186 = vpack.c.b16 %v154, %v146
    %vm219 = vcmask 523264
    %v221 = vsel %vm219, %v26, 0
    %223 = vmatprep.subr.bf16.mxu0 0
    %224 = vmatpush1.bf16.msra.mxu0 0
    %225 = vmatprep.subr.bf16.mxu0 0
    %226 = vmatpush1.bf16.msra.mxu0 0
    %227 = vmatprep.subr.bf16.mxu0 0
    %228 = vmatpush1.bf16.msra.mxu0 0
    %229 = vmatprep.subr.bf16.mxu0 0
    %230 = vmatpush1.bf16.msra.mxu0 0
    %231 = vmatprep.subr.bf16.mxu0 %v180
    %232 = vmatpush1.bf16.msra.mxu0 %v179
    %233 = vmatprep.subr.bf16.mxu0 %v172
    %234 = vmatpush1.bf16.msra.mxu0 %v171
    %235 = vmatprep.subr.bf16.mxu0 %v164
    %236 = vmatpush1.bf16.msra.mxu0 %v163
    %237 = vmatprep.subr.bf16.mxu0 %v156
    %238 = vmatpush1.bf16.msra.mxu0 %v155
    %239 = vmatprep.subr.bf16.mxu0 0
    %240 = vmatpush2.bf16.msra.mxu0 0
    %241 = vmatprep.subr.bf16.mxu0 0
    %242 = vmatpush2.bf16.msra.mxu0 0
    %243 = vmatprep.subr.bf16.mxu0 0
    %244 = vmatpush2.bf16.msra.mxu0 0
    %245 = vmatprep.subr.bf16.mxu0 0
    %246 = vmatpush2.bf16.msra.mxu0 0
    %247 = vmatprep.subr.bf16.mxu0 0
    %248 = vmatpush2.bf16.msra.mxu0 0
    %249 = vmatprep.subr.bf16.mxu0 0
    %250 = vmatpush2.bf16.msra.mxu0 0
    %251 = vmatprep.subr.bf16.mxu0 0
    %252 = vmatpush2.bf16.msra.mxu0 0
    %253 = vmatprep.subr.bf16.mxu0 0
    %254 = vmatpush2.bf16.msra.mxu0 0
    %255 = vmatprep.mubr.bf16.mxu0 0
    %256 = vmatmul.mubr.bf16.gmra.mxu0 %v221
    %v257 = vpop.f32.mrf.mxu0
    %v258 = vadd.f32 0.0, %v257
    %v259 = vpop.f32.mrf.mxu0
    %v260 = vadd.f32 0.0, %v259
    %v261 = vpop.f32.mrf.mxu0
    %v262 = vpop.f32.mrf.mxu0
    %263 = vdwg.mxu0
    %264 = vmatprep.subr.bf16.mxu0 0
    %265 = vmatpush1.bf16.msra.mxu0 0
    %266 = vmatprep.subr.bf16.mxu0 0
    %267 = vmatpush1.bf16.msra.mxu0 0
    %268 = vmatprep.subr.bf16.mxu0 0
    %269 = vmatpush1.bf16.msra.mxu0 0
    %270 = vmatprep.subr.bf16.mxu0 0
    %271 = vmatpush1.bf16.msra.mxu0 0
    %272 = vmatprep.subr.bf16.mxu0 %v182
    %273 = vmatpush1.bf16.msra.mxu0 %v181
    %274 = vmatprep.subr.bf16.mxu0 %v174
    %275 = vmatpush1.bf16.msra.mxu0 %v173
    %276 = vmatprep.subr.bf16.mxu0 %v166
    %277 = vmatpush1.bf16.msra.mxu0 %v165
    %278 = vmatprep.subr.bf16.mxu0 %v158
    %279 = vmatpush1.bf16.msra.mxu0 %v157
    %280 = vmatprep.subr.bf16.mxu0 0
    %281 = vmatpush2.bf16.msra.mxu0 0
    %282 = vmatprep.subr.bf16.mxu0 0
    %283 = vmatpush2.bf16.msra.mxu0 0
    %284 = vmatprep.subr.bf16.mxu0 0
    %285 = vmatpush2.bf16.msra.mxu0 0
    %286 = vmatprep.subr.bf16.mxu0 0
    %287 = vmatpush2.bf16.msra.mxu0 0
    %288 = vmatprep.subr.bf16.mxu0 0
    %289 = vmatpush2.bf16.msra.mxu0 0
    %290 = vmatprep.subr.bf16.mxu0 0
    %291 = vmatpush2.bf16.msra.mxu0 0
    %292 = vmatprep.subr.bf16.mxu0 0
    %293 = vmatpush2.bf16.msra.mxu0 0
    %294 = vmatprep.subr.bf16.mxu0 0
    %295 = vmatpush2.bf16.msra.mxu0 0
    %296 = vmatprep.mubr.bf16.mxu0 0
    %297 = vmatmul.mubr.bf16.gmra.mxu0 %v221
    %v298 = vpop.f32.mrf.mxu0
    %v299 = vadd.f32 0.0, %v298
    %v300 = vpop.f32.mrf.mxu0
    %v301 = vadd.f32 0.0, %v300
    %v302 = vpop.f32.mrf.mxu0
    %v303 = vpop.f32.mrf.mxu0
    %304 = vdwg.mxu0
    %305 = vmatprep.subr.bf16.mxu0 0
    %306 = vmatpush1.bf16.msra.mxu0 0
    %307 = vmatprep.subr.bf16.mxu0 0
    %308 = vmatpush1.bf16.msra.mxu0 0
    %309 = vmatprep.subr.bf16.mxu0 0
    %310 = vmatpush1.bf16.msra.mxu0 0
    %311 = vmatprep.subr.bf16.mxu0 0
    %312 = vmatpush1.bf16.msra.mxu0 0
    %313 = vmatprep.subr.bf16.mxu0 %v184
    %314 = vmatpush1.bf16.msra.mxu0 %v183
    %315 = vmatprep.subr.bf16.mxu0 %v176
    %316 = vmatpush1.bf16.msra.mxu0 %v175
    %317 = vmatprep.subr.bf16.mxu0 %v168
    %318 = vmatpush1.bf16.msra.mxu0 %v167
    %319 = vmatprep.subr.bf16.mxu0 %v160
    %320 = vmatpush1.bf16.msra.mxu0 %v159
    %321 = vmatprep.subr.bf16.mxu0 0
    %322 = vmatpush2.bf16.msra.mxu0 0
    %323 = vmatprep.subr.bf16.mxu0 0
    %324 = vmatpush2.bf16.msra.mxu0 0
    %325 = vmatprep.subr.bf16.mxu0 0
    %326 = vmatpush2.bf16.msra.mxu0 0
    %327 = vmatprep.subr.bf16.mxu0 0
    %328 = vmatpush2.bf16.msra.mxu0 0
    %329 = vmatprep.subr.bf16.mxu0 0
    %330 = vmatpush2.bf16.msra.mxu0 0
    %331 = vmatprep.subr.bf16.mxu0 0
    %332 = vmatpush2.bf16.msra.mxu0 0
    %333 = vmatprep.subr.bf16.mxu0 0
    %334 = vmatpush2.bf16.msra.mxu0 0
    %335 = vmatprep.subr.bf16.mxu0 0
    %336 = vmatpush2.bf16.msra.mxu0 0
    %337 = vmatprep.mubr.bf16.mxu0 0
    %338 = vmatmul.mubr.bf16.gmra.mxu0 %v221
    %v339 = vpop.f32.mrf.mxu0
    %v340 = vadd.f32 0.0, %v339
    %v341 = vpop.f32.mrf.mxu0
    %v342 = vadd.f32 0.0, %v341
    %v343 = vpop.f32.mrf.mxu0
    %v344 = vpop.f32.mrf.mxu0
    %345 = vdwg.mxu0
    %346 = vmatprep.subr.bf16.mxu0 0
    %347 = vmatpush1.bf16.msra.mxu0 0
    %348 = vmatprep.subr.bf16.mxu0 0
    %349 = vmatpush1.bf16.msra.mxu0 0
    %350 = vmatprep.subr.bf16.mxu0 0
    %351 = vmatpush1.bf16.msra.mxu0 0
    %352 = vmatprep.subr.bf16.mxu0 0
    %353 = vmatpush1.bf16.msra.mxu0 0
    %354 = vmatprep.subr.bf16.mxu0 %v186
    %355 = vmatpush1.bf16.msra.mxu0 %v185
    %356 = vmatprep.subr.bf16.mxu0 %v178
    %357 = vmatpush1.bf16.msra.mxu0 %v177
    %358 = vmatprep.subr.bf16.mxu0 %v170
    %359 = vmatpush1.bf16.msra.mxu0 %v169
    %360 = vmatprep.subr.bf16.mxu0 %v162
    %361 = vmatpush1.bf16.msra.mxu0 %v161
    %362 = vmatprep.subr.bf16.mxu0 0
    %363 = vmatpush2.bf16.msra.mxu0 0
    %364 = vmatprep.subr.bf16.mxu0 0
    %365 = vmatpush2.bf16.msra.mxu0 0
    %366 = vmatprep.subr.bf16.mxu0 0
    %367 = vmatpush2.bf16.msra.mxu0 0
    %368 = vmatprep.subr.bf16.mxu0 0
    %369 = vmatpush2.bf16.msra.mxu0 0
    %370 = vmatprep.subr.bf16.mxu0 0
    %371 = vmatpush2.bf16.msra.mxu0 0
    %372 = vmatprep.subr.bf16.mxu0 0
    %373 = vmatpush2.bf16.msra.mxu0 0
    %374 = vmatprep.subr.bf16.mxu0 0
    %375 = vmatpush2.bf16.msra.mxu0 0
    %376 = vmatprep.subr.bf16.mxu0 0
    %377 = vmatpush2.bf16.msra.mxu0 0
    %378 = vmatprep.mubr.bf16.mxu0 0
    %379 = vmatmul.mubr.bf16.gmra.mxu0 %v221
    %v380 = vpop.f32.mrf.mxu0
    %v381 = vadd.f32 0.0, %v380
    %v382 = vpop.f32.mrf.mxu0
    %v383 = vadd.f32 0.0, %v382
    %v384 = vpop.f32.mrf.mxu0
    %v385 = vpop.f32.mrf.mxu0
    %386 = vdwg.mxu0
    %387 = vst [vmem:[%s2] sm:$0xff] %v258
    %388 = vst [vmem:[%s2 + $0x8] sm:$0xff] %v260
    %389 = vst [vmem:[%s2 + $0x10] sm:$0xff] %v299
    %390 = vst [vmem:[%s2 + $0x18] sm:$0xff] %v301
    %391 = vst [vmem:[%s2 + $0x20] sm:$0xff] %v340
    %392 = vst [vmem:[%s2 + $0x28] sm:$0xff] %v342
    %393 = vst [vmem:[%s2 + $0x30] sm:$0xff] %v381
    %394 = vst [vmem:[%s2 + $0x38] sm:$0xff] %v383
    // Predicated region
    $region14: #{generator_forward.14} parent=1 // pred_check
      _
    $region15: #{generator_forward.14} parent=1 // pred_check_branch
      %396 = sbr.rel (0) target = $region17
    $region16: #{generator_forward.14} parent=1 // pred_region
      _
    $region17: #{generator_forward.14} parent=1 // pred_fallthru
      _
    // Predicated region
    $region18: #{generator_forward.14} parent=1 // pred_check
      _
    $region19: #{generator_forward.14} parent=1 // pred_check_branch
      %398 = sbr.rel (0) target = $region21
    $region20: #{generator_forward.14} parent=1 // pred_region
      _
    $region21: #{generator_forward.14} parent=1 // pred_fallthru
      _
    %399 = vsyncpa [#allocation3], 1

// kernel: generator_forward.15
$region0: #{generator_forward.15}
  #allocation0 [shape = 'u32[]', space=smem, size = 0x4, offset = 0x4, fixed_abs, tag = 'smem constant byte address 0x4 - core index']
  #allocation1 [shape = 'u32[144,128]{1,0:T(1,128)}', space=vmem, size = 0x12000, scoped, tag = 'internal scratch']
  %s0 = inlined_call_operand.vmem [shape: f32[16,128], index: 0, kind: input, shape index: {}]
  %s1 = inlined_call_operand.vmem [shape: f32[1,128], index: 1, kind: output, shape index: {0}]
  %s2 = inlined_call_operand.vmem [shape: f32[1,128], index: 2, kind: output, shape index: {1}]
  %3 = xla_tuple %s1, %s2
  %s4 = sld [smem:[#allocation0]]
  $region26: #{generator_forward.15} parent=0
    _
  %s6 = ssub.s32 1, %s4
  %s7 = scalar_select 0, %s6, %s4
  // Predicated region
  $region2: #{generator_forward.15} parent=0 // pred_check
    _
  $region3: #{generator_forward.15} parent=0 // pred_check_branch
    %9 = sbr.rel (0) target = $region5
  $region4: #{generator_forward.15} parent=0 // pred_region
    _
  $region5: #{generator_forward.15} parent=0 // pred_fallthru
    _
  %p10 = scmp.eq.s32.totalorder 0, 0
  // Predicated region
  $region6: #{generator_forward.15} parent=0 // pred_check
    %p11 = pneg %p10
  $region7: #{generator_forward.15} parent=0 // pred_check_branch
    %13 = sbr.rel (%p11) target = $region9
  $region8: #{generator_forward.15} parent=0 // pred_region
    %14 = vst [vmem:[%s1] sm:$0x1] 0.0
    %15 = vst [vmem:[%s2] sm:$0x1] 0.0
  $region9: #{generator_forward.15} parent=0 // pred_fallthru
    _
  %v16 = vld [vmem:[%s0] sm:$0xff]
  %v17 = vld [vmem:[%s0 + $0x8] sm:$0xff]
  %v18 = vld [vmem:[%s1] sm:$0x1]
  %v19 = vadd.f32 %v16, %v17
  %v20 = vrot.slane %v19, 4
  %v21 = vadd.f32 %v19, %v20
  %v22 = vrot.slane %v21, 2
  %v23 = vadd.f32 %v21, %v22
  %v24 = vrot.slane %v23, 1
  %v25 = vadd.f32 %v23, %v24
  %v26 = vadd.f32 %v18, %v25
  %27 = vst [vmem:[%s1] sm:$0x1] %v26
  %v28 = vld [vmem:[%s2] sm:$0x1]
  %v29 = vmul.f32 %v16, %v16
  %v30 = vmul.f32 %v17, %v17
  %v31 = vadd.f32 %v29, %v30
  %v32 = vrot.slane %v31, 4
  %v33 = vadd.f32 %v31, %v32
  %v34 = vrot.slane %v33, 2
  %v35 = vadd.f32 %v33, %v34
  %v36 = vrot.slane %v35, 1
  %v37 = vadd.f32 %v35, %v36
  %v38 = vadd.f32 %v28, %v37
  %39 = vst [vmem:[%s2] sm:$0x1] %v38
  // Predicated region
  $region10: #{generator_forward.15} parent=0 // pred_check
    _
  $region11: #{generator_forward.15} parent=0 // pred_check_branch
    %41 = sbr.rel (0) target = $region13
  $region12: #{generator_forward.15} parent=0 // pred_region
    _
  $region13: #{generator_forward.15} parent=0 // pred_fallthru
    _
  // Predicated region
  $region14: #{generator_forward.15} parent=0 // pred_check
    _
  $region15: #{generator_forward.15} parent=0 // pred_check_branch
    %43 = sbr.rel (0) target = $region17
  $region16: #{generator_forward.15} parent=0 // pred_region
    _
  $region17: #{generator_forward.15} parent=0 // pred_fallthru
    _
  // Predicated region
  $region18: #{generator_forward.15} parent=0 // pred_check
    _
  $region19: #{generator_forward.15} parent=0 // pred_check_branch
    %45 = sbr.rel (0) target = $region21
  $region20: #{generator_forward.15} parent=0 // pred_region
    _
  $region21: #{generator_forward.15} parent=0 // pred_fallthru
    _
  // Predicated region
  $region22: #{generator_forward.15} parent=0 // pred_check
    _
  $region23: #{generator_forward.15} parent=0 // pred_check_branch
    %47 = sbr.rel (0) target = $region25
  $region24: #{generator_forward.15} parent=0 // pred_region
    _
  $region25: #{generator_forward.15} parent=0 // pred_fallthru
    _

// kernel: generator_forward.16
$region0: #{generator_forward.16}
  #allocation0 [shape = 'u32[]', space=smem, size = 0x4, offset = 0x4, fixed_abs, tag = 'smem constant byte address 0x4 - core index']
  #allocation1 [shape = 'u32[144,128]{1,0:T(1,128)}', space=vmem, size = 0x12000, scoped, tag = 'internal scratch']
  %s0 = inlined_call_operand.vmem [shape: f32[16,128], index: 0, kind: input, shape index: {}]
  %s1 = inlined_call_operand.vmem [shape: f32[1,128], index: 1, kind: input, shape index: {}]
  %s2 = inlined_call_operand.vmem [shape: f32[1,128], index: 2, kind: input, shape index: {}]
  %s3 = inlined_call_operand.vmem [shape: bf16[16,128], index: 3, kind: output, shape index: {}]
  %s4 = sld [smem:[#allocation0]]
  $region22: #{generator_forward.16} parent=0
    _
  %s6 = ssub.s32 1, %s4
  %s7 = scalar_select 0, %s6, %s4
  // Predicated region
  $region2: #{generator_forward.16} parent=0 // pred_check
    _
  $region3: #{generator_forward.16} parent=0 // pred_check_branch
    %9 = sbr.rel (0) target = $region5
  $region4: #{generator_forward.16} parent=0 // pred_region
    _
  $region5: #{generator_forward.16} parent=0 // pred_fallthru
    _
  // Predicated region
  $region6: #{generator_forward.16} parent=0 // pred_check
    _
  $region7: #{generator_forward.16} parent=0 // pred_check_branch
    %11 = sbr.rel (0) target = $region9
  $region8: #{generator_forward.16} parent=0 // pred_region
    _
  $region9: #{generator_forward.16} parent=0 // pred_fallthru
    _
  // Predicated region
  $region10: #{generator_forward.16} parent=0 // pred_check
    _
  $region11: #{generator_forward.16} parent=0 // pred_check_branch
    %13 = sbr.rel (0) target = $region13
  $region12: #{generator_forward.16} parent=0 // pred_region
    _
  $region13: #{generator_forward.16} parent=0 // pred_fallthru
    _
  %v14 = vld [vmem:[%s0] sm:$0xff]
  %v15 = vld [vmem:[%s0 + $0x8] sm:$0xff]
  %v16 = vld [vmem:[%s1] sm:$0x1]
  %v18 = vlaneseq
  %v19 = vshrl.u32 %v18, 7
  %v20 = vsub.s32 0, %v19
  %v21 = vrot.slane %v16, %v20
  %v23 = vmul.f32 %v14, %v21
  %v24 = vmul.f32 %v15, %v21
  %v25 = vld [vmem:[%s2] sm:$0x1]
  %v27 = vlaneseq
  %v28 = vshrl.u32 %v27, 7
  %v29 = vsub.s32 0, %v28
  %v30 = vrot.slane %v25, %v29
  %v32 = vadd.f32 %v23, %v30
  %v33 = vadd.f32 %v24, %v30
  %v34 = vmax.f32 %v32, 0.0
  %v35 = vmax.f32 %v33, 0.0
  %v36 = vpack.c.bf16 %v35, %v34
  %v38 = vunpack.c.l.b16 %v36
  %v39 = vunpack.c.h.b16 %v36
  %v40 = vpack.c.b16 %v38, %v38
  %v41 = vpack.c.b16 %v39, %v39
  %44 = vst [vmem:[%s3] sm:$0xf] %v40
  %45 = vst [vmem:[%s3 + $0x4] sm:$0xf] %v41
  // Predicated region
  $region14: #{generator_forward.16} parent=0 // pred_check
    _
  $region15: #{generator_forward.16} parent=0 // pred_check_branch
    %47 = sbr.rel (0) target = $region17
  $region16: #{generator_forward.16} parent=0 // pred_region
    _
  $region17: #{generator_forward.16} parent=0 // pred_fallthru
    _
  // Predicated region
  $region18: #{generator_forward.16} parent=0 // pred_check
    _
  $region19: #{generator_forward.16} parent=0 // pred_check_branch
    %49 = sbr.rel (0) target = $region21
  $region20: #{generator_forward.16} parent=0 // pred_region
    _
  $region21: #{generator_forward.16} parent=0 // pred_fallthru
    _

// kernel: generator_forward.17
$region0: #{generator_forward.17}
  #allocation0 [shape = 'u32[]', space=smem, size = 0x4, offset = 0x4, fixed_abs, tag = 'smem constant byte address 0x4 - core index']
  #allocation1 [shape = 'u32[144,128]{1,0:T(1,128)}', space=vmem, size = 0x12000, scoped, tag = 'internal scratch']
  %s0 = inlined_call_operand.vmem [shape: bf16[32,64], index: 0, kind: input, shape index: {}]
  %s1 = inlined_call_operand.hbm [shape: bf16[64,512], index: 1, kind: input, shape index: {}]
  %s2 = inlined_call_operand.vmem [shape: f32[32,512], index: 2, kind: output, shape index: {}]
  %s3 = sld [smem:[#allocation0]]
  $region22: #{generator_forward.17} parent=0
    _
  %s5 = ssub.s32 1, %s3
  %s6 = scalar_select 0, %s5, %s3
  $region1: #{generator_forward.17} parent=0
    #allocation2 [shape = 'u8[65536]{0}', space=vmem, size = 0x10000, scoped, tag = 'input window, operand 1, single buffered']
    #allocation3 [shape = 's32[1]{0}', space=sflag, size = 0x4, scoped, tag = 'scoped memory for generator_forward.17']
    %7 = vsyncpa [#allocation3], 0
    // Predicated region
    $region2: #{generator_forward.17} parent=1 // pred_check
      _
    $region3: #{generator_forward.17} parent=1 // pred_check_branch
      %9 = sbr.rel (0) target = $region5
    $region4: #{generator_forward.17} parent=1 // pred_region
      _
    $region5: #{generator_forward.17} parent=1 // pred_fallthru
      _
    // Predicated region
    $region6: #{generator_forward.17} parent=1 // pred_check
      _
    $region7: #{generator_forward.17} parent=1 // pred_check_branch
      %11 = sbr.rel (0) target = $region9
    $region8: #{generator_forward.17} parent=1 // pred_region
      %s13 = ssub.s32 2048, 2048
      %14 = vsyncadd [#allocation3], %s13
      %s15 = sshll.u32 [#allocation2], 4
      %s16 = int_to_ptr.vmem [resolvable:$true] %s15
      %21 = dma.hbm_to_vmem [thread:$0]  %s1, 2048, %s16, [#allocation3], 256, 256, 16
    $region9: #{generator_forward.17} parent=1 // pred_fallthru
      _
    // Predicated region
    $region10: #{generator_forward.17} parent=1 // pred_check
      _
    $region11: #{generator_forward.17} parent=1 // pred_check_branch
      %23 = sbr.rel (0) target = $region13
    $region12: #{generator_forward.17} parent=1 // pred_region
      %24 = dma.done [#allocation3], 2048
    $region13: #{generator_forward.17} parent=1 // pred_fallthru
      _
    %v26 = vld [vmem:[%s0] sm:$0xf]
    %v27 = vld [vmem:[%s0 + $0x4] sm:$0xf]
    %v28 = vld [vmem:[%s0 + $0x8] sm:$0xf]
    %v29 = vld [vmem:[%s0 + $0xc] sm:$0xf]
    %v30 = vld [vmem:[#allocation2] sm:$0xff]
    %v31 = vld [vmem:[#allocation2 + $0x8] sm:$0xff]
    %v32 = vld [vmem:[#allocation2 + $0x10] sm:$0xff]
    %v33 = vld [vmem:[#allocation2 + $0x18] sm:$0xff]
    %v34 = vld [vmem:[#allocation2 + $0x20] sm:$0xff]
    %v35 = vld [vmem:[#allocation2 + $0x28] sm:$0xff]
    %v36 = vld [vmem:[#allocation2 + $0x30] sm:$0xff]
    %v37 = vld [vmem:[#allocation2 + $0x38] sm:$0xff]
    %v38 = vld [vmem:[#allocation2 + $0x40] sm:$0xff]
    %v39 = vld [vmem:[#allocation2 + $0x48] sm:$0xff]
    %v40 = vld [vmem:[#allocation2 + $0x50] sm:$0xff]
    %v41 = vld [vmem:[#allocation2 + $0x58] sm:$0xff]
    %v42 = vld [vmem:[#allocation2 + $0x60] sm:$0xff]
    %v43 = vld [vmem:[#allocation2 + $0x68] sm:$0xff]
    %v44 = vld [vmem:[#allocation2 + $0x70] sm:$0xff]
    %v45 = vld [vmem:[#allocation2 + $0x78] sm:$0xff]
    %v50 = vunpack.c.l.b16 %v26
    %v51 = vunpack.c.l.b16 %v27
    %v52 = vunpack.c.l.b16 %v28
    %v53 = vunpack.c.l.b16 %v29
    %v54 = vpack.c.b16 %v51, %v50
    %v55 = vpack.c.b16 %v53, %v52
    %v72 = vunpack.c.l.b16 %v30
    %v73 = vunpack.c.h.b16 %v30
    %v74 = vunpack.c.l.b16 %v31
    %v75 = vunpack.c.h.b16 %v31
    %v76 = vunpack.c.l.b16 %v32
    %v77 = vunpack.c.h.b16 %v32
    %v78 = vunpack.c.l.b16 %v33
    %v79 = vunpack.c.h.b16 %v33
    %v80 = vunpack.c.l.b16 %v34
    %v81 = vunpack.c.h.b16 %v34
    %v82 = vunpack.c.l.b16 %v35
    %v83 = vunpack.c.h.b16 %v35
    %v84 = vunpack.c.l.b16 %v36
    %v85 = vunpack.c.h.b16 %v36
    %v86 = vunpack.c.l.b16 %v37
    %v87 = vunpack.c.h.b16 %v37
    %v88 = vunpack.c.l.b16 %v38
    %v89 = vunpack.c.h.b16 %v38
    %v90 = vunpack.c.l.b16 %v39
    %v91 = vunpack.c.h.b16 %v39
    %v92 = vunpack.c.l.b16 %v40
    %v93 = vunpack.c.h.b16 %v40
    %v94 = vunpack.c.l.b16 %v41
    %v95 = vunpack.c.h.b16 %v41
    %v96 = vunpack.c.l.b16 %v42
    %v97 = vunpack.c.h.b16 %v42
    %v98 = vunpack.c.l.b16 %v43
    %v99 = vunpack.c.h.b16 %v43
    %v100 = vunpack.c.l.b16 %v44
    %v101 = vunpack.c.h.b16 %v44
    %v102 = vunpack.c.l.b16 %v45
    %v103 = vunpack.c.h.b16 %v45
    %v104 = vpack.c.b16 %v76, %v72
    %v105 = vpack.c.b16 %v77, %v73
    %v106 = vpack.c.b16 %v78, %v74
    %v107 = vpack.c.b16 %v79, %v75
    %v108 = vpack.c.b16 %v84, %v80
    %v109 = vpack.c.b16 %v85, %v81
    %v110 = vpack.c.b16 %v86, %v82
    %v111 = vpack.c.b16 %v87, %v83
    %v112 = vpack.c.b16 %v92, %v88
    %v113 = vpack.c.b16 %v93, %v89
    %v114 = vpack.c.b16 %v94, %v90
    %v115 = vpack.c.b16 %v95, %v91
    %v116 = vpack.c.b16 %v100, %v96
    %v117 = vpack.c.b16 %v101, %v97
    %v118 = vpack.c.b16 %v102, %v98
    %v119 = vpack.c.b16 %v103, %v99
    %vm136 = vcmask 523264
    %v138 = vsel %vm136, %v54, 0
    %v141 = vsel %vm136, %v55, 0
    %143 = vmatprep.subr.bf16.mxu0 0
    %144 = vmatpush1.bf16.msra.mxu0 0
    %145 = vmatprep.subr.bf16.mxu0 0
    %146 = vmatpush1.bf16.msra.mxu0 0
    %147 = vmatprep.subr.bf16.mxu0 0
    %148 = vmatpush1.bf16.msra.mxu0 0
    %149 = vmatprep.subr.bf16.mxu0 0
    %150 = vmatpush1.bf16.msra.mxu0 0
    %151 = vmatprep.subr.bf16.mxu0 %v117
    %152 = vmatpush1.bf16.msra.mxu0 %v116
    %153 = vmatprep.subr.bf16.mxu0 %v113
    %154 = vmatpush1.bf16.msra.mxu0 %v112
    %155 = vmatprep.subr.bf16.mxu0 %v109
    %156 = vmatpush1.bf16.msra.mxu0 %v108
    %157 = vmatprep.subr.bf16.mxu0 %v105
    %158 = vmatpush1.bf16.msra.mxu0 %v104
    %159 = vmatprep.subr.bf16.mxu0 0
    %160 = vmatpush2.bf16.msra.mxu0 0
    %161 = vmatprep.subr.bf16.mxu0 0
    %162 = vmatpush2.bf16.msra.mxu0 0
    %163 = vmatprep.subr.bf16.mxu0 0
    %164 = vmatpush2.bf16.msra.mxu0 0
    %165 = vmatprep.subr.bf16.mxu0 0
    %166 = vmatpush2.bf16.msra.mxu0 0
    %167 = vmatprep.subr.bf16.mxu0 0
    %168 = vmatpush2.bf16.msra.mxu0 0
    %169 = vmatprep.subr.bf16.mxu0 0
    %170 = vmatpush2.bf16.msra.mxu0 0
    %171 = vmatprep.subr.bf16.mxu0 0
    %172 = vmatpush2.bf16.msra.mxu0 0
    %173 = vmatprep.subr.bf16.mxu0 0
    %174 = vmatpush2.bf16.msra.mxu0 0
    %175 = vmatprep.mubr.bf16.mxu0 0
    %176 = vmatmul.mubr.bf16.gmra.mxu0 %v138
    %v177 = vpop.f32.mrf.mxu0
    %v178 = vadd.f32 0.0, %v177
    %v179 = vpop.f32.mrf.mxu0
    %v180 = vadd.f32 0.0, %v179
    %v181 = vpop.f32.mrf.mxu0
    %v182 = vadd.f32 0.0, %v181
    %v183 = vpop.f32.mrf.mxu0
    %v184 = vadd.f32 0.0, %v183
    %185 = vmatprep.mubr.bf16.mxu0 0
    %186 = vmatmul.mubr.bf16.gmra.mxu0 %v141
    %v187 = vpop.f32.mrf.mxu0
    %v188 = vadd.f32 0.0, %v187
    %v189 = vpop.f32.mrf.mxu0
    %v190 = vadd.f32 0.0, %v189
    %v191 = vpop.f32.mrf.mxu0
    %v192 = vadd.f32 0.0, %v191
    %v193 = vpop.f32.mrf.mxu0
    %v194 = vadd.f32 0.0, %v193
    %195 = vdwg.mxu0
    %196 = vmatprep.subr.bf16.mxu0 0
    %197 = vmatpush1.bf16.msra.mxu0 0
    %198 = vmatprep.subr.bf16.mxu0 0
    %199 = vmatpush1.bf16.msra.mxu0 0
    %200 = vmatprep.subr.bf16.mxu0 0
    %201 = vmatpush1.bf16.msra.mxu0 0
    %202 = vmatprep.subr.bf16.mxu0 0
    %203 = vmatpush1.bf16.msra.mxu0 0
    %204 = vmatprep.subr.bf16.mxu0 %v119
    %205 = vmatpush1.bf16.msra.mxu0 %v118
    %206 = vmatprep.subr.bf16.mxu0 %v115
    %207 = vmatpush1.bf16.msra.mxu0 %v114
    %208 = vmatprep.subr.bf16.mxu0 %v111
    %209 = vmatpush1.bf16.msra.mxu0 %v110
    %210 = vmatprep.subr.bf16.mxu0 %v107
    %211 = vmatpush1.bf16.msra.mxu0 %v106
    %212 = vmatprep.subr.bf16.mxu0 0
    %213 = vmatpush2.bf16.msra.mxu0 0
    %214 = vmatprep.subr.bf16.mxu0 0
    %215 = vmatpush2.bf16.msra.mxu0 0
    %216 = vmatprep.subr.bf16.mxu0 0
    %217 = vmatpush2.bf16.msra.mxu0 0
    %218 = vmatprep.subr.bf16.mxu0 0
    %219 = vmatpush2.bf16.msra.mxu0 0
    %220 = vmatprep.subr.bf16.mxu0 0
    %221 = vmatpush2.bf16.msra.mxu0 0
    %222 = vmatprep.subr.bf16.mxu0 0
    %223 = vmatpush2.bf16.msra.mxu0 0
    %224 = vmatprep.subr.bf16.mxu0 0
    %225 = vmatpush2.bf16.msra.mxu0 0
    %226 = vmatprep.subr.bf16.mxu0 0
    %227 = vmatpush2.bf16.msra.mxu0 0
    %228 = vmatprep.mubr.bf16.mxu0 0
    %229 = vmatmul.mubr.bf16.gmra.mxu0 %v138
    %v230 = vpop.f32.mrf.mxu0
    %v231 = vadd.f32 0.0, %v230
    %v232 = vpop.f32.mrf.mxu0
    %v233 = vadd.f32 0.0, %v232
    %v234 = vpop.f32.mrf.mxu0
    %v235 = vadd.f32 0.0, %v234
    %v236 = vpop.f32.mrf.mxu0
    %v237 = vadd.f32 0.0, %v236
    %238 = vmatprep.mubr.bf16.mxu0 0
    %239 = vmatmul.mubr.bf16.gmra.mxu0 %v141
    %v240 = vpop.f32.mrf.mxu0
    %v241 = vadd.f32 0.0, %v240
    %v242 = vpop.f32.mrf.mxu0
    %v243 = vadd.f32 0.0, %v242
    %v244 = vpop.f32.mrf.mxu0
    %v245 = vadd.f32 0.0, %v244
    %v246 = vpop.f32.mrf.mxu0
    %v247 = vadd.f32 0.0, %v246
    %248 = vdwg.mxu0
    %249 = vst [vmem:[%s2] sm:$0xff] %v178
    %250 = vst [vmem:[%s2 + $0x8] sm:$0xff] %v180
    %251 = vst [vmem:[%s2 + $0x10] sm:$0xff] %v231
    %252 = vst [vmem:[%s2 + $0x18] sm:$0xff] %v233
    %253 = vst [vmem:[%s2 + $0x20] sm:$0xff] %v182
    %254 = vst [vmem:[%s2 + $0x28] sm:$0xff] %v184
    %255 = vst [vmem:[%s2 + $0x30] sm:$0xff] %v235
    %256 = vst [vmem:[%s2 + $0x38] sm:$0xff] %v237
    %257 = vst [vmem:[%s2 + $0x40] sm:$0xff] %v188
    %258 = vst [vmem:[%s2 + $0x48] sm:$0xff] %v190
    %259 = vst [vmem:[%s2 + $0x50] sm:$0xff] %v241
    %260 = vst [vmem:[%s2 + $0x58] sm:$0xff] %v243
    %261 = vst [vmem:[%s2 + $0x60] sm:$0xff] %v192
    %262 = vst [vmem:[%s2 + $0x68] sm:$0xff] %v194
    %263 = vst [vmem:[%s2 + $0x70] sm:$0xff] %v245
    %264 = vst [vmem:[%s2 + $0x78] sm:$0xff] %v247
    // Predicated region
    $region14: #{generator_forward.17} parent=1 // pred_check
      _
    $region15: #{generator_forward.17} parent=1 // pred_check_branch
      %266 = sbr.rel (0) target = $region17
    $region16: #{generator_forward.17} parent=1 // pred_region
      _
    $region17: #{generator_forward.17} parent=1 // pred_fallthru
      _
    // Predicated region
    $region18: #{generator_forward.17} parent=1 // pred_check
      _
    $region19: #{generator_forward.17} parent=1 // pred_check_branch
      %268 = sbr.rel (0) target = $region21
    $region20: #{generator_forward.17} parent=1 // pred_region
      _
    $region21: #{generator_forward.17} parent=1 // pred_fallthru
      _
    %269 = vsyncpa [#allocation3], 1

// kernel: generator_forward.18
$region0: #{generator_forward.18}
  #allocation0 [shape = 'u32[]', space=smem, size = 0x4, offset = 0x4, fixed_abs, tag = 'smem constant byte address 0x4 - core index']
  #allocation1 [shape = 'u32[144,128]{1,0:T(1,128)}', space=vmem, size = 0x12000, scoped, tag = 'internal scratch']
  %s0 = inlined_call_operand.vmem [shape: f32[32,128], index: 0, kind: input, shape index: {}]
  %s1 = inlined_call_operand.vmem [shape: f32[1,128], index: 1, kind: output, shape index: {0}]
  %s2 = inlined_call_operand.vmem [shape: f32[1,128], index: 2, kind: output, shape index: {1}]
  %3 = xla_tuple %s1, %s2
  %s4 = sld [smem:[#allocation0]]
  $region26: #{generator_forward.18} parent=0
    _
  %s6 = ssub.s32 1, %s4
  %s7 = scalar_select 0, %s6, %s4
  // Predicated region
  $region2: #{generator_forward.18} parent=0 // pred_check
    _
  $region3: #{generator_forward.18} parent=0 // pred_check_branch
    %9 = sbr.rel (0) target = $region5
  $region4: #{generator_forward.18} parent=0 // pred_region
    _
  $region5: #{generator_forward.18} parent=0 // pred_fallthru
    _
  %p10 = scmp.eq.s32.totalorder 0, 0
  // Predicated region
  $region6: #{generator_forward.18} parent=0 // pred_check
    %p11 = pneg %p10
  $region7: #{generator_forward.18} parent=0 // pred_check_branch
    %13 = sbr.rel (%p11) target = $region9
  $region8: #{generator_forward.18} parent=0 // pred_region
    %14 = vst [vmem:[%s1] sm:$0x1] 0.0
    %15 = vst [vmem:[%s2] sm:$0x1] 0.0
  $region9: #{generator_forward.18} parent=0 // pred_fallthru
    _
  %v16 = vld [vmem:[%s0] sm:$0xff]
  %v17 = vld [vmem:[%s0 + $0x8] sm:$0xff]
  %v18 = vld [vmem:[%s0 + $0x10] sm:$0xff]
  %v19 = vld [vmem:[%s0 + $0x18] sm:$0xff]
  %v20 = vld [vmem:[%s1] sm:$0x1]
  %v21 = vadd.f32 %v16, %v17
  %v22 = vadd.f32 %v21, %v18
  %v23 = vadd.f32 %v22, %v19
  %v24 = vrot.slane %v23, 4
  %v25 = vadd.f32 %v23, %v24
  %v26 = vrot.slane %v25, 2
  %v27 = vadd.f32 %v25, %v26
  %v28 = vrot.slane %v27, 1
  %v29 = vadd.f32 %v27, %v28
  %v30 = vadd.f32 %v20, %v29
  %31 = vst [vmem:[%s1] sm:$0x1] %v30
  %v32 = vld [vmem:[%s2] sm:$0x1]
  %v33 = vmul.f32 %v16, %v16
  %v34 = vmul.f32 %v17, %v17
  %v35 = vmul.f32 %v18, %v18
  %v36 = vmul.f32 %v19, %v19
  %v37 = vadd.f32 %v33, %v34
  %v38 = vadd.f32 %v37, %v35
  %v39 = vadd.f32 %v38, %v36
  %v40 = vrot.slane %v39, 4
  %v41 = vadd.f32 %v39, %v40
  %v42 = vrot.slane %v41, 2
  %v43 = vadd.f32 %v41, %v42
  %v44 = vrot.slane %v43, 1
  %v45 = vadd.f32 %v43, %v44
  %v46 = vadd.f32 %v32, %v45
  %47 = vst [vmem:[%s2] sm:$0x1] %v46
  // Predicated region
  $region10: #{generator_forward.18} parent=0 // pred_check
    _
  $region11: #{generator_forward.18} parent=0 // pred_check_branch
    %49 = sbr.rel (0) target = $region13
  $region12: #{generator_forward.18} parent=0 // pred_region
    _
  $region13: #{generator_forward.18} parent=0 // pred_fallthru
    _
  // Predicated region
  $region14: #{generator_forward.18} parent=0 // pred_check
    _
  $region15: #{generator_forward.18} parent=0 // pred_check_branch
    %51 = sbr.rel (0) target = $region17
  $region16: #{generator_forward.18} parent=0 // pred_region
    _
  $region17: #{generator_forward.18} parent=0 // pred_fallthru
    _
  // Predicated region
  $region18: #{generator_forward.18} parent=0 // pred_check
    _
  $region19: #{generator_forward.18} parent=0 // pred_check_branch
    %53 = sbr.rel (0) target = $region21
  $region20: #{generator_forward.18} parent=0 // pred_region
    _
  $region21: #{generator_forward.18} parent=0 // pred_fallthru
    _
  // Predicated region
  $region22: #{generator_forward.18} parent=0 // pred_check
    _
  $region23: #{generator_forward.18} parent=0 // pred_check_branch
    %55 = sbr.rel (0) target = $region25
  $region24: #{generator_forward.18} parent=0 // pred_region
    _
  $region25: #{generator_forward.18} parent=0 // pred_fallthru
    _

// kernel: generator_forward.19
$region0: #{generator_forward.19}
  #allocation0 [shape = 'u32[]', space=smem, size = 0x4, offset = 0x4, fixed_abs, tag = 'smem constant byte address 0x4 - core index']
  #allocation1 [shape = 'u32[144,128]{1,0:T(1,128)}', space=vmem, size = 0x12000, scoped, tag = 'internal scratch']
  %s0 = inlined_call_operand.vmem [shape: f32[32,128], index: 0, kind: input, shape index: {}]
  %s1 = inlined_call_operand.vmem [shape: f32[1,128], index: 1, kind: input, shape index: {}]
  %s2 = inlined_call_operand.vmem [shape: f32[1,128], index: 2, kind: input, shape index: {}]
  %s3 = inlined_call_operand.vmem [shape: bf16[32,128], index: 3, kind: output, shape index: {}]
  %s4 = sld [smem:[#allocation0]]
  $region22: #{generator_forward.19} parent=0
    _
  %s6 = ssub.s32 1, %s4
  %s7 = scalar_select 0, %s6, %s4
  // Predicated region
  $region2: #{generator_forward.19} parent=0 // pred_check
    _
  $region3: #{generator_forward.19} parent=0 // pred_check_branch
    %9 = sbr.rel (0) target = $region5
  $region4: #{generator_forward.19} parent=0 // pred_region
    _
  $region5: #{generator_forward.19} parent=0 // pred_fallthru
    _
  // Predicated region
  $region6: #{generator_forward.19} parent=0 // pred_check
    _
  $region7: #{generator_forward.19} parent=0 // pred_check_branch
    %11 = sbr.rel (0) target = $region9
  $region8: #{generator_forward.19} parent=0 // pred_region
    _
  $region9: #{generator_forward.19} parent=0 // pred_fallthru
    _
  // Predicated region
  $region10: #{generator_forward.19} parent=0 // pred_check
    _
  $region11: #{generator_forward.19} parent=0 // pred_check_branch
    %13 = sbr.rel (0) target = $region13
  $region12: #{generator_forward.19} parent=0 // pred_region
    _
  $region13: #{generator_forward.19} parent=0 // pred_fallthru
    _
  %v14 = vld [vmem:[%s0] sm:$0xff]
  %v15 = vld [vmem:[%s0 + $0x8] sm:$0xff]
  %v16 = vld [vmem:[%s0 + $0x10] sm:$0xff]
  %v17 = vld [vmem:[%s0 + $0x18] sm:$0xff]
  %v18 = vld [vmem:[%s1] sm:$0x1]
  %v20 = vlaneseq
  %v21 = vshrl.u32 %v20, 7
  %v22 = vsub.s32 0, %v21
  %v23 = vrot.slane %v18, %v22
  %v25 = vmul.f32 %v14, %v23
  %v26 = vmul.f32 %v15, %v23
  %v27 = vmul.f32 %v16, %v23
  %v28 = vmul.f32 %v17, %v23
  %v29 = vld [vmem:[%s2] sm:$0x1]
  %v31 = vlaneseq
  %v32 = vshrl.u32 %v31, 7
  %v33 = vsub.s32 0, %v32
  %v34 = vrot.slane %v29, %v33
  %v36 = vadd.f32 %v25, %v34
  %v37 = vadd.f32 %v26, %v34
  %v38 = vadd.f32 %v27, %v34
  %v39 = vadd.f32 %v28, %v34
  %v40 = vmax.f32 %v36, 0.0
  %v41 = vmax.f32 %v37, 0.0
  %v42 = vmax.f32 %v38, 0.0
  %v43 = vmax.f32 %v39, 0.0
  %v44 = vpack.c.bf16 %v41, %v40
  %v45 = vpack.c.bf16 %v43, %v42
  %v48 = vunpack.c.l.b16 %v44
  %v49 = vunpack.c.h.b16 %v44
  %v50 = vunpack.c.l.b16 %v45
  %v51 = vunpack.c.h.b16 %v45
  %v52 = vpack.c.b16 %v48, %v48
  %v53 = vpack.c.b16 %v49, %v49
  %v54 = vpack.c.b16 %v50, %v50
  %v55 = vpack.c.b16 %v51, %v51
  %60 = vst [vmem:[%s3] sm:$0xf] %v52
  %61 = vst [vmem:[%s3 + $0x4] sm:$0xf] %v53
  %62 = vst [vmem:[%s3 + $0x8] sm:$0xf] %v54
  %63 = vst [vmem:[%s3 + $0xc] sm:$0xf] %v55
  // Predicated region
  $region14: #{generator_forward.19} parent=0 // pred_check
    _
  $region15: #{generator_forward.19} parent=0 // pred_check_branch
    %65 = sbr.rel (0) target = $region17
  $region16: #{generator_forward.19} parent=0 // pred_region
    _
  $region17: #{generator_forward.19} parent=0 // pred_fallthru
    _
  // Predicated region
  $region18: #{generator_forward.19} parent=0 // pred_check
    _
  $region19: #{generator_forward.19} parent=0 // pred_check_branch
    %67 = sbr.rel (0) target = $region21
  $region20: #{generator_forward.19} parent=0 // pred_region
    _
  $region21: #{generator_forward.19} parent=0 // pred_fallthru
    _

// kernel: generator_forward.20
$region0: #{generator_forward.20}
  #allocation0 [shape = 'u32[]', space=smem, size = 0x4, offset = 0x4, fixed_abs, tag = 'smem constant byte address 0x4 - core index']
  #allocation1 [shape = 'u32[144,128]{1,0:T(1,128)}', space=vmem, size = 0x12000, scoped, tag = 'internal scratch']
  %s0 = inlined_call_operand.vmem [shape: bf16[128,32], index: 0, kind: input, shape index: {}]
  %s1 = inlined_call_operand.vmem [shape: bf16[32,256], index: 1, kind: input, shape index: {}]
  %s2 = inlined_call_operand.vmem [shape: f32[128,256], index: 2, kind: output, shape index: {}]
  %s3 = sld [smem:[#allocation0]]
  $region18: #{generator_forward.20} parent=0
    _
  %s5 = ssub.s32 1, %s3
  %s6 = scalar_select 0, %s5, %s3
  // Predicated region
  $region2: #{generator_forward.20} parent=0 // pred_check
    _
  $region3: #{generator_forward.20} parent=0 // pred_check_branch
    %8 = sbr.rel (0) target = $region5
  $region4: #{generator_forward.20} parent=0 // pred_region
    _
  $region5: #{generator_forward.20} parent=0 // pred_fallthru
    _
  // Predicated region
  $region6: #{generator_forward.20} parent=0 // pred_check
    _
  $region7: #{generator_forward.20} parent=0 // pred_check_branch
    %10 = sbr.rel (0) target = $region9
  $region8: #{generator_forward.20} parent=0 // pred_region
    _
  $region9: #{generator_forward.20} parent=0 // pred_fallthru
    _
  %v12 = vld [vmem:[%s0] sm:$0xf]
  %v13 = vld [vmem:[%s0 + $0x4] sm:$0xf]
  %v14 = vld [vmem:[%s0 + $0x8] sm:$0xf]
  %v15 = vld [vmem:[%s0 + $0xc] sm:$0xf]
  %v16 = vld [vmem:[%s0 + $0x10] sm:$0xf]
  %v17 = vld [vmem:[%s0 + $0x14] sm:$0xf]
  %v18 = vld [vmem:[%s0 + $0x18] sm:$0xf]
  %v19 = vld [vmem:[%s0 + $0x1c] sm:$0xf]
  %v20 = vld [vmem:[%s0 + $0x20] sm:$0xf]
  %v21 = vld [vmem:[%s0 + $0x24] sm:$0xf]
  %v22 = vld [vmem:[%s0 + $0x28] sm:$0xf]
  %v23 = vld [vmem:[%s0 + $0x2c] sm:$0xf]
  %v24 = vld [vmem:[%s0 + $0x30] sm:$0xf]
  %v25 = vld [vmem:[%s0 + $0x34] sm:$0xf]
  %v26 = vld [vmem:[%s0 + $0x38] sm:$0xf]
  %v27 = vld [vmem:[%s0 + $0x3c] sm:$0xf]
  %v28 = vld [vmem:[%s1] sm:$0xff]
  %v29 = vld [vmem:[%s1 + $0x8] sm:$0xff]
  %v30 = vld [vmem:[%s1 + $0x10] sm:$0xff]
  %v31 = vld [vmem:[%s1 + $0x18] sm:$0xff]
  %v48 = vunpack.c.l.b16 %v12
  %v49 = vunpack.c.l.b16 %v13
  %v50 = vunpack.c.l.b16 %v14
  %v51 = vunpack.c.l.b16 %v15
  %v52 = vunpack.c.l.b16 %v16
  %v53 = vunpack.c.l.b16 %v17
  %v54 = vunpack.c.l.b16 %v18
  %v55 = vunpack.c.l.b16 %v19
  %v56 = vunpack.c.l.b16 %v20
  %v57 = vunpack.c.l.b16 %v21
  %v58 = vunpack.c.l.b16 %v22
  %v59 = vunpack.c.l.b16 %v23
  %v60 = vunpack.c.l.b16 %v24
  %v61 = vunpack.c.l.b16 %v25
  %v62 = vunpack.c.l.b16 %v26
  %v63 = vunpack.c.l.b16 %v27
  %v64 = vpack.c.b16 %v49, %v48
  %v65 = vpack.c.b16 %v51, %v50
  %v66 = vpack.c.b16 %v53, %v52
  %v67 = vpack.c.b16 %v55, %v54
  %v68 = vpack.c.b16 %v57, %v56
  %v69 = vpack.c.b16 %v59, %v58
  %v70 = vpack.c.b16 %v61, %v60
  %v71 = vpack.c.b16 %v63, %v62
  %v76 = vunpack.c.l.b16 %v28
  %v77 = vunpack.c.h.b16 %v28
  %v78 = vunpack.c.l.b16 %v29
  %v79 = vunpack.c.h.b16 %v29
  %v80 = vunpack.c.l.b16 %v30
  %v81 = vunpack.c.h.b16 %v30
  %v82 = vunpack.c.l.b16 %v31
  %v83 = vunpack.c.h.b16 %v31
  %v84 = vpack.c.b16 %v78, %v76
  %v85 = vpack.c.b16 %v79, %v77
  %v86 = vpack.c.b16 %v82, %v80
  %v87 = vpack.c.b16 %v83, %v81
  %vm92 = vcmask 261120
  %v94 = vsel %vm92, %v64, 0
  %v97 = vsel %vm92, %v65, 0
  %v100 = vsel %vm92, %v66, 0
  %v103 = vsel %vm92, %v67, 0
  %v106 = vsel %vm92, %v68, 0
  %v109 = vsel %vm92, %v69, 0
  %v112 = vsel %vm92, %v70, 0
  %v115 = vsel %vm92, %v71, 0
  %117 = vmatprep.subr.bf16.mxu0 0
  %118 = vmatpush1.bf16.msra.mxu0 0
  %119 = vmatprep.subr.bf16.mxu0 0
  %120 = vmatpush1.bf16.msra.mxu0 0
  %121 = vmatprep.subr.bf16.mxu0 0
  %122 = vmatpush1.bf16.msra.mxu0 0
  %123 = vmatprep.subr.bf16.mxu0 0
  %124 = vmatpush1.bf16.msra.mxu0 0
  %125 = vmatprep.subr.bf16.mxu0 0
  %126 = vmatpush1.bf16.msra.mxu0 0
  %127 = vmatprep.subr.bf16.mxu0 0
  %128 = vmatpush1.bf16.msra.mxu0 0
  %129 = vmatprep.subr.bf16.mxu0 %v87
  %130 = vmatpush1.bf16.msra.mxu0 %v86
  %131 = vmatprep.subr.bf16.mxu0 %v85
  %132 = vmatpush1.bf16.msra.mxu0 %v84
  %133 = vmatprep.subr.bf16.mxu0 0
  %134 = vmatpush2.bf16.msra.mxu0 0
  %135 = vmatprep.subr.bf16.mxu0 0
  %136 = vmatpush2.bf16.msra.mxu0 0
  %137 = vmatprep.subr.bf16.mxu0 0
  %138 = vmatpush2.bf16.msra.mxu0 0
  %139 = vmatprep.subr.bf16.mxu0 0
  %140 = vmatpush2.bf16.msra.mxu0 0
  %141 = vmatprep.subr.bf16.mxu0 0
  %142 = vmatpush2.bf16.msra.mxu0 0
  %143 = vmatprep.subr.bf16.mxu0 0
  %144 = vmatpush2.bf16.msra.mxu0 0
  %145 = vmatprep.subr.bf16.mxu0 0
  %146 = vmatpush2.bf16.msra.mxu0 0
  %147 = vmatprep.subr.bf16.mxu0 0
  %148 = vmatpush2.bf16.msra.mxu0 0
  %149 = vmatprep.mubr.bf16.mxu0 0
  %150 = vmatmul.mubr.bf16.gmra.mxu0 %v94
  %v151 = vpop.f32.mrf.mxu0
  %v152 = vadd.f32 0.0, %v151
  %v153 = vpop.f32.mrf.mxu0
  %v154 = vadd.f32 0.0, %v153
  %v155 = vpop.f32.mrf.mxu0
  %v156 = vadd.f32 0.0, %v155
  %v157 = vpop.f32.mrf.mxu0
  %v158 = vadd.f32 0.0, %v157
  %159 = vmatprep.mubr.bf16.mxu0 0
  %160 = vmatmul.mubr.bf16.gmra.mxu0 %v97
  %v161 = vpop.f32.mrf.mxu0
  %v162 = vadd.f32 0.0, %v161
  %v163 = vpop.f32.mrf.mxu0
  %v164 = vadd.f32 0.0, %v163
  %v165 = vpop.f32.mrf.mxu0
  %v166 = vadd.f32 0.0, %v165
  %v167 = vpop.f32.mrf.mxu0
  %v168 = vadd.f32 0.0, %v167
  %169 = vmatprep.mubr.bf16.mxu0 0
  %170 = vmatmul.mubr.bf16.gmra.mxu0 %v100
  %v171 = vpop.f32.mrf.mxu0
  %v172 = vadd.f32 0.0, %v171
  %v173 = vpop.f32.mrf.mxu0
  %v174 = vadd.f32 0.0, %v173
  %v175 = vpop.f32.mrf.mxu0
  %v176 = vadd.f32 0.0, %v175
  %v177 = vpop.f32.mrf.mxu0
  %v178 = vadd.f32 0.0, %v177
  %179 = vmatprep.mubr.bf16.mxu0 0
  %180 = vmatmul.mubr.bf16.gmra.mxu0 %v103
  %v181 = vpop.f32.mrf.mxu0
  %v182 = vadd.f32 0.0, %v181
  %v183 = vpop.f32.mrf.mxu0
  %v184 = vadd.f32 0.0, %v183
  %v185 = vpop.f32.mrf.mxu0
  %v186 = vadd.f32 0.0, %v185
  %v187 = vpop.f32.mrf.mxu0
  %v188 = vadd.f32 0.0, %v187
  %189 = vmatprep.mubr.bf16.mxu0 0
  %190 = vmatmul.mubr.bf16.gmra.mxu0 %v106
  %v191 = vpop.f32.mrf.mxu0
  %v192 = vadd.f32 0.0, %v191
  %v193 = vpop.f32.mrf.mxu0
  %v194 = vadd.f32 0.0, %v193
  %v195 = vpop.f32.mrf.mxu0
  %v196 = vadd.f32 0.0, %v195
  %v197 = vpop.f32.mrf.mxu0
  %v198 = vadd.f32 0.0, %v197
  %199 = vmatprep.mubr.bf16.mxu0 0
  %200 = vmatmul.mubr.bf16.gmra.mxu0 %v109
  %v201 = vpop.f32.mrf.mxu0
  %v202 = vadd.f32 0.0, %v201
  %v203 = vpop.f32.mrf.mxu0
  %v204 = vadd.f32 0.0, %v203
  %v205 = vpop.f32.mrf.mxu0
  %v206 = vadd.f32 0.0, %v205
  %v207 = vpop.f32.mrf.mxu0
  %v208 = vadd.f32 0.0, %v207
  %209 = vmatprep.mubr.bf16.mxu0 0
  %210 = vmatmul.mubr.bf16.gmra.mxu0 %v112
  %v211 = vpop.f32.mrf.mxu0
  %v212 = vadd.f32 0.0, %v211
  %v213 = vpop.f32.mrf.mxu0
  %v214 = vadd.f32 0.0, %v213
  %v215 = vpop.f32.mrf.mxu0
  %v216 = vadd.f32 0.0, %v215
  %v217 = vpop.f32.mrf.mxu0
  %v218 = vadd.f32 0.0, %v217
  %219 = vmatprep.mubr.bf16.mxu0 0
  %220 = vmatmul.mubr.bf16.gmra.mxu0 %v115
  %v221 = vpop.f32.mrf.mxu0
  %v222 = vadd.f32 0.0, %v221
  %v223 = vpop.f32.mrf.mxu0
  %v224 = vadd.f32 0.0, %v223
  %v225 = vpop.f32.mrf.mxu0
  %v226 = vadd.f32 0.0, %v225
  %v227 = vpop.f32.mrf.mxu0
  %v228 = vadd.f32 0.0, %v227
  %229 = vdwg.mxu0
  %230 = vst [vmem:[%s2] sm:$0xff] %v152
  %231 = vst [vmem:[%s2 + $0x8] sm:$0xff] %v154
  %232 = vst [vmem:[%s2 + $0x10] sm:$0xff] %v156
  %233 = vst [vmem:[%s2 + $0x18] sm:$0xff] %v158
  %234 = vst [vmem:[%s2 + $0x20] sm:$0xff] %v162
  %235 = vst [vmem:[%s2 + $0x28] sm:$0xff] %v164
  %236 = vst [vmem:[%s2 + $0x30] sm:$0xff] %v166
  %237 = vst [vmem:[%s2 + $0x38] sm:$0xff] %v168
  %238 = vst [vmem:[%s2 + $0x40] sm:$0xff] %v172
  %239 = vst [vmem:[%s2 + $0x48] sm:$0xff] %v174
  %240 = vst [vmem:[%s2 + $0x50] sm:$0xff] %v176
  %241 = vst [vmem:[%s2 + $0x58] sm:$0xff] %v178
  %242 = vst [vmem:[%s2 + $0x60] sm:$0xff] %v182
  %243 = vst [vmem:[%s2 + $0x68] sm:$0xff] %v184
  %244 = vst [vmem:[%s2 + $0x70] sm:$0xff] %v186
  %245 = vst [vmem:[%s2 + $0x78] sm:$0xff] %v188
  %246 = vst [vmem:[%s2 + $0x80] sm:$0xff] %v192
  %247 = vst [vmem:[%s2 + $0x88] sm:$0xff] %v194
  %248 = vst [vmem:[%s2 + $0x90] sm:$0xff] %v196
  %249 = vst [vmem:[%s2 + $0x98] sm:$0xff] %v198
  %250 = vst [vmem:[%s2 + $0xa0] sm:$0xff] %v202
  %251 = vst [vmem:[%s2 + $0xa8] sm:$0xff] %v204
  %252 = vst [vmem:[%s2 + $0xb0] sm:$0xff] %v206
  %253 = vst [vmem:[%s2 + $0xb8] sm:$0xff] %v208
  %254 = vst [vmem:[%s2 + $0xc0] sm:$0xff] %v212
  %255 = vst [vmem:[%s2 + $0xc8] sm:$0xff] %v214
  %256 = vst [vmem:[%s2 + $0xd0] sm:$0xff] %v216
  %257 = vst [vmem:[%s2 + $0xd8] sm:$0xff] %v218
  %258 = vst [vmem:[%s2 + $0xe0] sm:$0xff] %v222
  %259 = vst [vmem:[%s2 + $0xe8] sm:$0xff] %v224
  %260 = vst [vmem:[%s2 + $0xf0] sm:$0xff] %v226
  %261 = vst [vmem:[%s2 + $0xf8] sm:$0xff] %v228
  // Predicated region
  $region10: #{generator_forward.20} parent=0 // pred_check
    _
  $region11: #{generator_forward.20} parent=0 // pred_check_branch
    %263 = sbr.rel (0) target = $region13
  $region12: #{generator_forward.20} parent=0 // pred_region
    _
  $region13: #{generator_forward.20} parent=0 // pred_fallthru
    _
  // Predicated region
  $region14: #{generator_forward.20} parent=0 // pred_check
    _
  $region15: #{generator_forward.20} parent=0 // pred_check_branch
    %265 = sbr.rel (0) target = $region17
  $region16: #{generator_forward.20} parent=0 // pred_region
    _
  $region17: #{generator_forward.20} parent=0 // pred_fallthru
    _

// kernel: generator_forward.21
$region0: #{generator_forward.21}
  #allocation0 [shape = 'u32[]', space=smem, size = 0x4, offset = 0x4, fixed_abs, tag = 'smem constant byte address 0x4 - core index']
  #allocation1 [shape = 'u32[144,128]{1,0:T(1,128)}', space=vmem, size = 0x12000, scoped, tag = 'internal scratch']
  %s0 = inlined_call_operand.vmem [shape: f32[64,128], index: 0, kind: input, shape index: {}]
  %s1 = inlined_call_operand.vmem [shape: f32[1,128], index: 1, kind: output, shape index: {0}]
  %s2 = inlined_call_operand.vmem [shape: f32[1,128], index: 2, kind: output, shape index: {1}]
  %3 = xla_tuple %s1, %s2
  %s4 = sld [smem:[#allocation0]]
  $region26: #{generator_forward.21} parent=0
    _
  %s6 = ssub.s32 1, %s4
  %s7 = scalar_select 0, %s6, %s4
  // Predicated region
  $region2: #{generator_forward.21} parent=0 // pred_check
    _
  $region3: #{generator_forward.21} parent=0 // pred_check_branch
    %9 = sbr.rel (0) target = $region5
  $region4: #{generator_forward.21} parent=0 // pred_region
    _
  $region5: #{generator_forward.21} parent=0 // pred_fallthru
    _
  %p10 = scmp.eq.s32.totalorder 0, 0
  // Predicated region
  $region6: #{generator_forward.21} parent=0 // pred_check
    %p11 = pneg %p10
  $region7: #{generator_forward.21} parent=0 // pred_check_branch
    %13 = sbr.rel (%p11) target = $region9
  $region8: #{generator_forward.21} parent=0 // pred_region
    %14 = vst [vmem:[%s1] sm:$0x1] 0.0
    %15 = vst [vmem:[%s2] sm:$0x1] 0.0
  $region9: #{generator_forward.21} parent=0 // pred_fallthru
    _
  %v16 = vld [vmem:[%s0] sm:$0xff]
  %v17 = vld [vmem:[%s0 + $0x8] sm:$0xff]
  %v18 = vld [vmem:[%s0 + $0x10] sm:$0xff]
  %v19 = vld [vmem:[%s0 + $0x18] sm:$0xff]
  %v20 = vld [vmem:[%s0 + $0x20] sm:$0xff]
  %v21 = vld [vmem:[%s0 + $0x28] sm:$0xff]
  %v22 = vld [vmem:[%s0 + $0x30] sm:$0xff]
  %v23 = vld [vmem:[%s0 + $0x38] sm:$0xff]
  %v24 = vld [vmem:[%s1] sm:$0x1]
  %v25 = vadd.f32 %v16, %v17
  %v26 = vadd.f32 %v25, %v18
  %v27 = vadd.f32 %v26, %v19
  %v28 = vadd.f32 %v27, %v20
  %v29 = vadd.f32 %v28, %v21
  %v30 = vadd.f32 %v29, %v22
  %v31 = vadd.f32 %v30, %v23
  %v32 = vrot.slane %v31, 4
  %v33 = vadd.f32 %v31, %v32
  %v34 = vrot.slane %v33, 2
  %v35 = vadd.f32 %v33, %v34
  %v36 = vrot.slane %v35, 1
  %v37 = vadd.f32 %v35, %v36
  %v38 = vadd.f32 %v24, %v37
  %39 = vst [vmem:[%s1] sm:$0x1] %v38
  %v40 = vld [vmem:[%s2] sm:$0x1]
  %v41 = vmul.f32 %v16, %v16
  %v42 = vmul.f32 %v17, %v17
  %v43 = vmul.f32 %v18, %v18
  %v44 = vmul.f32 %v19, %v19
  %v45 = vmul.f32 %v20, %v20
  %v46 = vmul.f32 %v21, %v21
  %v47 = vmul.f32 %v22, %v22
  %v48 = vmul.f32 %v23, %v23
  %v49 = vadd.f32 %v41, %v42
  %v50 = vadd.f32 %v49, %v43
  %v51 = vadd.f32 %v50, %v44
  %v52 = vadd.f32 %v51, %v45
  %v53 = vadd.f32 %v52, %v46
  %v54 = vadd.f32 %v53, %v47
  %v55 = vadd.f32 %v54, %v48
  %v56 = vrot.slane %v55, 4
  %v57 = vadd.f32 %v55, %v56
  %v58 = vrot.slane %v57, 2
  %v59 = vadd.f32 %v57, %v58
  %v60 = vrot.slane %v59, 1
  %v61 = vadd.f32 %v59, %v60
  %v62 = vadd.f32 %v40, %v61
  %63 = vst [vmem:[%s2] sm:$0x1] %v62
  // Predicated region
  $region10: #{generator_forward.21} parent=0 // pred_check
    _
  $region11: #{generator_forward.21} parent=0 // pred_check_branch
    %65 = sbr.rel (0) target = $region13
  $region12: #{generator_forward.21} parent=0 // pred_region
    _
  $region13: #{generator_forward.21} parent=0 // pred_fallthru
    _
  // Predicated region
  $region14: #{generator_forward.21} parent=0 // pred_check
    _
  $region15: #{generator_forward.21} parent=0 // pred_check_branch
    %67 = sbr.rel (0) target = $region17
  $region16: #{generator_forward.21} parent=0 // pred_region
    _
  $region17: #{generator_forward.21} parent=0 // pred_fallthru
    _
  // Predicated region
  $region18: #{generator_forward.21} parent=0 // pred_check
    _
  $region19: #{generator_forward.21} parent=0 // pred_check_branch
    %69 = sbr.rel (0) target = $region21
  $region20: #{generator_forward.21} parent=0 // pred_region
    _
  $region21: #{generator_forward.21} parent=0 // pred_fallthru
    _
  // Predicated region
  $region22: #{generator_forward.21} parent=0 // pred_check
    _
  $region23: #{generator_forward.21} parent=0 // pred_check_branch
    %71 = sbr.rel (0) target = $region25
  $region24: #{generator_forward.21} parent=0 // pred_region
    _
  $region25: #{generator_forward.21} parent=0 // pred_fallthru
    _

// kernel: generator_forward.22
$region0: #{generator_forward.22}
  #allocation0 [shape = 'u32[]', space=smem, size = 0x4, offset = 0x4, fixed_abs, tag = 'smem constant byte address 0x4 - core index']
  #allocation1 [shape = 'u32[144,128]{1,0:T(1,128)}', space=vmem, size = 0x12000, scoped, tag = 'internal scratch']
  %s0 = inlined_call_operand.vmem [shape: f32[64,128], index: 0, kind: input, shape index: {}]
  %s1 = inlined_call_operand.vmem [shape: f32[1,128], index: 1, kind: input, shape index: {}]
  %s2 = inlined_call_operand.vmem [shape: f32[1,128], index: 2, kind: input, shape index: {}]
  %s3 = inlined_call_operand.vmem [shape: bf16[64,128], index: 3, kind: output, shape index: {}]
  %s4 = sld [smem:[#allocation0]]
  $region22: #{generator_forward.22} parent=0
    _
  %s6 = ssub.s32 1, %s4
  %s7 = scalar_select 0, %s6, %s4
  // Predicated region
  $region2: #{generator_forward.22} parent=0 // pred_check
    _
  $region3: #{generator_forward.22} parent=0 // pred_check_branch
    %9 = sbr.rel (0) target = $region5
  $region4: #{generator_forward.22} parent=0 // pred_region
    _
  $region5: #{generator_forward.22} parent=0 // pred_fallthru
    _
  // Predicated region
  $region6: #{generator_forward.22} parent=0 // pred_check
    _
  $region7: #{generator_forward.22} parent=0 // pred_check_branch
    %11 = sbr.rel (0) target = $region9
  $region8: #{generator_forward.22} parent=0 // pred_region
    _
  $region9: #{generator_forward.22} parent=0 // pred_fallthru
    _
  // Predicated region
  $region10: #{generator_forward.22} parent=0 // pred_check
    _
  $region11: #{generator_forward.22} parent=0 // pred_check_branch
    %13 = sbr.rel (0) target = $region13
  $region12: #{generator_forward.22} parent=0 // pred_region
    _
  $region13: #{generator_forward.22} parent=0 // pred_fallthru
    _
  %v14 = vld [vmem:[%s0] sm:$0xff]
  %v15 = vld [vmem:[%s0 + $0x8] sm:$0xff]
  %v16 = vld [vmem:[%s0 + $0x10] sm:$0xff]
  %v17 = vld [vmem:[%s0 + $0x18] sm:$0xff]
  %v18 = vld [vmem:[%s0 + $0x20] sm:$0xff]
  %v19 = vld [vmem:[%s0 + $0x28] sm:$0xff]
  %v20 = vld [vmem:[%s0 + $0x30] sm:$0xff]
  %v21 = vld [vmem:[%s0 + $0x38] sm:$0xff]
  %v22 = vld [vmem:[%s1] sm:$0x1]
  %v24 = vlaneseq
  %v25 = vshrl.u32 %v24, 7
  %v26 = vsub.s32 0, %v25
  %v27 = vrot.slane %v22, %v26
  %v29 = vmul.f32 %v14, %v27
  %v30 = vmul.f32 %v15, %v27
  %v31 = vmul.f32 %v16, %v27
  %v32 = vmul.f32 %v17, %v27
  %v33 = vmul.f32 %v18, %v27
  %v34 = vmul.f32 %v19, %v27
  %v35 = vmul.f32 %v20, %v27
  %v36 = vmul.f32 %v21, %v27
  %v37 = vld [vmem:[%s2] sm:$0x1]
  %v39 = vlaneseq
  %v40 = vshrl.u32 %v39, 7
  %v41 = vsub.s32 0, %v40
  %v42 = vrot.slane %v37, %v41
  %v44 = vadd.f32 %v29, %v42
  %v45 = vadd.f32 %v30, %v42
  %v46 = vadd.f32 %v31, %v42
  %v47 = vadd.f32 %v32, %v42
  %v48 = vadd.f32 %v33, %v42
  %v49 = vadd.f32 %v34, %v42
  %v50 = vadd.f32 %v35, %v42
  %v51 = vadd.f32 %v36, %v42
  %v52 = vmax.f32 %v44, 0.0
  %v53 = vmax.f32 %v45, 0.0
  %v54 = vmax.f32 %v46, 0.0
  %v55 = vmax.f32 %v47, 0.0
  %v56 = vmax.f32 %v48, 0.0
  %v57 = vmax.f32 %v49, 0.0
  %v58 = vmax.f32 %v50, 0.0
  %v59 = vmax.f32 %v51, 0.0
  %v60 = vpack.c.bf16 %v53, %v52
  %v61 = vpack.c.bf16 %v55, %v54
  %v62 = vpack.c.bf16 %v57, %v56
  %v63 = vpack.c.bf16 %v59, %v58
  %v68 = vunpack.c.l.b16 %v60
  %v69 = vunpack.c.h.b16 %v60
  %v70 = vunpack.c.l.b16 %v61
  %v71 = vunpack.c.h.b16 %v61
  %v72 = vunpack.c.l.b16 %v62
  %v73 = vunpack.c.h.b16 %v62
  %v74 = vunpack.c.l.b16 %v63
  %v75 = vunpack.c.h.b16 %v63
  %v76 = vpack.c.b16 %v68, %v68
  %v77 = vpack.c.b16 %v69, %v69
  %v78 = vpack.c.b16 %v70, %v70
  %v79 = vpack.c.b16 %v71, %v71
  %v80 = vpack.c.b16 %v72, %v72
  %v81 = vpack.c.b16 %v73, %v73
  %v82 = vpack.c.b16 %v74, %v74
  %v83 = vpack.c.b16 %v75, %v75
  %92 = vst [vmem:[%s3] sm:$0xf] %v76
  %93 = vst [vmem:[%s3 + $0x4] sm:$0xf] %v77
  %94 = vst [vmem:[%s3 + $0x8] sm:$0xf] %v78
  %95 = vst [vmem:[%s3 + $0xc] sm:$0xf] %v79
  %96 = vst [vmem:[%s3 + $0x10] sm:$0xf] %v80
  %97 = vst [vmem:[%s3 + $0x14] sm:$0xf] %v81
  %98 = vst [vmem:[%s3 + $0x18] sm:$0xf] %v82
  %99 = vst [vmem:[%s3 + $0x1c] sm:$0xf] %v83
  // Predicated region
  $region14: #{generator_forward.22} parent=0 // pred_check
    _
  $region15: #{generator_forward.22} parent=0 // pred_check_branch
    %101 = sbr.rel (0) target = $region17
  $region16: #{generator_forward.22} parent=0 // pred_region
    _
  $region17: #{generator_forward.22} parent=0 // pred_fallthru
    _
  // Predicated region
  $region18: #{generator_forward.22} parent=0 // pred_check
    _
  $region19: #{generator_forward.22} parent=0 // pred_check_branch
    %103 = sbr.rel (0) target = $region21
  $region20: #{generator_forward.22} parent=0 // pred_region
    _
  $region21: #{generator_forward.22} parent=0 // pred_fallthru
    _

// kernel: generator_forward.23
$region0: #{generator_forward.23}
  #allocation0 [shape = 'u32[]', space=smem, size = 0x4, offset = 0x4, fixed_abs, tag = 'smem constant byte address 0x4 - core index']
  #allocation1 [shape = 'u32[144,128]{1,0:T(1,128)}', space=vmem, size = 0x12000, scoped, tag = 'internal scratch']
  %s0 = inlined_call_operand.vmem [shape: bf16[512,16], index: 0, kind: input, shape index: {}]
  %s1 = inlined_call_operand.vmem [shape: bf16[16,128], index: 1, kind: input, shape index: {}]
  %s2 = inlined_call_operand.vmem [shape: f32[512,128], index: 2, kind: output, shape index: {}]
  %s3 = sld [smem:[#allocation0]]
  $region18: #{generator_forward.23} parent=0
    _
  %s5 = ssub.s32 1, %s3
  %s6 = scalar_select 0, %s5, %s3
  // Predicated region
  $region2: #{generator_forward.23} parent=0 // pred_check
    _
  $region3: #{generator_forward.23} parent=0 // pred_check_branch
    %8 = sbr.rel (0) target = $region5
  $region4: #{generator_forward.23} parent=0 // pred_region
    _
  $region5: #{generator_forward.23} parent=0 // pred_fallthru
    _
  // Predicated region
  $region6: #{generator_forward.23} parent=0 // pred_check
    _
  $region7: #{generator_forward.23} parent=0 // pred_check_branch
    %10 = sbr.rel (0) target = $region9
  $region8: #{generator_forward.23} parent=0 // pred_region
    _
  $region9: #{generator_forward.23} parent=0 // pred_fallthru
    _
  %v12 = vld [vmem:[%s0] sm:$0xf]
  %v13 = vld [vmem:[%s0 + $0x4] sm:$0xf]
  %v14 = vld [vmem:[%s0 + $0x8] sm:$0xf]
  %v15 = vld [vmem:[%s0 + $0xc] sm:$0xf]
  %v16 = vld [vmem:[%s0 + $0x10] sm:$0xf]
  %v17 = vld [vmem:[%s0 + $0x14] sm:$0xf]
  %v18 = vld [vmem:[%s0 + $0x18] sm:$0xf]
  %v19 = vld [vmem:[%s0 + $0x1c] sm:$0xf]
  %v20 = vld [vmem:[%s0 + $0x20] sm:$0xf]
  %v21 = vld [vmem:[%s0 + $0x24] sm:$0xf]
  %v22 = vld [vmem:[%s0 + $0x28] sm:$0xf]
  %v23 = vld [vmem:[%s0 + $0x2c] sm:$0xf]
  %v24 = vld [vmem:[%s0 + $0x30] sm:$0xf]
  %v25 = vld [vmem:[%s0 + $0x34] sm:$0xf]
  %v26 = vld [vmem:[%s0 + $0x38] sm:$0xf]
  %v27 = vld [vmem:[%s0 + $0x3c] sm:$0xf]
  %v28 = vld [vmem:[%s0 + $0x40] sm:$0xf]
  %v29 = vld [vmem:[%s0 + $0x44] sm:$0xf]
  %v30 = vld [vmem:[%s0 + $0x48] sm:$0xf]
  %v31 = vld [vmem:[%s0 + $0x4c] sm:$0xf]
  %v32 = vld [vmem:[%s0 + $0x50] sm:$0xf]
  %v33 = vld [vmem:[%s0 + $0x54] sm:$0xf]
  %v34 = vld [vmem:[%s0 + $0x58] sm:$0xf]
  %v35 = vld [vmem:[%s0 + $0x5c] sm:$0xf]
  %v36 = vld [vmem:[%s0 + $0x60] sm:$0xf]
  %v37 = vld [vmem:[%s0 + $0x64] sm:$0xf]
  %v38 = vld [vmem:[%s0 + $0x68] sm:$0xf]
  %v39 = vld [vmem:[%s0 + $0x6c] sm:$0xf]
  %v40 = vld [vmem:[%s0 + $0x70] sm:$0xf]
  %v41 = vld [vmem:[%s0 + $0x74] sm:$0xf]
  %v42 = vld [vmem:[%s0 + $0x78] sm:$0xf]
  %v43 = vld [vmem:[%s0 + $0x7c] sm:$0xf]
  %v44 = vld [vmem:[%s0 + $0x80] sm:$0xf]
  %v45 = vld [vmem:[%s0 + $0x84] sm:$0xf]
  %v46 = vld [vmem:[%s0 + $0x88] sm:$0xf]
  %v47 = vld [vmem:[%s0 + $0x8c] sm:$0xf]
  %v48 = vld [vmem:[%s0 + $0x90] sm:$0xf]
  %v49 = vld [vmem:[%s0 + $0x94] sm:$0xf]
  %v50 = vld [vmem:[%s0 + $0x98] sm:$0xf]
  %v51 = vld [vmem:[%s0 + $0x9c] sm:$0xf]
  %v52 = vld [vmem:[%s0 + $0xa0] sm:$0xf]
  %v53 = vld [vmem:[%s0 + $0xa4] sm:$0xf]
  %v54 = vld [vmem:[%s0 + $0xa8] sm:$0xf]
  %v55 = vld [vmem:[%s0 + $0xac] sm:$0xf]
  %v56 = vld [vmem:[%s0 + $0xb0] sm:$0xf]
  %v57 = vld [vmem:[%s0 + $0xb4] sm:$0xf]
  %v58 = vld [vmem:[%s0 + $0xb8] sm:$0xf]
  %v59 = vld [vmem:[%s0 + $0xbc] sm:$0xf]
  %v60 = vld [vmem:[%s0 + $0xc0] sm:$0xf]
  %v61 = vld [vmem:[%s0 + $0xc4] sm:$0xf]
  %v62 = vld [vmem:[%s0 + $0xc8] sm:$0xf]
  %v63 = vld [vmem:[%s0 + $0xcc] sm:$0xf]
  %v64 = vld [vmem:[%s0 + $0xd0] sm:$0xf]
  %v65 = vld [vmem:[%s0 + $0xd4] sm:$0xf]
  %v66 = vld [vmem:[%s0 + $0xd8] sm:$0xf]
  %v67 = vld [vmem:[%s0 + $0xdc] sm:$0xf]
  %v68 = vld [vmem:[%s0 + $0xe0] sm:$0xf]
  %v69 = vld [vmem:[%s0 + $0xe4] sm:$0xf]
  %v70 = vld [vmem:[%s0 + $0xe8] sm:$0xf]
  %v71 = vld [vmem:[%s0 + $0xec] sm:$0xf]
  %v72 = vld [vmem:[%s0 + $0xf0] sm:$0xf]
  %v73 = vld [vmem:[%s0 + $0xf4] sm:$0xf]
  %v74 = vld [vmem:[%s0 + $0xf8] sm:$0xf]
  %v75 = vld [vmem:[%s0 + $0xfc] sm:$0xf]
  %v76 = vld [vmem:[%s1] sm:$0xf]
  %v77 = vld [vmem:[%s1 + $0x4] sm:$0xf]
  %v142 = vunpack.c.l.b16 %v12
  %v143 = vunpack.c.l.b16 %v13
  %v144 = vunpack.c.l.b16 %v14
  %v145 = vunpack.c.l.b16 %v15
  %v146 = vunpack.c.l.b16 %v16
  %v147 = vunpack.c.l.b16 %v17
  %v148 = vunpack.c.l.b16 %v18
  %v149 = vunpack.c.l.b16 %v19
  %v150 = vunpack.c.l.b16 %v20
  %v151 = vunpack.c.l.b16 %v21
  %v152 = vunpack.c.l.b16 %v22
  %v153 = vunpack.c.l.b16 %v23
  %v154 = vunpack.c.l.b16 %v24
  %v155 = vunpack.c.l.b16 %v25
  %v156 = vunpack.c.l.b16 %v26
  %v157 = vunpack.c.l.b16 %v27
  %v158 = vunpack.c.l.b16 %v28
  %v159 = vunpack.c.l.b16 %v29
  %v160 = vunpack.c.l.b16 %v30
  %v161 = vunpack.c.l.b16 %v31
  %v162 = vunpack.c.l.b16 %v32
  %v163 = vunpack.c.l.b16 %v33
  %v164 = vunpack.c.l.b16 %v34
  %v165 = vunpack.c.l.b16 %v35
  %v166 = vunpack.c.l.b16 %v36
  %v167 = vunpack.c.l.b16 %v37
  %v168 = vunpack.c.l.b16 %v38
  %v169 = vunpack.c.l.b16 %v39
  %v170 = vunpack.c.l.b16 %v40
  %v171 = vunpack.c.l.b16 %v41
  %v172 = vunpack.c.l.b16 %v42
  %v173 = vunpack.c.l.b16 %v43
  %v174 = vunpack.c.l.b16 %v44
  %v175 = vunpack.c.l.b16 %v45
  %v176 = vunpack.c.l.b16 %v46
  %v177 = vunpack.c.l.b16 %v47
  %v178 = vunpack.c.l.b16 %v48
  %v179 = vunpack.c.l.b16 %v49
  %v180 = vunpack.c.l.b16 %v50
  %v181 = vunpack.c.l.b16 %v51
  %v182 = vunpack.c.l.b16 %v52
  %v183 = vunpack.c.l.b16 %v53
  %v184 = vunpack.c.l.b16 %v54
  %v185 = vunpack.c.l.b16 %v55
  %v186 = vunpack.c.l.b16 %v56
  %v187 = vunpack.c.l.b16 %v57
  %v188 = vunpack.c.l.b16 %v58
  %v189 = vunpack.c.l.b16 %v59
  %v190 = vunpack.c.l.b16 %v60
  %v191 = vunpack.c.l.b16 %v61
  %v192 = vunpack.c.l.b16 %v62
  %v193 = vunpack.c.l.b16 %v63
  %v194 = vunpack.c.l.b16 %v64
  %v195 = vunpack.c.l.b16 %v65
  %v196 = vunpack.c.l.b16 %v66
  %v197 = vunpack.c.l.b16 %v67
  %v198 = vunpack.c.l.b16 %v68
  %v199 = vunpack.c.l.b16 %v69
  %v200 = vunpack.c.l.b16 %v70
  %v201 = vunpack.c.l.b16 %v71
  %v202 = vunpack.c.l.b16 %v72
  %v203 = vunpack.c.l.b16 %v73
  %v204 = vunpack.c.l.b16 %v74
  %v205 = vunpack.c.l.b16 %v75
  %v206 = vpack.c.b16 %v143, %v142
  %v207 = vpack.c.b16 %v145, %v144
  %v208 = vpack.c.b16 %v147, %v146
  %v209 = vpack.c.b16 %v149, %v148
  %v210 = vpack.c.b16 %v151, %v150
  %v211 = vpack.c.b16 %v153, %v152
  %v212 = vpack.c.b16 %v155, %v154
  %v213 = vpack.c.b16 %v157, %v156
  %v214 = vpack.c.b16 %v159, %v158
  %v215 = vpack.c.b16 %v161, %v160
  %v216 = vpack.c.b16 %v163, %v162
  %v217 = vpack.c.b16 %v165, %v164
  %v218 = vpack.c.b16 %v167, %v166
  %v219 = vpack.c.b16 %v169, %v168
  %v220 = vpack.c.b16 %v171, %v170
  %v221 = vpack.c.b16 %v173, %v172
  %v222 = vpack.c.b16 %v175, %v174
  %v223 = vpack.c.b16 %v177, %v176
  %v224 = vpack.c.b16 %v179, %v178
  %v225 = vpack.c.b16 %v181, %v180
  %v226 = vpack.c.b16 %v183, %v182
  %v227 = vpack.c.b16 %v185, %v184
  %v228 = vpack.c.b16 %v187, %v186
  %v229 = vpack.c.b16 %v189, %v188
  %v230 = vpack.c.b16 %v191, %v190
  %v231 = vpack.c.b16 %v193, %v192
  %v232 = vpack.c.b16 %v195, %v194
  %v233 = vpack.c.b16 %v197, %v196
  %v234 = vpack.c.b16 %v199, %v198
  %v235 = vpack.c.b16 %v201, %v200
  %v236 = vpack.c.b16 %v203, %v202
  %v237 = vpack.c.b16 %v205, %v204
  %v240 = vunpack.c.l.b16 %v76
  %v241 = vunpack.c.l.b16 %v77
  %v242 = vpack.c.b16 %v241, %v240
  %vm244 = vcmask 130048
  %v246 = vsel %vm244, %v206, 0
  %v249 = vsel %vm244, %v207, 0
  %v252 = vsel %vm244, %v208, 0
  %v255 = vsel %vm244, %v209, 0
  %v258 = vsel %vm244, %v210, 0
  %v261 = vsel %vm244, %v211, 0
  %v264 = vsel %vm244, %v212, 0
  %v267 = vsel %vm244, %v213, 0
  %v270 = vsel %vm244, %v214, 0
  %v273 = vsel %vm244, %v215, 0
  %v276 = vsel %vm244, %v216, 0
  %v279 = vsel %vm244, %v217, 0
  %v282 = vsel %vm244, %v218, 0
  %v285 = vsel %vm244, %v219, 0
  %v288 = vsel %vm244, %v220, 0
  %v291 = vsel %vm244, %v221, 0
  %v294 = vsel %vm244, %v222, 0
  %v297 = vsel %vm244, %v223, 0
  %v300 = vsel %vm244, %v224, 0
  %v303 = vsel %vm244, %v225, 0
  %v306 = vsel %vm244, %v226, 0
  %v309 = vsel %vm244, %v227, 0
  %v312 = vsel %vm244, %v228, 0
  %v315 = vsel %vm244, %v229, 0
  %v318 = vsel %vm244, %v230, 0
  %v321 = vsel %vm244, %v231, 0
  %v324 = vsel %vm244, %v232, 0
  %v327 = vsel %vm244, %v233, 0
  %v330 = vsel %vm244, %v234, 0
  %v333 = vsel %vm244, %v235, 0
  %v336 = vsel %vm244, %v236, 0
  %v339 = vsel %vm244, %v237, 0
  %341 = vmatprep.subr.bf16.mxu0 0
  %342 = vmatpush1.bf16.msra.mxu0 0
  %343 = vmatprep.subr.bf16.mxu0 0
  %344 = vmatpush1.bf16.msra.mxu0 0
  %345 = vmatprep.subr.bf16.mxu0 0
  %346 = vmatpush1.bf16.msra.mxu0 0
  %347 = vmatprep.subr.bf16.mxu0 0
  %348 = vmatpush1.bf16.msra.mxu0 0
  %349 = vmatprep.subr.bf16.mxu0 0
  %350 = vmatpush1.bf16.msra.mxu0 0
  %351 = vmatprep.subr.bf16.mxu0 0
  %352 = vmatpush1.bf16.msra.mxu0 0
  %353 = vmatprep.subr.bf16.mxu0 0
  %354 = vmatpush1.bf16.msra.mxu0 0
  %355 = vmatprep.subr.bf16.mxu0 0
  %356 = vmatpush1.bf16.msra.mxu0 %v242
  %357 = vmatprep.subr.bf16.mxu0 0
  %358 = vmatpush2.bf16.msra.mxu0 0
  %359 = vmatprep.subr.bf16.mxu0 0
  %360 = vmatpush2.bf16.msra.mxu0 0
  %361 = vmatprep.subr.bf16.mxu0 0
  %362 = vmatpush2.bf16.msra.mxu0 0
  %363 = vmatprep.subr.bf16.mxu0 0
  %364 = vmatpush2.bf16.msra.mxu0 0
  %365 = vmatprep.subr.bf16.mxu0 0
  %366 = vmatpush2.bf16.msra.mxu0 0
  %367 = vmatprep.subr.bf16.mxu0 0
  %368 = vmatpush2.bf16.msra.mxu0 0
  %369 = vmatprep.subr.bf16.mxu0 0
  %370 = vmatpush2.bf16.msra.mxu0 0
  %371 = vmatprep.subr.bf16.mxu0 0
  %372 = vmatpush2.bf16.msra.mxu0 0
  %373 = vmatprep.mubr.bf16.mxu0 0
  %374 = vmatmul.mubr.bf16.gmra.mxu0 %v246
  %v375 = vpop.f32.mrf.mxu0
  %v376 = vadd.f32 0.0, %v375
  %v377 = vpop.f32.mrf.mxu0
  %v378 = vpop.f32.mrf.mxu0
  %v379 = vadd.f32 0.0, %v378
  %v380 = vpop.f32.mrf.mxu0
  %381 = vmatprep.mubr.bf16.mxu0 0
  %382 = vmatmul.mubr.bf16.gmra.mxu0 %v249
  %v383 = vpop.f32.mrf.mxu0
  %v384 = vadd.f32 0.0, %v383
  %v385 = vpop.f32.mrf.mxu0
  %v386 = vpop.f32.mrf.mxu0
  %v387 = vadd.f32 0.0, %v386
  %v388 = vpop.f32.mrf.mxu0
  %389 = vmatprep.mubr.bf16.mxu0 0
  %390 = vmatmul.mubr.bf16.gmra.mxu0 %v252
  %v391 = vpop.f32.mrf.mxu0
  %v392 = vadd.f32 0.0, %v391
  %v393 = vpop.f32.mrf.mxu0
  %v394 = vpop.f32.mrf.mxu0
  %v395 = vadd.f32 0.0, %v394
  %v396 = vpop.f32.mrf.mxu0
  %397 = vmatprep.mubr.bf16.mxu0 0
  %398 = vmatmul.mubr.bf16.gmra.mxu0 %v255
  %v399 = vpop.f32.mrf.mxu0
  %v400 = vadd.f32 0.0, %v399
  %v401 = vpop.f32.mrf.mxu0
  %v402 = vpop.f32.mrf.mxu0
  %v403 = vadd.f32 0.0, %v402
  %v404 = vpop.f32.mrf.mxu0
  %405 = vmatprep.mubr.bf16.mxu0 0
  %406 = vmatmul.mubr.bf16.gmra.mxu0 %v258
  %v407 = vpop.f32.mrf.mxu0
  %v408 = vadd.f32 0.0, %v407
  %v409 = vpop.f32.mrf.mxu0
  %v410 = vpop.f32.mrf.mxu0
  %v411 = vadd.f32 0.0, %v410
  %v412 = vpop.f32.mrf.mxu0
  %413 = vmatprep.mubr.bf16.mxu0 0
  %414 = vmatmul.mubr.bf16.gmra.mxu0 %v261
  %v415 = vpop.f32.mrf.mxu0
  %v416 = vadd.f32 0.0, %v415
  %v417 = vpop.f32.mrf.mxu0
  %v418 = vpop.f32.mrf.mxu0
  %v419 = vadd.f32 0.0, %v418
  %v420 = vpop.f32.mrf.mxu0
  %421 = vmatprep.mubr.bf16.mxu0 0
  %422 = vmatmul.mubr.bf16.gmra.mxu0 %v264
  %v423 = vpop.f32.mrf.mxu0
  %v424 = vadd.f32 0.0, %v423
  %v425 = vpop.f32.mrf.mxu0
  %v426 = vpop.f32.mrf.mxu0
  %v427 = vadd.f32 0.0, %v426
  %v428 = vpop.f32.mrf.mxu0
  %429 = vmatprep.mubr.bf16.mxu0 0
  %430 = vmatmul.mubr.bf16.gmra.mxu0 %v267
  %v431 = vpop.f32.mrf.mxu0
  %v432 = vadd.f32 0.0, %v431
  %v433 = vpop.f32.mrf.mxu0
  %v434 = vpop.f32.mrf.mxu0
  %v435 = vadd.f32 0.0, %v434
  %v436 = vpop.f32.mrf.mxu0
  %437 = vmatprep.mubr.bf16.mxu0 0
  %438 = vmatmul.mubr.bf16.gmra.mxu0 %v270
  %v439 = vpop.f32.mrf.mxu0
  %v440 = vadd.f32 0.0, %v439
  %v441 = vpop.f32.mrf.mxu0
  %v442 = vpop.f32.mrf.mxu0
  %v443 = vadd.f32 0.0, %v442
  %v444 = vpop.f32.mrf.mxu0
  %445 = vmatprep.mubr.bf16.mxu0 0
  %446 = vmatmul.mubr.bf16.gmra.mxu0 %v273
  %v447 = vpop.f32.mrf.mxu0
  %v448 = vadd.f32 0.0, %v447
  %v449 = vpop.f32.mrf.mxu0
  %v450 = vpop.f32.mrf.mxu0
  %v451 = vadd.f32 0.0, %v450
  %v452 = vpop.f32.mrf.mxu0
  %453 = vmatprep.mubr.bf16.mxu0 0
  %454 = vmatmul.mubr.bf16.gmra.mxu0 %v276
  %v455 = vpop.f32.mrf.mxu0
  %v456 = vadd.f32 0.0, %v455
  %v457 = vpop.f32.mrf.mxu0
  %v458 = vpop.f32.mrf.mxu0
  %v459 = vadd.f32 0.0, %v458
  %v460 = vpop.f32.mrf.mxu0
  %461 = vmatprep.mubr.bf16.mxu0 0
  %462 = vmatmul.mubr.bf16.gmra.mxu0 %v279
  %v463 = vpop.f32.mrf.mxu0
  %v464 = vadd.f32 0.0, %v463
  %v465 = vpop.f32.mrf.mxu0
  %v466 = vpop.f32.mrf.mxu0
  %v467 = vadd.f32 0.0, %v466
  %v468 = vpop.f32.mrf.mxu0
  %469 = vmatprep.mubr.bf16.mxu0 0
  %470 = vmatmul.mubr.bf16.gmra.mxu0 %v282
  %v471 = vpop.f32.mrf.mxu0
  %v472 = vadd.f32 0.0, %v471
  %v473 = vpop.f32.mrf.mxu0
  %v474 = vpop.f32.mrf.mxu0
  %v475 = vadd.f32 0.0, %v474
  %v476 = vpop.f32.mrf.mxu0
  %477 = vmatprep.mubr.bf16.mxu0 0
  %478 = vmatmul.mubr.bf16.gmra.mxu0 %v285
  %v479 = vpop.f32.mrf.mxu0
  %v480 = vadd.f32 0.0, %v479
  %v481 = vpop.f32.mrf.mxu0
  %v482 = vpop.f32.mrf.mxu0
  %v483 = vadd.f32 0.0, %v482
  %v484 = vpop.f32.mrf.mxu0
  %485 = vmatprep.mubr.bf16.mxu0 0
  %486 = vmatmul.mubr.bf16.gmra.mxu0 %v288
  %v487 = vpop.f32.mrf.mxu0
  %v488 = vadd.f32 0.0, %v487
  %v489 = vpop.f32.mrf.mxu0
  %v490 = vpop.f32.mrf.mxu0
  %v491 = vadd.f32 0.0, %v490
  %v492 = vpop.f32.mrf.mxu0
  %493 = vmatprep.mubr.bf16.mxu0 0
  %494 = vmatmul.mubr.bf16.gmra.mxu0 %v291
  %v495 = vpop.f32.mrf.mxu0
  %v496 = vadd.f32 0.0, %v495
  %v497 = vpop.f32.mrf.mxu0
  %v498 = vpop.f32.mrf.mxu0
  %v499 = vadd.f32 0.0, %v498
  %v500 = vpop.f32.mrf.mxu0
  %501 = vmatprep.mubr.bf16.mxu0 0
  %502 = vmatmul.mubr.bf16.gmra.mxu0 %v294
  %v503 = vpop.f32.mrf.mxu0
  %v504 = vadd.f32 0.0, %v503
  %v505 = vpop.f32.mrf.mxu0
  %v506 = vpop.f32.mrf.mxu0
  %v507 = vadd.f32 0.0, %v506
  %v508 = vpop.f32.mrf.mxu0
  %509 = vmatprep.mubr.bf16.mxu0 0
  %510 = vmatmul.mubr.bf16.gmra.mxu0 %v297
  %v511 = vpop.f32.mrf.mxu0
  %v512 = vadd.f32 0.0, %v511
  %v513 = vpop.f32.mrf.mxu0
  %v514 = vpop.f32.mrf.mxu0
  %v515 = vadd.f32 0.0, %v514
  %v516 = vpop.f32.mrf.mxu0
  %517 = vmatprep.mubr.bf16.mxu0 0
  %518 = vmatmul.mubr.bf16.gmra.mxu0 %v300
  %v519 = vpop.f32.mrf.mxu0
  %v520 = vadd.f32 0.0, %v519
  %v521 = vpop.f32.mrf.mxu0
  %v522 = vpop.f32.mrf.mxu0
  %v523 = vadd.f32 0.0, %v522
  %v524 = vpop.f32.mrf.mxu0
  %525 = vmatprep.mubr.bf16.mxu0 0
  %526 = vmatmul.mubr.bf16.gmra.mxu0 %v303
  %v527 = vpop.f32.mrf.mxu0
  %v528 = vadd.f32 0.0, %v527
  %v529 = vpop.f32.mrf.mxu0
  %v530 = vpop.f32.mrf.mxu0
  %v531 = vadd.f32 0.0, %v530
  %v532 = vpop.f32.mrf.mxu0
  %533 = vmatprep.mubr.bf16.mxu0 0
  %534 = vmatmul.mubr.bf16.gmra.mxu0 %v306
  %v535 = vpop.f32.mrf.mxu0
  %v536 = vadd.f32 0.0, %v535
  %v537 = vpop.f32.mrf.mxu0
  %v538 = vpop.f32.mrf.mxu0
  %v539 = vadd.f32 0.0, %v538
  %v540 = vpop.f32.mrf.mxu0
  %541 = vmatprep.mubr.bf16.mxu0 0
  %542 = vmatmul.mubr.bf16.gmra.mxu0 %v309
  %v543 = vpop.f32.mrf.mxu0
  %v544 = vadd.f32 0.0, %v543
  %v545 = vpop.f32.mrf.mxu0
  %v546 = vpop.f32.mrf.mxu0
  %v547 = vadd.f32 0.0, %v546
  %v548 = vpop.f32.mrf.mxu0
  %549 = vmatprep.mubr.bf16.mxu0 0
  %550 = vmatmul.mubr.bf16.gmra.mxu0 %v312
  %v551 = vpop.f32.mrf.mxu0
  %v552 = vadd.f32 0.0, %v551
  %v553 = vpop.f32.mrf.mxu0
  %v554 = vpop.f32.mrf.mxu0
  %v555 = vadd.f32 0.0, %v554
  %v556 = vpop.f32.mrf.mxu0
  %557 = vmatprep.mubr.bf16.mxu0 0
  %558 = vmatmul.mubr.bf16.gmra.mxu0 %v315
  %v559 = vpop.f32.mrf.mxu0
  %v560 = vadd.f32 0.0, %v559
  %v561 = vpop.f32.mrf.mxu0
  %v562 = vpop.f32.mrf.mxu0
  %v563 = vadd.f32 0.0, %v562
  %v564 = vpop.f32.mrf.mxu0
  %565 = vmatprep.mubr.bf16.mxu0 0
  %566 = vmatmul.mubr.bf16.gmra.mxu0 %v318
  %v567 = vpop.f32.mrf.mxu0
  %v568 = vadd.f32 0.0, %v567
  %v569 = vpop.f32.mrf.mxu0
  %v570 = vpop.f32.mrf.mxu0
  %v571 = vadd.f32 0.0, %v570
  %v572 = vpop.f32.mrf.mxu0
  %573 = vmatprep.mubr.bf16.mxu0 0
  %574 = vmatmul.mubr.bf16.gmra.mxu0 %v321
  %v575 = vpop.f32.mrf.mxu0
  %v576 = vadd.f32 0.0, %v575
  %v577 = vpop.f32.mrf.mxu0
  %v578 = vpop.f32.mrf.mxu0
  %v579 = vadd.f32 0.0, %v578
  %v580 = vpop.f32.mrf.mxu0
  %581 = vmatprep.mubr.bf16.mxu0 0
  %582 = vmatmul.mubr.bf16.gmra.mxu0 %v324
  %v583 = vpop.f32.mrf.mxu0
  %v584 = vadd.f32 0.0, %v583
  %v585 = vpop.f32.mrf.mxu0
  %v586 = vpop.f32.mrf.mxu0
  %v587 = vadd.f32 0.0, %v586
  %v588 = vpop.f32.mrf.mxu0
  %589 = vmatprep.mubr.bf16.mxu0 0
  %590 = vmatmul.mubr.bf16.gmra.mxu0 %v327
  %v591 = vpop.f32.mrf.mxu0
  %v592 = vadd.f32 0.0, %v591
  %v593 = vpop.f32.mrf.mxu0
  %v594 = vpop.f32.mrf.mxu0
  %v595 = vadd.f32 0.0, %v594
  %v596 = vpop.f32.mrf.mxu0
  %597 = vmatprep.mubr.bf16.mxu0 0
  %598 = vmatmul.mubr.bf16.gmra.mxu0 %v330
  %v599 = vpop.f32.mrf.mxu0
  %v600 = vadd.f32 0.0, %v599
  %v601 = vpop.f32.mrf.mxu0
  %v602 = vpop.f32.mrf.mxu0
  %v603 = vadd.f32 0.0, %v602
  %v604 = vpop.f32.mrf.mxu0
  %605 = vmatprep.mubr.bf16.mxu0 0
  %606 = vmatmul.mubr.bf16.gmra.mxu0 %v333
  %v607 = vpop.f32.mrf.mxu0
  %v608 = vadd.f32 0.0, %v607
  %v609 = vpop.f32.mrf.mxu0
  %v610 = vpop.f32.mrf.mxu0
  %v611 = vadd.f32 0.0, %v610
  %v612 = vpop.f32.mrf.mxu0
  %613 = vmatprep.mubr.bf16.mxu0 0
  %614 = vmatmul.mubr.bf16.gmra.mxu0 %v336
  %v615 = vpop.f32.mrf.mxu0
  %v616 = vadd.f32 0.0, %v615
  %v617 = vpop.f32.mrf.mxu0
  %v618 = vpop.f32.mrf.mxu0
  %v619 = vadd.f32 0.0, %v618
  %v620 = vpop.f32.mrf.mxu0
  %621 = vmatprep.mubr.bf16.mxu0 0
  %622 = vmatmul.mubr.bf16.gmra.mxu0 %v339
  %v623 = vpop.f32.mrf.mxu0
  %v624 = vadd.f32 0.0, %v623
  %v625 = vpop.f32.mrf.mxu0
  %v626 = vpop.f32.mrf.mxu0
  %v627 = vadd.f32 0.0, %v626
  %v628 = vpop.f32.mrf.mxu0
  %629 = vdwg.mxu0
  %630 = vst [vmem:[%s2] sm:$0xff] %v376
  %631 = vst [vmem:[%s2 + $0x8] sm:$0xff] %v379
  %632 = vst [vmem:[%s2 + $0x10] sm:$0xff] %v384
  %633 = vst [vmem:[%s2 + $0x18] sm:$0xff] %v387
  %634 = vst [vmem:[%s2 + $0x20] sm:$0xff] %v392
  %635 = vst [vmem:[%s2 + $0x28] sm:$0xff] %v395
  %636 = vst [vmem:[%s2 + $0x30] sm:$0xff] %v400
  %637 = vst [vmem:[%s2 + $0x38] sm:$0xff] %v403
  %638 = vst [vmem:[%s2 + $0x40] sm:$0xff] %v408
  %639 = vst [vmem:[%s2 + $0x48] sm:$0xff] %v411
  %640 = vst [vmem:[%s2 + $0x50] sm:$0xff] %v416
  %641 = vst [vmem:[%s2 + $0x58] sm:$0xff] %v419
  %642 = vst [vmem:[%s2 + $0x60] sm:$0xff] %v424
  %643 = vst [vmem:[%s2 + $0x68] sm:$0xff] %v427
  %644 = vst [vmem:[%s2 + $0x70] sm:$0xff] %v432
  %645 = vst [vmem:[%s2 + $0x78] sm:$0xff] %v435
  %646 = vst [vmem:[%s2 + $0x80] sm:$0xff] %v440
  %647 = vst [vmem:[%s2 + $0x88] sm:$0xff] %v443
  %648 = vst [vmem:[%s2 + $0x90] sm:$0xff] %v448
  %649 = vst [vmem:[%s2 + $0x98] sm:$0xff] %v451
  %650 = vst [vmem:[%s2 + $0xa0] sm:$0xff] %v456
  %651 = vst [vmem:[%s2 + $0xa8] sm:$0xff] %v459
  %652 = vst [vmem:[%s2 + $0xb0] sm:$0xff] %v464
  %653 = vst [vmem:[%s2 + $0xb8] sm:$0xff] %v467
  %654 = vst [vmem:[%s2 + $0xc0] sm:$0xff] %v472
  %655 = vst [vmem:[%s2 + $0xc8] sm:$0xff] %v475
  %656 = vst [vmem:[%s2 + $0xd0] sm:$0xff] %v480
  %657 = vst [vmem:[%s2 + $0xd8] sm:$0xff] %v483
  %658 = vst [vmem:[%s2 + $0xe0] sm:$0xff] %v488
  %659 = vst [vmem:[%s2 + $0xe8] sm:$0xff] %v491
  %660 = vst [vmem:[%s2 + $0xf0] sm:$0xff] %v496
  %661 = vst [vmem:[%s2 + $0xf8] sm:$0xff] %v499
  %662 = vst [vmem:[%s2 + $0x100] sm:$0xff] %v504
  %663 = vst [vmem:[%s2 + $0x108] sm:$0xff] %v507
  %664 = vst [vmem:[%s2 + $0x110] sm:$0xff] %v512
  %665 = vst [vmem:[%s2 + $0x118] sm:$0xff] %v515
  %666 = vst [vmem:[%s2 + $0x120] sm:$0xff] %v520
  %667 = vst [vmem:[%s2 + $0x128] sm:$0xff] %v523
  %668 = vst [vmem:[%s2 + $0x130] sm:$0xff] %v528
  %669 = vst [vmem:[%s2 + $0x138] sm:$0xff] %v531
  %670 = vst [vmem:[%s2 + $0x140] sm:$0xff] %v536
  %671 = vst [vmem:[%s2 + $0x148] sm:$0xff] %v539
  %672 = vst [vmem:[%s2 + $0x150] sm:$0xff] %v544
  %673 = vst [vmem:[%s2 + $0x158] sm:$0xff] %v547
  %674 = vst [vmem:[%s2 + $0x160] sm:$0xff] %v552
  %675 = vst [vmem:[%s2 + $0x168] sm:$0xff] %v555
  %676 = vst [vmem:[%s2 + $0x170] sm:$0xff] %v560
  %677 = vst [vmem:[%s2 + $0x178] sm:$0xff] %v563
  %678 = vst [vmem:[%s2 + $0x180] sm:$0xff] %v568
  %679 = vst [vmem:[%s2 + $0x188] sm:$0xff] %v571
  %680 = vst [vmem:[%s2 + $0x190] sm:$0xff] %v576
  %681 = vst [vmem:[%s2 + $0x198] sm:$0xff] %v579
  %682 = vst [vmem:[%s2 + $0x1a0] sm:$0xff] %v584
  %683 = vst [vmem:[%s2 + $0x1a8] sm:$0xff] %v587
  %684 = vst [vmem:[%s2 + $0x1b0] sm:$0xff] %v592
  %685 = vst [vmem:[%s2 + $0x1b8] sm:$0xff] %v595
  %686 = vst [vmem:[%s2 + $0x1c0] sm:$0xff] %v600
  %687 = vst [vmem:[%s2 + $0x1c8] sm:$0xff] %v603
  %688 = vst [vmem:[%s2 + $0x1d0] sm:$0xff] %v608
  %689 = vst [vmem:[%s2 + $0x1d8] sm:$0xff] %v611
  %690 = vst [vmem:[%s2 + $0x1e0] sm:$0xff] %v616
  %691 = vst [vmem:[%s2 + $0x1e8] sm:$0xff] %v619
  %692 = vst [vmem:[%s2 + $0x1f0] sm:$0xff] %v624
  %693 = vst [vmem:[%s2 + $0x1f8] sm:$0xff] %v627
  // Predicated region
  $region10: #{generator_forward.23} parent=0 // pred_check
    _
  $region11: #{generator_forward.23} parent=0 // pred_check_branch
    %695 = sbr.rel (0) target = $region13
  $region12: #{generator_forward.23} parent=0 // pred_region
    _
  $region13: #{generator_forward.23} parent=0 // pred_fallthru
    _
  // Predicated region
  $region14: #{generator_forward.23} parent=0 // pred_check
    _
  $region15: #{generator_forward.23} parent=0 // pred_check_branch
    %697 = sbr.rel (0) target = $region17
  $region16: #{generator_forward.23} parent=0 // pred_region
    _
  $region17: #{generator_forward.23} parent=0 // pred_fallthru
    _

// kernel: generator_forward.24
$region0: #{generator_forward.24}
  #allocation0 [shape = 'u32[]', space=smem, size = 0x4, offset = 0x4, fixed_abs, tag = 'smem constant byte address 0x4 - core index']
  #allocation1 [shape = 'u32[144,128]{1,0:T(1,128)}', space=vmem, size = 0x12000, scoped, tag = 'internal scratch']
  %s0 = inlined_call_operand.vmem [shape: f32[128,128], index: 0, kind: input, shape index: {}]
  %s1 = inlined_call_operand.vmem [shape: f32[1,128], index: 1, kind: output, shape index: {0}]
  %s2 = inlined_call_operand.vmem [shape: f32[1,128], index: 2, kind: output, shape index: {1}]
  %3 = xla_tuple %s1, %s2
  %s4 = sld [smem:[#allocation0]]
  $region26: #{generator_forward.24} parent=0
    _
  %s6 = ssub.s32 1, %s4
  %s7 = scalar_select 0, %s6, %s4
  // Predicated region
  $region2: #{generator_forward.24} parent=0 // pred_check
    _
  $region3: #{generator_forward.24} parent=0 // pred_check_branch
    %9 = sbr.rel (0) target = $region5
  $region4: #{generator_forward.24} parent=0 // pred_region
    _
  $region5: #{generator_forward.24} parent=0 // pred_fallthru
    _
  %p10 = scmp.eq.s32.totalorder 0, 0
  // Predicated region
  $region6: #{generator_forward.24} parent=0 // pred_check
    %p11 = pneg %p10
  $region7: #{generator_forward.24} parent=0 // pred_check_branch
    %13 = sbr.rel (%p11) target = $region9
  $region8: #{generator_forward.24} parent=0 // pred_region
    %14 = vst [vmem:[%s1] sm:$0x1] 0.0
    %15 = vst [vmem:[%s2] sm:$0x1] 0.0
  $region9: #{generator_forward.24} parent=0 // pred_fallthru
    _
  %v16 = vld [vmem:[%s0] sm:$0xff]
  %v17 = vld [vmem:[%s0 + $0x8] sm:$0xff]
  %v18 = vld [vmem:[%s0 + $0x10] sm:$0xff]
  %v19 = vld [vmem:[%s0 + $0x18] sm:$0xff]
  %v20 = vld [vmem:[%s0 + $0x20] sm:$0xff]
  %v21 = vld [vmem:[%s0 + $0x28] sm:$0xff]
  %v22 = vld [vmem:[%s0 + $0x30] sm:$0xff]
  %v23 = vld [vmem:[%s0 + $0x38] sm:$0xff]
  %v24 = vld [vmem:[%s0 + $0x40] sm:$0xff]
  %v25 = vld [vmem:[%s0 + $0x48] sm:$0xff]
  %v26 = vld [vmem:[%s0 + $0x50] sm:$0xff]
  %v27 = vld [vmem:[%s0 + $0x58] sm:$0xff]
  %v28 = vld [vmem:[%s0 + $0x60] sm:$0xff]
  %v29 = vld [vmem:[%s0 + $0x68] sm:$0xff]
  %v30 = vld [vmem:[%s0 + $0x70] sm:$0xff]
  %v31 = vld [vmem:[%s0 + $0x78] sm:$0xff]
  %v32 = vld [vmem:[%s1] sm:$0x1]
  %v33 = vadd.f32 %v16, %v17
  %v34 = vadd.f32 %v33, %v18
  %v35 = vadd.f32 %v34, %v19
  %v36 = vadd.f32 %v35, %v20
  %v37 = vadd.f32 %v36, %v21
  %v38 = vadd.f32 %v37, %v22
  %v39 = vadd.f32 %v38, %v23
  %v40 = vadd.f32 %v39, %v24
  %v41 = vadd.f32 %v40, %v25
  %v42 = vadd.f32 %v41, %v26
  %v43 = vadd.f32 %v42, %v27
  %v44 = vadd.f32 %v43, %v28
  %v45 = vadd.f32 %v44, %v29
  %v46 = vadd.f32 %v45, %v30
  %v47 = vadd.f32 %v46, %v31
  %v48 = vrot.slane %v47, 4
  %v49 = vadd.f32 %v47, %v48
  %v50 = vrot.slane %v49, 2
  %v51 = vadd.f32 %v49, %v50
  %v52 = vrot.slane %v51, 1
  %v53 = vadd.f32 %v51, %v52
  %v54 = vadd.f32 %v32, %v53
  %55 = vst [vmem:[%s1] sm:$0x1] %v54
  %v56 = vld [vmem:[%s2] sm:$0x1]
  %v57 = vmul.f32 %v16, %v16
  %v58 = vmul.f32 %v17, %v17
  %v59 = vmul.f32 %v18, %v18
  %v60 = vmul.f32 %v19, %v19
  %v61 = vmul.f32 %v20, %v20
  %v62 = vmul.f32 %v21, %v21
  %v63 = vmul.f32 %v22, %v22
  %v64 = vmul.f32 %v23, %v23
  %v65 = vmul.f32 %v24, %v24
  %v66 = vmul.f32 %v25, %v25
  %v67 = vmul.f32 %v26, %v26
  %v68 = vmul.f32 %v27, %v27
  %v69 = vmul.f32 %v28, %v28
  %v70 = vmul.f32 %v29, %v29
  %v71 = vmul.f32 %v30, %v30
  %v72 = vmul.f32 %v31, %v31
  %v73 = vadd.f32 %v57, %v58
  %v74 = vadd.f32 %v73, %v59
  %v75 = vadd.f32 %v74, %v60
  %v76 = vadd.f32 %v75, %v61
  %v77 = vadd.f32 %v76, %v62
  %v78 = vadd.f32 %v77, %v63
  %v79 = vadd.f32 %v78, %v64
  %v80 = vadd.f32 %v79, %v65
  %v81 = vadd.f32 %v80, %v66
  %v82 = vadd.f32 %v81, %v67
  %v83 = vadd.f32 %v82, %v68
  %v84 = vadd.f32 %v83, %v69
  %v85 = vadd.f32 %v84, %v70
  %v86 = vadd.f32 %v85, %v71
  %v87 = vadd.f32 %v86, %v72
  %v88 = vrot.slane %v87, 4
  %v89 = vadd.f32 %v87, %v88
  %v90 = vrot.slane %v89, 2
  %v91 = vadd.f32 %v89, %v90
  %v92 = vrot.slane %v91, 1
  %v93 = vadd.f32 %v91, %v92
  %v94 = vadd.f32 %v56, %v93
  %95 = vst [vmem:[%s2] sm:$0x1] %v94
  // Predicated region
  $region10: #{generator_forward.24} parent=0 // pred_check
    _
  $region11: #{generator_forward.24} parent=0 // pred_check_branch
    %97 = sbr.rel (0) target = $region13
  $region12: #{generator_forward.24} parent=0 // pred_region
    _
  $region13: #{generator_forward.24} parent=0 // pred_fallthru
    _
  // Predicated region
  $region14: #{generator_forward.24} parent=0 // pred_check
    _
  $region15: #{generator_forward.24} parent=0 // pred_check_branch
    %99 = sbr.rel (0) target = $region17
  $region16: #{generator_forward.24} parent=0 // pred_region
    _
  $region17: #{generator_forward.24} parent=0 // pred_fallthru
    _
  // Predicated region
  $region18: #{generator_forward.24} parent=0 // pred_check
    _
  $region19: #{generator_forward.24} parent=0 // pred_check_branch
    %101 = sbr.rel (0) target = $region21
  $region20: #{generator_forward.24} parent=0 // pred_region
    _
  $region21: #{generator_forward.24} parent=0 // pred_fallthru
    _
  // Predicated region
  $region22: #{generator_forward.24} parent=0 // pred_check
    _
  $region23: #{generator_forward.24} parent=0 // pred_check_branch
    %103 = sbr.rel (0) target = $region25
  $region24: #{generator_forward.24} parent=0 // pred_region
    _
  $region25: #{generator_forward.24} parent=0 // pred_fallthru
    _

// kernel: generator_forward.25
$region0: #{generator_forward.25}
  #allocation0 [shape = 'u32[]', space=smem, size = 0x4, offset = 0x4, fixed_abs, tag = 'smem constant byte address 0x4 - core index']
  #allocation1 [shape = 'u32[144,128]{1,0:T(1,128)}', space=vmem, size = 0x12000, scoped, tag = 'internal scratch']
  %s0 = inlined_call_operand.vmem [shape: f32[128,128], index: 0, kind: input, shape index: {}]
  %s1 = inlined_call_operand.vmem [shape: f32[1,128], index: 1, kind: input, shape index: {}]
  %s2 = inlined_call_operand.vmem [shape: f32[1,128], index: 2, kind: input, shape index: {}]
  %s3 = inlined_call_operand.vmem [shape: bf16[128,128], index: 3, kind: output, shape index: {}]
  %s4 = sld [smem:[#allocation0]]
  $region22: #{generator_forward.25} parent=0
    _
  %s6 = ssub.s32 1, %s4
  %s7 = scalar_select 0, %s6, %s4
  // Predicated region
  $region2: #{generator_forward.25} parent=0 // pred_check
    _
  $region3: #{generator_forward.25} parent=0 // pred_check_branch
    %9 = sbr.rel (0) target = $region5
  $region4: #{generator_forward.25} parent=0 // pred_region
    _
  $region5: #{generator_forward.25} parent=0 // pred_fallthru
    _
  // Predicated region
  $region6: #{generator_forward.25} parent=0 // pred_check
    _
  $region7: #{generator_forward.25} parent=0 // pred_check_branch
    %11 = sbr.rel (0) target = $region9
  $region8: #{generator_forward.25} parent=0 // pred_region
    _
  $region9: #{generator_forward.25} parent=0 // pred_fallthru
    _
  // Predicated region
  $region10: #{generator_forward.25} parent=0 // pred_check
    _
  $region11: #{generator_forward.25} parent=0 // pred_check_branch
    %13 = sbr.rel (0) target = $region13
  $region12: #{generator_forward.25} parent=0 // pred_region
    _
  $region13: #{generator_forward.25} parent=0 // pred_fallthru
    _
  %v14 = vld [vmem:[%s0] sm:$0xff]
  %v15 = vld [vmem:[%s0 + $0x8] sm:$0xff]
  %v16 = vld [vmem:[%s0 + $0x10] sm:$0xff]
  %v17 = vld [vmem:[%s0 + $0x18] sm:$0xff]
  %v18 = vld [vmem:[%s0 + $0x20] sm:$0xff]
  %v19 = vld [vmem:[%s0 + $0x28] sm:$0xff]
  %v20 = vld [vmem:[%s0 + $0x30] sm:$0xff]
  %v21 = vld [vmem:[%s0 + $0x38] sm:$0xff]
  %v22 = vld [vmem:[%s0 + $0x40] sm:$0xff]
  %v23 = vld [vmem:[%s0 + $0x48] sm:$0xff]
  %v24 = vld [vmem:[%s0 + $0x50] sm:$0xff]
  %v25 = vld [vmem:[%s0 + $0x58] sm:$0xff]
  %v26 = vld [vmem:[%s0 + $0x60] sm:$0xff]
  %v27 = vld [vmem:[%s0 + $0x68] sm:$0xff]
  %v28 = vld [vmem:[%s0 + $0x70] sm:$0xff]
  %v29 = vld [vmem:[%s0 + $0x78] sm:$0xff]
  %v30 = vld [vmem:[%s1] sm:$0x1]
  %v32 = vlaneseq
  %v33 = vshrl.u32 %v32, 7
  %v34 = vsub.s32 0, %v33
  %v35 = vrot.slane %v30, %v34
  %v37 = vmul.f32 %v14, %v35
  %v38 = vmul.f32 %v15, %v35
  %v39 = vmul.f32 %v16, %v35
  %v40 = vmul.f32 %v17, %v35
  %v41 = vmul.f32 %v18, %v35
  %v42 = vmul.f32 %v19, %v35
  %v43 = vmul.f32 %v20, %v35
  %v44 = vmul.f32 %v21, %v35
  %v45 = vmul.f32 %v22, %v35
  %v46 = vmul.f32 %v23, %v35
  %v47 = vmul.f32 %v24, %v35
  %v48 = vmul.f32 %v25, %v35
  %v49 = vmul.f32 %v26, %v35
  %v50 = vmul.f32 %v27, %v35
  %v51 = vmul.f32 %v28, %v35
  %v52 = vmul.f32 %v29, %v35
  %v53 = vld [vmem:[%s2] sm:$0x1]
  %v55 = vlaneseq
  %v56 = vshrl.u32 %v55, 7
  %v57 = vsub.s32 0, %v56
  %v58 = vrot.slane %v53, %v57
  %v60 = vadd.f32 %v37, %v58
  %v61 = vadd.f32 %v38, %v58
  %v62 = vadd.f32 %v39, %v58
  %v63 = vadd.f32 %v40, %v58
  %v64 = vadd.f32 %v41, %v58
  %v65 = vadd.f32 %v42, %v58
  %v66 = vadd.f32 %v43, %v58
  %v67 = vadd.f32 %v44, %v58
  %v68 = vadd.f32 %v45, %v58
  %v69 = vadd.f32 %v46, %v58
  %v70 = vadd.f32 %v47, %v58
  %v71 = vadd.f32 %v48, %v58
  %v72 = vadd.f32 %v49, %v58
  %v73 = vadd.f32 %v50, %v58
  %v74 = vadd.f32 %v51, %v58
  %v75 = vadd.f32 %v52, %v58
  %v76 = vmax.f32 %v60, 0.0
  %v77 = vmax.f32 %v61, 0.0
  %v78 = vmax.f32 %v62, 0.0
  %v79 = vmax.f32 %v63, 0.0
  %v80 = vmax.f32 %v64, 0.0
  %v81 = vmax.f32 %v65, 0.0
  %v82 = vmax.f32 %v66, 0.0
  %v83 = vmax.f32 %v67, 0.0
  %v84 = vmax.f32 %v68, 0.0
  %v85 = vmax.f32 %v69, 0.0
  %v86 = vmax.f32 %v70, 0.0
  %v87 = vmax.f32 %v71, 0.0
  %v88 = vmax.f32 %v72, 0.0
  %v89 = vmax.f32 %v73, 0.0
  %v90 = vmax.f32 %v74, 0.0
  %v91 = vmax.f32 %v75, 0.0
  %v92 = vpack.c.bf16 %v77, %v76
  %v93 = vpack.c.bf16 %v79, %v78
  %v94 = vpack.c.bf16 %v81, %v80
  %v95 = vpack.c.bf16 %v83, %v82
  %v96 = vpack.c.bf16 %v85, %v84
  %v97 = vpack.c.bf16 %v87, %v86
  %v98 = vpack.c.bf16 %v89, %v88
  %v99 = vpack.c.bf16 %v91, %v90
  %v108 = vunpack.c.l.b16 %v92
  %v109 = vunpack.c.h.b16 %v92
  %v110 = vunpack.c.l.b16 %v93
  %v111 = vunpack.c.h.b16 %v93
  %v112 = vunpack.c.l.b16 %v94
  %v113 = vunpack.c.h.b16 %v94
  %v114 = vunpack.c.l.b16 %v95
  %v115 = vunpack.c.h.b16 %v95
  %v116 = vunpack.c.l.b16 %v96
  %v117 = vunpack.c.h.b16 %v96
  %v118 = vunpack.c.l.b16 %v97
  %v119 = vunpack.c.h.b16 %v97
  %v120 = vunpack.c.l.b16 %v98
  %v121 = vunpack.c.h.b16 %v98
  %v122 = vunpack.c.l.b16 %v99
  %v123 = vunpack.c.h.b16 %v99
  %v124 = vpack.c.b16 %v108, %v108
  %v125 = vpack.c.b16 %v109, %v109
  %v126 = vpack.c.b16 %v110, %v110
  %v127 = vpack.c.b16 %v111, %v111
  %v128 = vpack.c.b16 %v112, %v112
  %v129 = vpack.c.b16 %v113, %v113
  %v130 = vpack.c.b16 %v114, %v114
  %v131 = vpack.c.b16 %v115, %v115
  %v132 = vpack.c.b16 %v116, %v116
  %v133 = vpack.c.b16 %v117, %v117
  %v134 = vpack.c.b16 %v118, %v118
  %v135 = vpack.c.b16 %v119, %v119
  %v136 = vpack.c.b16 %v120, %v120
  %v137 = vpack.c.b16 %v121, %v121
  %v138 = vpack.c.b16 %v122, %v122
  %v139 = vpack.c.b16 %v123, %v123
  %156 = vst [vmem:[%s3] sm:$0xf] %v124
  %157 = vst [vmem:[%s3 + $0x4] sm:$0xf] %v125
  %158 = vst [vmem:[%s3 + $0x8] sm:$0xf] %v126
  %159 = vst [vmem:[%s3 + $0xc] sm:$0xf] %v127
  %160 = vst [vmem:[%s3 + $0x10] sm:$0xf] %v128
  %161 = vst [vmem:[%s3 + $0x14] sm:$0xf] %v129
  %162 = vst [vmem:[%s3 + $0x18] sm:$0xf] %v130
  %163 = vst [vmem:[%s3 + $0x1c] sm:$0xf] %v131
  %164 = vst [vmem:[%s3 + $0x20] sm:$0xf] %v132
  %165 = vst [vmem:[%s3 + $0x24] sm:$0xf] %v133
  %166 = vst [vmem:[%s3 + $0x28] sm:$0xf] %v134
  %167 = vst [vmem:[%s3 + $0x2c] sm:$0xf] %v135
  %168 = vst [vmem:[%s3 + $0x30] sm:$0xf] %v136
  %169 = vst [vmem:[%s3 + $0x34] sm:$0xf] %v137
  %170 = vst [vmem:[%s3 + $0x38] sm:$0xf] %v138
  %171 = vst [vmem:[%s3 + $0x3c] sm:$0xf] %v139
  // Predicated region
  $region14: #{generator_forward.25} parent=0 // pred_check
    _
  $region15: #{generator_forward.25} parent=0 // pred_check_branch
    %173 = sbr.rel (0) target = $region17
  $region16: #{generator_forward.25} parent=0 // pred_region
    _
  $region17: #{generator_forward.25} parent=0 // pred_fallthru
    _
  // Predicated region
  $region18: #{generator_forward.25} parent=0 // pred_check
    _
  $region19: #{generator_forward.25} parent=0 // pred_check_branch
    %175 = sbr.rel (0) target = $region21
  $region20: #{generator_forward.25} parent=0 // pred_region
    _
  $region21: #{generator_forward.25} parent=0 // pred_fallthru
    _

// kernel: generator_forward.26
$region0: #{generator_forward.26}
  #allocation0 [shape = 'u32[]', space=smem, size = 0x4, offset = 0x4, fixed_abs, tag = 'smem constant byte address 0x4 - core index']
  #allocation1 [shape = 'u32[144,128]{1,0:T(1,128)}', space=vmem, size = 0x12000, scoped, tag = 'internal scratch']
  %s0 = inlined_call_operand.vmem [shape: bf16[2048,8], index: 0, kind: input, shape index: {}]
  %s1 = inlined_call_operand.vmem [shape: bf16[8,48], index: 1, kind: input, shape index: {}]
  %s2 = inlined_call_operand.vmem [shape: f32[2048,48], index: 2, kind: output, shape index: {}]
  %s3 = sld [smem:[#allocation0]]
  $region41: #{generator_forward.26} parent=0
    _
  %s5 = ssub.s32 1, %s3
  %s6 = scalar_select 0, %s5, %s3
  loop: start=0, step=1, limit=4
  $region2: #{generator_forward.26} parent=0 // loop_pre_header
    _
  $region3: #{generator_forward.26} parent=0 // loop_header
    %s8 = sphi 0, %s12
    %p9 = scmp.ge.s32.totalorder %s8, 4
    %s18 = sphi 0, %s20
    %s21 = sphi 0, %s18
    %s22 = sphi 0, %s21
    %s38 = sphi 0, %s22
    %s42 = sphi 0, %s42
    %s44 = sphi 0, %s42
    %s45 = sphi 0, %s44
    %s59 = sphi 0, %s45
    %s65 = sphi 0, %s67
    %s68 = sphi 0, %s65
    %s69 = sphi 0, %s68
    %s85 = sphi 0, %s69
  $region4: #{generator_forward.26} parent=0 // loop_header_branch
    %11 = sbr.rel (%p9) target = $region8
  $region5: #{generator_forward.26} parent=0 // loop_body
    %s13 = ssub.s32 %s8, 1
    %s14 = ssub.s32 %s8, 2
    %s15 = sadd.s32 %s8, 1
    %s16 = ssub.s32 %s8, %s15
    %p17 = scmp.eq.s32.totalorder %s16, 0
    %s19 = sadd.s32 %s18, 1
    %s20 = scalar_select %p17, %s18, %s19
    %p23 = pneg %p17
    %p24 = scmp.eq.s32.totalorder %s8, 1
    %p25 = por %p23, %p24
    %p26 = scmp.ne.s32.totalorder %s18, %s21
    %p27 = scmp.eq.s32.totalorder %s8, 0
    %p28 = por %p26, %p27
    %p29 = scmp.ne.s32.totalorder %s18, %s21
    %p30 = scmp.eq.s32.totalorder %s13, 1
    %p31 = por %p29, %p30
    %p32 = scmp.ne.s32.totalorder %s21, %s22
    %p33 = scmp.eq.s32.totalorder %s13, 0
    %p34 = por %p32, %p33
    %p35 = scmp.ne.s32.totalorder %s21, %s22
    %p36 = scmp.eq.s32.totalorder %s14, 1
    %p37 = por %p35, %p36
    %p39 = scmp.ne.s32.totalorder %s22, %s38
    %p40 = scmp.eq.s32.totalorder %s14, 0
    %p41 = por %p39, %p40
    %s43 = sadd.s32 %s42, 1
    %p46 = scmp.eq.s32.totalorder %s8, 1
    %p47 = scmp.ne.s32.totalorder %s42, %s44
    %p48 = scmp.eq.s32.totalorder %s8, 0
    %p49 = por %p47, %p48
    %p50 = scmp.ne.s32.totalorder %s42, %s44
    %p51 = scmp.eq.s32.totalorder %s13, 1
    %p52 = por %p50, %p51
    %p53 = scmp.ne.s32.totalorder %s44, %s45
    %p54 = scmp.eq.s32.totalorder %s13, 0
    %p55 = por %p53, %p54
    %p56 = scmp.ne.s32.totalorder %s44, %s45
    %p57 = scmp.eq.s32.totalorder %s14, 1
    %p58 = por %p56, %p57
    %p60 = scmp.ne.s32.totalorder %s45, %s59
    %p61 = scmp.eq.s32.totalorder %s14, 0
    %p62 = por %p60, %p61
    %s63 = ssub.s32 %s8, %s15
    %p64 = scmp.eq.s32.totalorder %s63, 0
    %s66 = sadd.s32 %s65, 1
    %s67 = scalar_select %p64, %s65, %s66
    %p70 = pneg %p64
    %p71 = scmp.eq.s32.totalorder %s8, 1
    %p72 = por %p70, %p71
    %p73 = scmp.ne.s32.totalorder %s65, %s68
    %p74 = scmp.eq.s32.totalorder %s8, 0
    %p75 = por %p73, %p74
    %p76 = scmp.ne.s32.totalorder %s65, %s68
    %p77 = scmp.eq.s32.totalorder %s13, 1
    %p78 = por %p76, %p77
    %p79 = scmp.ne.s32.totalorder %s68, %s69
    %p80 = scmp.eq.s32.totalorder %s13, 0
    %p81 = por %p79, %p80
    %p82 = scmp.ne.s32.totalorder %s68, %s69
    %p83 = scmp.eq.s32.totalorder %s14, 1
    %p84 = por %p82, %p83
    %p86 = scmp.ne.s32.totalorder %s69, %s85
    %p87 = scmp.eq.s32.totalorder %s14, 0
    %p88 = por %p86, %p87
    %p89 = scmp.le.s32.totalorder 1, %s8
    %p90 = scmp.lt.s32.totalorder %s8, 3
    %p91 = pnand %p89, %p90
    %p92 = pneg %p91
    // Predicated region
    $region9: #{generator_forward.26} parent=5 // pred_check
      _
    $region10: #{generator_forward.26} parent=5 // pred_check_branch
      %94 = sbr.rel (%p91) target = $region12
    $region11: #{generator_forward.26} parent=5 // pred_region
      %s95 = ssub.s32 %s8, 1
      // Predicated region
      $region13: #{generator_forward.26} parent=11 // pred_check
        %p96 = pneg %p55
      $region14: #{generator_forward.26} parent=11 // pred_check_branch
        %98 = sbr.rel (%p96) target = $region16
      $region15: #{generator_forward.26} parent=11 // pred_region
        _
      $region16: #{generator_forward.26} parent=11 // pred_fallthru
        _
    $region12: #{generator_forward.26} parent=5 // pred_fallthru
      _
    %p99 = scmp.lt.s32.totalorder %s8, 2
    // Predicated region
    $region17: #{generator_forward.26} parent=5 // pred_check
      %p100 = pneg %p99
    $region18: #{generator_forward.26} parent=5 // pred_check_branch
      %102 = sbr.rel (%p100) target = $region20
    $region19: #{generator_forward.26} parent=5 // pred_region
      // Predicated region
      $region21: #{generator_forward.26} parent=19 // pred_check
        %p103 = pneg %p28
      $region22: #{generator_forward.26} parent=19 // pred_check_branch
        %105 = sbr.rel (%p103) target = $region24
      $region23: #{generator_forward.26} parent=19 // pred_region
        %s106 = smul.u32 128, %s8
        %p107 = scmp.lt.s32.totalorder %s106, 255
        %s108 = scalar_select %p107, %s106, 255
        %s109 = smul.addr %s108, 4
        %s110 = scalar_lea.vmem %s0, %s109
        %s111 = smul.u32 128, %s8
      $region24: #{generator_forward.26} parent=19 // pred_fallthru
        _
    $region20: #{generator_forward.26} parent=5 // pred_fallthru
      _
    %p112 = scmp.le.s32.totalorder 1, %s8
    %p113 = scmp.lt.s32.totalorder %s8, 3
    %p114 = pnand %p112, %p113
    %p115 = pneg %p114
    // Predicated region
    $region25: #{generator_forward.26} parent=5 // pred_check
      _
    $region26: #{generator_forward.26} parent=5 // pred_check_branch
      %117 = sbr.rel (%p114) target = $region28
    $region27: #{generator_forward.26} parent=5 // pred_region
      %s118 = ssub.s32 %s8, 1
      %s119 = smul.u32 128, %s13
      %p120 = scmp.lt.s32.totalorder %s119, 255
      %s121 = scalar_select %p120, %s119, 255
      %s122 = smul.addr %s121, 4
      %s123 = scalar_lea.vmem %s0, %s122
      %p124 = pneg %p34
      %p125 = pneg %p31
      %p126 = pneg %p55
      %p127 = pneg %p52
      %p128 = pneg %p81
      %p129 = pneg %p78
      %s130 = smul.u32 128, %s13
      %p131 = scmp.lt.s32.totalorder %s130, 255
      %s132 = scalar_select %p131, %s130, 255
      %s133 = smul.addr %s132, 8
      %s134 = scalar_lea.vmem %s2, %s133
      %s135 = smul.u32 128, %s13
      %p136 = scmp.lt.s32.totalorder %s135, 255
      %s137 = scalar_select %p136, %s135, 255
      %s138 = smul.addr %s137, 4
      %s139 = scalar_lea.vmem %s0, %s138
      %s140 = smul.u32 128, %s13
      %s141 = smul.u32 128, %s13
      %p142 = scmp.lt.s32.totalorder %s141, 255
      %s143 = scalar_select %p142, %s141, 255
      %s144 = smul.addr %s143, 8
      %s145 = scalar_lea.vmem %s2, %s144
      %s146 = smul.u32 128, %s13
      %v148 = vld [vmem:[%s139] sm:$0xf]
      %v149 = vld [vmem:[%s139 + $0x4] sm:$0xf]
      %v150 = vld [vmem:[%s139 + $0x8] sm:$0xf]
      %v151 = vld [vmem:[%s139 + $0xc] sm:$0xf]
      %v152 = vld [vmem:[%s139 + $0x10] sm:$0xf]
      %v153 = vld [vmem:[%s139 + $0x14] sm:$0xf]
      %v154 = vld [vmem:[%s139 + $0x18] sm:$0xf]
      %v155 = vld [vmem:[%s139 + $0x1c] sm:$0xf]
      %v156 = vld [vmem:[%s139 + $0x20] sm:$0xf]
      %v157 = vld [vmem:[%s139 + $0x24] sm:$0xf]
      %v158 = vld [vmem:[%s139 + $0x28] sm:$0xf]
      %v159 = vld [vmem:[%s139 + $0x2c] sm:$0xf]
      %v160 = vld [vmem:[%s139 + $0x30] sm:$0xf]
      %v161 = vld [vmem:[%s139 + $0x34] sm:$0xf]
      %v162 = vld [vmem:[%s139 + $0x38] sm:$0xf]
      %v163 = vld [vmem:[%s139 + $0x3c] sm:$0xf]
      %v164 = vld [vmem:[%s139 + $0x40] sm:$0xf]
      %v165 = vld [vmem:[%s139 + $0x44] sm:$0xf]
      %v166 = vld [vmem:[%s139 + $0x48] sm:$0xf]
      %v167 = vld [vmem:[%s139 + $0x4c] sm:$0xf]
      %v168 = vld [vmem:[%s139 + $0x50] sm:$0xf]
      %v169 = vld [vmem:[%s139 + $0x54] sm:$0xf]
      %v170 = vld [vmem:[%s139 + $0x58] sm:$0xf]
      %v171 = vld [vmem:[%s139 + $0x5c] sm:$0xf]
      %v172 = vld [vmem:[%s139 + $0x60] sm:$0xf]
      %v173 = vld [vmem:[%s139 + $0x64] sm:$0xf]
      %v174 = vld [vmem:[%s139 + $0x68] sm:$0xf]
      %v175 = vld [vmem:[%s139 + $0x6c] sm:$0xf]
      %v176 = vld [vmem:[%s139 + $0x70] sm:$0xf]
      %v177 = vld [vmem:[%s139 + $0x74] sm:$0xf]
      %v178 = vld [vmem:[%s139 + $0x78] sm:$0xf]
      %v179 = vld [vmem:[%s139 + $0x7c] sm:$0xf]
      %v180 = vld [vmem:[%s139 + $0x80] sm:$0xf]
      %v181 = vld [vmem:[%s139 + $0x84] sm:$0xf]
      %v182 = vld [vmem:[%s139 + $0x88] sm:$0xf]
      %v183 = vld [vmem:[%s139 + $0x8c] sm:$0xf]
      %v184 = vld [vmem:[%s139 + $0x90] sm:$0xf]
      %v185 = vld [vmem:[%s139 + $0x94] sm:$0xf]
      %v186 = vld [vmem:[%s139 + $0x98] sm:$0xf]
      %v187 = vld [vmem:[%s139 + $0x9c] sm:$0xf]
      %v188 = vld [vmem:[%s139 + $0xa0] sm:$0xf]
      %v189 = vld [vmem:[%s139 + $0xa4] sm:$0xf]
      %v190 = vld [vmem:[%s139 + $0xa8] sm:$0xf]
      %v191 = vld [vmem:[%s139 + $0xac] sm:$0xf]
      %v192 = vld [vmem:[%s139 + $0xb0] sm:$0xf]
      %v193 = vld [vmem:[%s139 + $0xb4] sm:$0xf]
      %v194 = vld [vmem:[%s139 + $0xb8] sm:$0xf]
      %v195 = vld [vmem:[%s139 + $0xbc] sm:$0xf]
      %v196 = vld [vmem:[%s139 + $0xc0] sm:$0xf]
      %v197 = vld [vmem:[%s139 + $0xc4] sm:$0xf]
      %v198 = vld [vmem:[%s139 + $0xc8] sm:$0xf]
      %v199 = vld [vmem:[%s139 + $0xcc] sm:$0xf]
      %v200 = vld [vmem:[%s139 + $0xd0] sm:$0xf]
      %v201 = vld [vmem:[%s139 + $0xd4] sm:$0xf]
      %v202 = vld [vmem:[%s139 + $0xd8] sm:$0xf]
      %v203 = vld [vmem:[%s139 + $0xdc] sm:$0xf]
      %v204 = vld [vmem:[%s139 + $0xe0] sm:$0xf]
      %v205 = vld [vmem:[%s139 + $0xe4] sm:$0xf]
      %v206 = vld [vmem:[%s139 + $0xe8] sm:$0xf]
      %v207 = vld [vmem:[%s139 + $0xec] sm:$0xf]
      %v208 = vld [vmem:[%s139 + $0xf0] sm:$0xf]
      %v209 = vld [vmem:[%s139 + $0xf4] sm:$0xf]
      %v210 = vld [vmem:[%s139 + $0xf8] sm:$0xf]
      %v211 = vld [vmem:[%s139 + $0xfc] sm:$0xf]
      %v212 = vld [vmem:[%s139 + $0x100] sm:$0xf]
      %v213 = vld [vmem:[%s139 + $0x104] sm:$0xf]
      %v214 = vld [vmem:[%s139 + $0x108] sm:$0xf]
      %v215 = vld [vmem:[%s139 + $0x10c] sm:$0xf]
      %v216 = vld [vmem:[%s139 + $0x110] sm:$0xf]
      %v217 = vld [vmem:[%s139 + $0x114] sm:$0xf]
      %v218 = vld [vmem:[%s139 + $0x118] sm:$0xf]
      %v219 = vld [vmem:[%s139 + $0x11c] sm:$0xf]
      %v220 = vld [vmem:[%s139 + $0x120] sm:$0xf]
      %v221 = vld [vmem:[%s139 + $0x124] sm:$0xf]
      %v222 = vld [vmem:[%s139 + $0x128] sm:$0xf]
      %v223 = vld [vmem:[%s139 + $0x12c] sm:$0xf]
      %v224 = vld [vmem:[%s139 + $0x130] sm:$0xf]
      %v225 = vld [vmem:[%s139 + $0x134] sm:$0xf]
      %v226 = vld [vmem:[%s139 + $0x138] sm:$0xf]
      %v227 = vld [vmem:[%s139 + $0x13c] sm:$0xf]
      %v228 = vld [vmem:[%s139 + $0x140] sm:$0xf]
      %v229 = vld [vmem:[%s139 + $0x144] sm:$0xf]
      %v230 = vld [vmem:[%s139 + $0x148] sm:$0xf]
      %v231 = vld [vmem:[%s139 + $0x14c] sm:$0xf]
      %v232 = vld [vmem:[%s139 + $0x150] sm:$0xf]
      %v233 = vld [vmem:[%s139 + $0x154] sm:$0xf]
      %v234 = vld [vmem:[%s139 + $0x158] sm:$0xf]
      %v235 = vld [vmem:[%s139 + $0x15c] sm:$0xf]
      %v236 = vld [vmem:[%s139 + $0x160] sm:$0xf]
      %v237 = vld [vmem:[%s139 + $0x164] sm:$0xf]
      %v238 = vld [vmem:[%s139 + $0x168] sm:$0xf]
      %v239 = vld [vmem:[%s139 + $0x16c] sm:$0xf]
      %v240 = vld [vmem:[%s139 + $0x170] sm:$0xf]
      %v241 = vld [vmem:[%s139 + $0x174] sm:$0xf]
      %v242 = vld [vmem:[%s139 + $0x178] sm:$0xf]
      %v243 = vld [vmem:[%s139 + $0x17c] sm:$0xf]
      %v244 = vld [vmem:[%s139 + $0x180] sm:$0xf]
      %v245 = vld [vmem:[%s139 + $0x184] sm:$0xf]
      %v246 = vld [vmem:[%s139 + $0x188] sm:$0xf]
      %v247 = vld [vmem:[%s139 + $0x18c] sm:$0xf]
      %v248 = vld [vmem:[%s139 + $0x190] sm:$0xf]
      %v249 = vld [vmem:[%s139 + $0x194] sm:$0xf]
      %v250 = vld [vmem:[%s139 + $0x198] sm:$0xf]
      %v251 = vld [vmem:[%s139 + $0x19c] sm:$0xf]
      %v252 = vld [vmem:[%s139 + $0x1a0] sm:$0xf]
      %v253 = vld [vmem:[%s139 + $0x1a4] sm:$0xf]
      %v254 = vld [vmem:[%s139 + $0x1a8] sm:$0xf]
      %v255 = vld [vmem:[%s139 + $0x1ac] sm:$0xf]
      %v256 = vld [vmem:[%s139 + $0x1b0] sm:$0xf]
      %v257 = vld [vmem:[%s139 + $0x1b4] sm:$0xf]
      %v258 = vld [vmem:[%s139 + $0x1b8] sm:$0xf]
      %v259 = vld [vmem:[%s139 + $0x1bc] sm:$0xf]
      %v260 = vld [vmem:[%s139 + $0x1c0] sm:$0xf]
      %v261 = vld [vmem:[%s139 + $0x1c4] sm:$0xf]
      %v262 = vld [vmem:[%s139 + $0x1c8] sm:$0xf]
      %v263 = vld [vmem:[%s139 + $0x1cc] sm:$0xf]
      %v264 = vld [vmem:[%s139 + $0x1d0] sm:$0xf]
      %v265 = vld [vmem:[%s139 + $0x1d4] sm:$0xf]
      %v266 = vld [vmem:[%s139 + $0x1d8] sm:$0xf]
      %v267 = vld [vmem:[%s139 + $0x1dc] sm:$0xf]
      %v268 = vld [vmem:[%s139 + $0x1e0] sm:$0xf]
      %v269 = vld [vmem:[%s139 + $0x1e4] sm:$0xf]
      %v270 = vld [vmem:[%s139 + $0x1e8] sm:$0xf]
      %v271 = vld [vmem:[%s139 + $0x1ec] sm:$0xf]
      %v272 = vld [vmem:[%s139 + $0x1f0] sm:$0xf]
      %v273 = vld [vmem:[%s139 + $0x1f4] sm:$0xf]
      %v274 = vld [vmem:[%s139 + $0x1f8] sm:$0xf]
      %v275 = vld [vmem:[%s139 + $0x1fc] sm:$0xf]
      %v276 = vld [vmem:[%s1] sm:$0xf]
      %v405 = vunpack.c.l.b16 %v148
      %v406 = vunpack.c.l.b16 %v149
      %v407 = vunpack.c.l.b16 %v150
      %v408 = vunpack.c.l.b16 %v151
      %v409 = vunpack.c.l.b16 %v152
      %v410 = vunpack.c.l.b16 %v153
      %v411 = vunpack.c.l.b16 %v154
      %v412 = vunpack.c.l.b16 %v155
      %v413 = vunpack.c.l.b16 %v156
      %v414 = vunpack.c.l.b16 %v157
      %v415 = vunpack.c.l.b16 %v158
      %v416 = vunpack.c.l.b16 %v159
      %v417 = vunpack.c.l.b16 %v160
      %v418 = vunpack.c.l.b16 %v161
      %v419 = vunpack.c.l.b16 %v162
      %v420 = vunpack.c.l.b16 %v163
      %v421 = vunpack.c.l.b16 %v164
      %v422 = vunpack.c.l.b16 %v165
      %v423 = vunpack.c.l.b16 %v166
      %v424 = vunpack.c.l.b16 %v167
      %v425 = vunpack.c.l.b16 %v168
      %v426 = vunpack.c.l.b16 %v169
      %v427 = vunpack.c.l.b16 %v170
      %v428 = vunpack.c.l.b16 %v171
      %v429 = vunpack.c.l.b16 %v172
      %v430 = vunpack.c.l.b16 %v173
      %v431 = vunpack.c.l.b16 %v174
      %v432 = vunpack.c.l.b16 %v175
      %v433 = vunpack.c.l.b16 %v176
      %v434 = vunpack.c.l.b16 %v177
      %v435 = vunpack.c.l.b16 %v178
      %v436 = vunpack.c.l.b16 %v179
      %v437 = vunpack.c.l.b16 %v180
      %v438 = vunpack.c.l.b16 %v181
      %v439 = vunpack.c.l.b16 %v182
      %v440 = vunpack.c.l.b16 %v183
      %v441 = vunpack.c.l.b16 %v184
      %v442 = vunpack.c.l.b16 %v185
      %v443 = vunpack.c.l.b16 %v186
      %v444 = vunpack.c.l.b16 %v187
      %v445 = vunpack.c.l.b16 %v188
      %v446 = vunpack.c.l.b16 %v189
      %v447 = vunpack.c.l.b16 %v190
      %v448 = vunpack.c.l.b16 %v191
      %v449 = vunpack.c.l.b16 %v192
      %v450 = vunpack.c.l.b16 %v193
      %v451 = vunpack.c.l.b16 %v194
      %v452 = vunpack.c.l.b16 %v195
      %v453 = vunpack.c.l.b16 %v196
      %v454 = vunpack.c.l.b16 %v197
      %v455 = vunpack.c.l.b16 %v198
      %v456 = vunpack.c.l.b16 %v199
      %v457 = vunpack.c.l.b16 %v200
      %v458 = vunpack.c.l.b16 %v201
      %v459 = vunpack.c.l.b16 %v202
      %v460 = vunpack.c.l.b16 %v203
      %v461 = vunpack.c.l.b16 %v204
      %v462 = vunpack.c.l.b16 %v205
      %v463 = vunpack.c.l.b16 %v206
      %v464 = vunpack.c.l.b16 %v207
      %v465 = vunpack.c.l.b16 %v208
      %v466 = vunpack.c.l.b16 %v209
      %v467 = vunpack.c.l.b16 %v210
      %v468 = vunpack.c.l.b16 %v211
      %v469 = vunpack.c.l.b16 %v212
      %v470 = vunpack.c.l.b16 %v213
      %v471 = vunpack.c.l.b16 %v214
      %v472 = vunpack.c.l.b16 %v215
      %v473 = vunpack.c.l.b16 %v216
      %v474 = vunpack.c.l.b16 %v217
      %v475 = vunpack.c.l.b16 %v218
      %v476 = vunpack.c.l.b16 %v219
      %v477 = vunpack.c.l.b16 %v220
      %v478 = vunpack.c.l.b16 %v221
      %v479 = vunpack.c.l.b16 %v222
      %v480 = vunpack.c.l.b16 %v223
      %v481 = vunpack.c.l.b16 %v224
      %v482 = vunpack.c.l.b16 %v225
      %v483 = vunpack.c.l.b16 %v226
      %v484 = vunpack.c.l.b16 %v227
      %v485 = vunpack.c.l.b16 %v228
      %v486 = vunpack.c.l.b16 %v229
      %v487 = vunpack.c.l.b16 %v230
      %v488 = vunpack.c.l.b16 %v231
      %v489 = vunpack.c.l.b16 %v232
      %v490 = vunpack.c.l.b16 %v233
      %v491 = vunpack.c.l.b16 %v234
      %v492 = vunpack.c.l.b16 %v235
      %v493 = vunpack.c.l.b16 %v236
      %v494 = vunpack.c.l.b16 %v237
      %v495 = vunpack.c.l.b16 %v238
      %v496 = vunpack.c.l.b16 %v239
      %v497 = vunpack.c.l.b16 %v240
      %v498 = vunpack.c.l.b16 %v241
      %v499 = vunpack.c.l.b16 %v242
      %v500 = vunpack.c.l.b16 %v243
      %v501 = vunpack.c.l.b16 %v244
      %v502 = vunpack.c.l.b16 %v245
      %v503 = vunpack.c.l.b16 %v246
      %v504 = vunpack.c.l.b16 %v247
      %v505 = vunpack.c.l.b16 %v248
      %v506 = vunpack.c.l.b16 %v249
      %v507 = vunpack.c.l.b16 %v250
      %v508 = vunpack.c.l.b16 %v251
      %v509 = vunpack.c.l.b16 %v252
      %v510 = vunpack.c.l.b16 %v253
      %v511 = vunpack.c.l.b16 %v254
      %v512 = vunpack.c.l.b16 %v255
      %v513 = vunpack.c.l.b16 %v256
      %v514 = vunpack.c.l.b16 %v257
      %v515 = vunpack.c.l.b16 %v258
      %v516 = vunpack.c.l.b16 %v259
      %v517 = vunpack.c.l.b16 %v260
      %v518 = vunpack.c.l.b16 %v261
      %v519 = vunpack.c.l.b16 %v262
      %v520 = vunpack.c.l.b16 %v263
      %v521 = vunpack.c.l.b16 %v264
      %v522 = vunpack.c.l.b16 %v265
      %v523 = vunpack.c.l.b16 %v266
      %v524 = vunpack.c.l.b16 %v267
      %v525 = vunpack.c.l.b16 %v268
      %v526 = vunpack.c.l.b16 %v269
      %v527 = vunpack.c.l.b16 %v270
      %v528 = vunpack.c.l.b16 %v271
      %v529 = vunpack.c.l.b16 %v272
      %v530 = vunpack.c.l.b16 %v273
      %v531 = vunpack.c.l.b16 %v274
      %v532 = vunpack.c.l.b16 %v275
      %v533 = vpack.c.b16 %v406, %v405
      %v534 = vpack.c.b16 %v408, %v407
      %v535 = vpack.c.b16 %v410, %v409
      %v536 = vpack.c.b16 %v412, %v411
      %v537 = vpack.c.b16 %v414, %v413
      %v538 = vpack.c.b16 %v416, %v415
      %v539 = vpack.c.b16 %v418, %v417
      %v540 = vpack.c.b16 %v420, %v419
      %v541 = vpack.c.b16 %v422, %v421
      %v542 = vpack.c.b16 %v424, %v423
      %v543 = vpack.c.b16 %v426, %v425
      %v544 = vpack.c.b16 %v428, %v427
      %v545 = vpack.c.b16 %v430, %v429
      %v546 = vpack.c.b16 %v432, %v431
      %v547 = vpack.c.b16 %v434, %v433
      %v548 = vpack.c.b16 %v436, %v435
      %v549 = vpack.c.b16 %v438, %v437
      %v550 = vpack.c.b16 %v440, %v439
      %v551 = vpack.c.b16 %v442, %v441
      %v552 = vpack.c.b16 %v444, %v443
      %v553 = vpack.c.b16 %v446, %v445
      %v554 = vpack.c.b16 %v448, %v447
      %v555 = vpack.c.b16 %v450, %v449
      %v556 = vpack.c.b16 %v452, %v451
      %v557 = vpack.c.b16 %v454, %v453
      %v558 = vpack.c.b16 %v456, %v455
      %v559 = vpack.c.b16 %v458, %v457
      %v560 = vpack.c.b16 %v460, %v459
      %v561 = vpack.c.b16 %v462, %v461
      %v562 = vpack.c.b16 %v464, %v463
      %v563 = vpack.c.b16 %v466, %v465
      %v564 = vpack.c.b16 %v468, %v467
      %v565 = vpack.c.b16 %v470, %v469
      %v566 = vpack.c.b16 %v472, %v471
      %v567 = vpack.c.b16 %v474, %v473
      %v568 = vpack.c.b16 %v476, %v475
      %v569 = vpack.c.b16 %v478, %v477
      %v570 = vpack.c.b16 %v480, %v479
      %v571 = vpack.c.b16 %v482, %v481
      %v572 = vpack.c.b16 %v484, %v483
      %v573 = vpack.c.b16 %v486, %v485
      %v574 = vpack.c.b16 %v488, %v487
      %v575 = vpack.c.b16 %v490, %v489
      %v576 = vpack.c.b16 %v492, %v491
      %v577 = vpack.c.b16 %v494, %v493
      %v578 = vpack.c.b16 %v496, %v495
      %v579 = vpack.c.b16 %v498, %v497
      %v580 = vpack.c.b16 %v500, %v499
      %v581 = vpack.c.b16 %v502, %v501
      %v582 = vpack.c.b16 %v504, %v503
      %v583 = vpack.c.b16 %v506, %v505
      %v584 = vpack.c.b16 %v508, %v507
      %v585 = vpack.c.b16 %v510, %v509
      %v586 = vpack.c.b16 %v512, %v511
      %v587 = vpack.c.b16 %v514, %v513
      %v588 = vpack.c.b16 %v516, %v515
      %v589 = vpack.c.b16 %v518, %v517
      %v590 = vpack.c.b16 %v520, %v519
      %v591 = vpack.c.b16 %v522, %v521
      %v592 = vpack.c.b16 %v524, %v523
      %v593 = vpack.c.b16 %v526, %v525
      %v594 = vpack.c.b16 %v528, %v527
      %v595 = vpack.c.b16 %v530, %v529
      %v596 = vpack.c.b16 %v532, %v531
      %vm597 = vcmask 64512
      %v599 = vsel %vm597, %v533, 0
      %v602 = vsel %vm597, %v534, 0
      %v605 = vsel %vm597, %v535, 0
      %v608 = vsel %vm597, %v536, 0
      %v611 = vsel %vm597, %v537, 0
      %v614 = vsel %vm597, %v538, 0
      %v617 = vsel %vm597, %v539, 0
      %v620 = vsel %vm597, %v540, 0
      %v623 = vsel %vm597, %v541, 0
      %v626 = vsel %vm597, %v542, 0
      %v629 = vsel %vm597, %v543, 0
      %v632 = vsel %vm597, %v544, 0
      %v635 = vsel %vm597, %v545, 0
      %v638 = vsel %vm597, %v546, 0
      %v641 = vsel %vm597, %v547, 0
      %v644 = vsel %vm597, %v548, 0
      %v647 = vsel %vm597, %v549, 0
      %v650 = vsel %vm597, %v550, 0
      %v653 = vsel %vm597, %v551, 0
      %v656 = vsel %vm597, %v552, 0
      %v659 = vsel %vm597, %v553, 0
      %v662 = vsel %vm597, %v554, 0
      %v665 = vsel %vm597, %v555, 0
      %v668 = vsel %vm597, %v556, 0
      %v671 = vsel %vm597, %v557, 0
      %v674 = vsel %vm597, %v558, 0
      %v677 = vsel %vm597, %v559, 0
      %v680 = vsel %vm597, %v560, 0
      %v683 = vsel %vm597, %v561, 0
      %v686 = vsel %vm597, %v562, 0
      %v689 = vsel %vm597, %v563, 0
      %v692 = vsel %vm597, %v564, 0
      %v695 = vsel %vm597, %v565, 0
      %v698 = vsel %vm597, %v566, 0
      %v701 = vsel %vm597, %v567, 0
      %v704 = vsel %vm597, %v568, 0
      %v707 = vsel %vm597, %v569, 0
      %v710 = vsel %vm597, %v570, 0
      %v713 = vsel %vm597, %v571, 0
      %v716 = vsel %vm597, %v572, 0
      %v719 = vsel %vm597, %v573, 0
      %v722 = vsel %vm597, %v574, 0
      %v725 = vsel %vm597, %v575, 0
      %v728 = vsel %vm597, %v576, 0
      %v731 = vsel %vm597, %v577, 0
      %v734 = vsel %vm597, %v578, 0
      %v737 = vsel %vm597, %v579, 0
      %v740 = vsel %vm597, %v580, 0
      %v743 = vsel %vm597, %v581, 0
      %v746 = vsel %vm597, %v582, 0
      %v749 = vsel %vm597, %v583, 0
      %v752 = vsel %vm597, %v584, 0
      %v755 = vsel %vm597, %v585, 0
      %v758 = vsel %vm597, %v586, 0
      %v761 = vsel %vm597, %v587, 0
      %v764 = vsel %vm597, %v588, 0
      %v767 = vsel %vm597, %v589, 0
      %v770 = vsel %vm597, %v590, 0
      %v773 = vsel %vm597, %v591, 0
      %v776 = vsel %vm597, %v592, 0
      %v779 = vsel %vm597, %v593, 0
      %v782 = vsel %vm597, %v594, 0
      %v785 = vsel %vm597, %v595, 0
      %v788 = vsel %vm597, %v596, 0
      %vm790 = vcmask 1043456
      %v792 = vsel %vm790, %v276, 0
      %794 = vmatprep.subr.bf16.mxu0 0
      %795 = vmatpush1.bf16.msra.mxu0 0
      %796 = vmatprep.subr.bf16.mxu0 0
      %797 = vmatpush1.bf16.msra.mxu0 0
      %798 = vmatprep.subr.bf16.mxu0 0
      %799 = vmatpush1.bf16.msra.mxu0 0
      %800 = vmatprep.subr.bf16.mxu0 0
      %801 = vmatpush1.bf16.msra.mxu0 0
      %802 = vmatprep.subr.bf16.mxu0 0
      %803 = vmatpush1.bf16.msra.mxu0 0
      %804 = vmatprep.subr.bf16.mxu0 0
      %805 = vmatpush1.bf16.msra.mxu0 0
      %806 = vmatprep.subr.bf16.mxu0 0
      %807 = vmatpush1.bf16.msra.mxu0 0
      %808 = vmatprep.subr.bf16.mxu0 0
      %809 = vmatpush1.bf16.msra.mxu0 %v792
      %810 = vmatprep.subr.bf16.mxu0 0
      %811 = vmatpush2.bf16.msra.mxu0 0
      %812 = vmatprep.subr.bf16.mxu0 0
      %813 = vmatpush2.bf16.msra.mxu0 0
      %814 = vmatprep.subr.bf16.mxu0 0
      %815 = vmatpush2.bf16.msra.mxu0 0
      %816 = vmatprep.subr.bf16.mxu0 0
      %817 = vmatpush2.bf16.msra.mxu0 0
      %818 = vmatprep.subr.bf16.mxu0 0
      %819 = vmatpush2.bf16.msra.mxu0 0
      %820 = vmatprep.subr.bf16.mxu0 0
      %821 = vmatpush2.bf16.msra.mxu0 0
      %822 = vmatprep.subr.bf16.mxu0 0
      %823 = vmatpush2.bf16.msra.mxu0 0
      %824 = vmatprep.subr.bf16.mxu0 0
      %825 = vmatpush2.bf16.msra.mxu0 0
      %826 = vmatprep.mubr.bf16.mxu0 0
      %827 = vmatmul.mubr.bf16.gmra.mxu0 %v599
      %v828 = vpop.f32.mrf.mxu0
      %v829 = vadd.f32 0.0, %v828
      %v830 = vpop.f32.mrf.mxu0
      %v831 = vpop.f32.mrf.mxu0
      %v832 = vadd.f32 0.0, %v831
      %v833 = vpop.f32.mrf.mxu0
      %834 = vmatprep.mubr.bf16.mxu0 0
      %835 = vmatmul.mubr.bf16.gmra.mxu0 %v602
      %v836 = vpop.f32.mrf.mxu0
      %v837 = vadd.f32 0.0, %v836
      %v838 = vpop.f32.mrf.mxu0
      %v839 = vpop.f32.mrf.mxu0
      %v840 = vadd.f32 0.0, %v839
      %v841 = vpop.f32.mrf.mxu0
      %842 = vmatprep.mubr.bf16.mxu0 0
      %843 = vmatmul.mubr.bf16.gmra.mxu0 %v605
      %v844 = vpop.f32.mrf.mxu0
      %v845 = vadd.f32 0.0, %v844
      %v846 = vpop.f32.mrf.mxu0
      %v847 = vpop.f32.mrf.mxu0
      %v848 = vadd.f32 0.0, %v847
      %v849 = vpop.f32.mrf.mxu0
      %850 = vmatprep.mubr.bf16.mxu0 0
      %851 = vmatmul.mubr.bf16.gmra.mxu0 %v608
      %v852 = vpop.f32.mrf.mxu0
      %v853 = vadd.f32 0.0, %v852
      %v854 = vpop.f32.mrf.mxu0
      %v855 = vpop.f32.mrf.mxu0
      %v856 = vadd.f32 0.0, %v855
      %v857 = vpop.f32.mrf.mxu0
      %858 = vmatprep.mubr.bf16.mxu0 0
      %859 = vmatmul.mubr.bf16.gmra.mxu0 %v611
      %v860 = vpop.f32.mrf.mxu0
      %v861 = vadd.f32 0.0, %v860
      %v862 = vpop.f32.mrf.mxu0
      %v863 = vpop.f32.mrf.mxu0
      %v864 = vadd.f32 0.0, %v863
      %v865 = vpop.f32.mrf.mxu0
      %866 = vmatprep.mubr.bf16.mxu0 0
      %867 = vmatmul.mubr.bf16.gmra.mxu0 %v614
      %v868 = vpop.f32.mrf.mxu0
      %v869 = vadd.f32 0.0, %v868
      %v870 = vpop.f32.mrf.mxu0
      %v871 = vpop.f32.mrf.mxu0
      %v872 = vadd.f32 0.0, %v871
      %v873 = vpop.f32.mrf.mxu0
      %874 = vmatprep.mubr.bf16.mxu0 0
      %875 = vmatmul.mubr.bf16.gmra.mxu0 %v617
      %v876 = vpop.f32.mrf.mxu0
      %v877 = vadd.f32 0.0, %v876
      %v878 = vpop.f32.mrf.mxu0
      %v879 = vpop.f32.mrf.mxu0
      %v880 = vadd.f32 0.0, %v879
      %v881 = vpop.f32.mrf.mxu0
      %882 = vmatprep.mubr.bf16.mxu0 0
      %883 = vmatmul.mubr.bf16.gmra.mxu0 %v620
      %v884 = vpop.f32.mrf.mxu0
      %v885 = vadd.f32 0.0, %v884
      %v886 = vpop.f32.mrf.mxu0
      %v887 = vpop.f32.mrf.mxu0
      %v888 = vadd.f32 0.0, %v887
      %v889 = vpop.f32.mrf.mxu0
      %890 = vmatprep.mubr.bf16.mxu0 0
      %891 = vmatmul.mubr.bf16.gmra.mxu0 %v623
      %v892 = vpop.f32.mrf.mxu0
      %v893 = vadd.f32 0.0, %v892
      %v894 = vpop.f32.mrf.mxu0
      %v895 = vpop.f32.mrf.mxu0
      %v896 = vadd.f32 0.0, %v895
      %v897 = vpop.f32.mrf.mxu0
      %898 = vmatprep.mubr.bf16.mxu0 0
      %899 = vmatmul.mubr.bf16.gmra.mxu0 %v626
      %v900 = vpop.f32.mrf.mxu0
      %v901 = vadd.f32 0.0, %v900
      %v902 = vpop.f32.mrf.mxu0
      %v903 = vpop.f32.mrf.mxu0
      %v904 = vadd.f32 0.0, %v903
      %v905 = vpop.f32.mrf.mxu0
      %906 = vmatprep.mubr.bf16.mxu0 0
      %907 = vmatmul.mubr.bf16.gmra.mxu0 %v629
      %v908 = vpop.f32.mrf.mxu0
      %v909 = vadd.f32 0.0, %v908
      %v910 = vpop.f32.mrf.mxu0
      %v911 = vpop.f32.mrf.mxu0
      %v912 = vadd.f32 0.0, %v911
      %v913 = vpop.f32.mrf.mxu0
      %914 = vmatprep.mubr.bf16.mxu0 0
      %915 = vmatmul.mubr.bf16.gmra.mxu0 %v632
      %v916 = vpop.f32.mrf.mxu0
      %v917 = vadd.f32 0.0, %v916
      %v918 = vpop.f32.mrf.mxu0
      %v919 = vpop.f32.mrf.mxu0
      %v920 = vadd.f32 0.0, %v919
      %v921 = vpop.f32.mrf.mxu0
      %922 = vmatprep.mubr.bf16.mxu0 0
      %923 = vmatmul.mubr.bf16.gmra.mxu0 %v635
      %v924 = vpop.f32.mrf.mxu0
      %v925 = vadd.f32 0.0, %v924
      %v926 = vpop.f32.mrf.mxu0
      %v927 = vpop.f32.mrf.mxu0
      %v928 = vadd.f32 0.0, %v927
      %v929 = vpop.f32.mrf.mxu0
      %930 = vmatprep.mubr.bf16.mxu0 0
      %931 = vmatmul.mubr.bf16.gmra.mxu0 %v638
      %v932 = vpop.f32.mrf.mxu0
      %v933 = vadd.f32 0.0, %v932
      %v934 = vpop.f32.mrf.mxu0
      %v935 = vpop.f32.mrf.mxu0
      %v936 = vadd.f32 0.0, %v935
      %v937 = vpop.f32.mrf.mxu0
      %938 = vmatprep.mubr.bf16.mxu0 0
      %939 = vmatmul.mubr.bf16.gmra.mxu0 %v641
      %v940 = vpop.f32.mrf.mxu0
      %v941 = vadd.f32 0.0, %v940
      %v942 = vpop.f32.mrf.mxu0
      %v943 = vpop.f32.mrf.mxu0
      %v944 = vadd.f32 0.0, %v943
      %v945 = vpop.f32.mrf.mxu0
      %946 = vmatprep.mubr.bf16.mxu0 0
      %947 = vmatmul.mubr.bf16.gmra.mxu0 %v644
      %v948 = vpop.f32.mrf.mxu0
      %v949 = vadd.f32 0.0, %v948
      %v950 = vpop.f32.mrf.mxu0
      %v951 = vpop.f32.mrf.mxu0
      %v952 = vadd.f32 0.0, %v951
      %v953 = vpop.f32.mrf.mxu0
      %954 = vmatprep.mubr.bf16.mxu0 0
      %955 = vmatmul.mubr.bf16.gmra.mxu0 %v647
      %v956 = vpop.f32.mrf.mxu0
      %v957 = vadd.f32 0.0, %v956
      %v958 = vpop.f32.mrf.mxu0
      %v959 = vpop.f32.mrf.mxu0
      %v960 = vadd.f32 0.0, %v959
      %v961 = vpop.f32.mrf.mxu0
      %962 = vmatprep.mubr.bf16.mxu0 0
      %963 = vmatmul.mubr.bf16.gmra.mxu0 %v650
      %v964 = vpop.f32.mrf.mxu0
      %v965 = vadd.f32 0.0, %v964
      %v966 = vpop.f32.mrf.mxu0
      %v967 = vpop.f32.mrf.mxu0
      %v968 = vadd.f32 0.0, %v967
      %v969 = vpop.f32.mrf.mxu0
      %970 = vmatprep.mubr.bf16.mxu0 0
      %971 = vmatmul.mubr.bf16.gmra.mxu0 %v653
      %v972 = vpop.f32.mrf.mxu0
      %v973 = vadd.f32 0.0, %v972
      %v974 = vpop.f32.mrf.mxu0
      %v975 = vpop.f32.mrf.mxu0
      %v976 = vadd.f32 0.0, %v975
      %v977 = vpop.f32.mrf.mxu0
      %978 = vmatprep.mubr.bf16.mxu0 0
      %979 = vmatmul.mubr.bf16.gmra.mxu0 %v656
      %v980 = vpop.f32.mrf.mxu0
      %v981 = vadd.f32 0.0, %v980
      %v982 = vpop.f32.mrf.mxu0
      %v983 = vpop.f32.mrf.mxu0
      %v984 = vadd.f32 0.0, %v983
      %v985 = vpop.f32.mrf.mxu0
      %986 = vmatprep.mubr.bf16.mxu0 0
      %987 = vmatmul.mubr.bf16.gmra.mxu0 %v659
      %v988 = vpop.f32.mrf.mxu0
      %v989 = vadd.f32 0.0, %v988
      %v990 = vpop.f32.mrf.mxu0
      %v991 = vpop.f32.mrf.mxu0
      %v992 = vadd.f32 0.0, %v991
      %v993 = vpop.f32.mrf.mxu0
      %994 = vmatprep.mubr.bf16.mxu0 0
      %995 = vmatmul.mubr.bf16.gmra.mxu0 %v662
      %v996 = vpop.f32.mrf.mxu0
      %v997 = vadd.f32 0.0, %v996
      %v998 = vpop.f32.mrf.mxu0
      %v999 = vpop.f32.mrf.mxu0
      %v1000 = vadd.f32 0.0, %v999
      %v1001 = vpop.f32.mrf.mxu0
      %1002 = vmatprep.mubr.bf16.mxu0 0
      %1003 = vmatmul.mubr.bf16.gmra.mxu0 %v665
      %v1004 = vpop.f32.mrf.mxu0
      %v1005 = vadd.f32 0.0, %v1004
      %v1006 = vpop.f32.mrf.mxu0
      %v1007 = vpop.f32.mrf.mxu0
      %v1008 = vadd.f32 0.0, %v1007
      %v1009 = vpop.f32.mrf.mxu0
      %1010 = vmatprep.mubr.bf16.mxu0 0
      %1011 = vmatmul.mubr.bf16.gmra.mxu0 %v668
      %v1012 = vpop.f32.mrf.mxu0
      %v1013 = vadd.f32 0.0, %v1012
      %v1014 = vpop.f32.mrf.mxu0
      %v1015 = vpop.f32.mrf.mxu0
      %v1016 = vadd.f32 0.0, %v1015
      %v1017 = vpop.f32.mrf.mxu0
      %1018 = vmatprep.mubr.bf16.mxu0 0
      %1019 = vmatmul.mubr.bf16.gmra.mxu0 %v671
      %v1020 = vpop.f32.mrf.mxu0
      %v1021 = vadd.f32 0.0, %v1020
      %v1022 = vpop.f32.mrf.mxu0
      %v1023 = vpop.f32.mrf.mxu0
      %v1024 = vadd.f32 0.0, %v1023
      %v1025 = vpop.f32.mrf.mxu0
      %1026 = vmatprep.mubr.bf16.mxu0 0
      %1027 = vmatmul.mubr.bf16.gmra.mxu0 %v674
      %v1028 = vpop.f32.mrf.mxu0
      %v1029 = vadd.f32 0.0, %v1028
      %v1030 = vpop.f32.mrf.mxu0
      %v1031 = vpop.f32.mrf.mxu0
      %v1032 = vadd.f32 0.0, %v1031
      %v1033 = vpop.f32.mrf.mxu0
      %1034 = vmatprep.mubr.bf16.mxu0 0
      %1035 = vmatmul.mubr.bf16.gmra.mxu0 %v677
      %v1036 = vpop.f32.mrf.mxu0
      %v1037 = vadd.f32 0.0, %v1036
      %v1038 = vpop.f32.mrf.mxu0
      %v1039 = vpop.f32.mrf.mxu0
      %v1040 = vadd.f32 0.0, %v1039
      %v1041 = vpop.f32.mrf.mxu0
      %1042 = vmatprep.mubr.bf16.mxu0 0
      %1043 = vmatmul.mubr.bf16.gmra.mxu0 %v680
      %v1044 = vpop.f32.mrf.mxu0
      %v1045 = vadd.f32 0.0, %v1044
      %v1046 = vpop.f32.mrf.mxu0
      %v1047 = vpop.f32.mrf.mxu0
      %v1048 = vadd.f32 0.0, %v1047
      %v1049 = vpop.f32.mrf.mxu0
      %1050 = vmatprep.mubr.bf16.mxu0 0
      %1051 = vmatmul.mubr.bf16.gmra.mxu0 %v683
      %v1052 = vpop.f32.mrf.mxu0
      %v1053 = vadd.f32 0.0, %v1052
      %v1054 = vpop.f32.mrf.mxu0
      %v1055 = vpop.f32.mrf.mxu0
      %v1056 = vadd.f32 0.0, %v1055
      %v1057 = vpop.f32.mrf.mxu0
      %1058 = vmatprep.mubr.bf16.mxu0 0
      %1059 = vmatmul.mubr.bf16.gmra.mxu0 %v686
      %v1060 = vpop.f32.mrf.mxu0
      %v1061 = vadd.f32 0.0, %v1060
      %v1062 = vpop.f32.mrf.mxu0
      %v1063 = vpop.f32.mrf.mxu0
      %v1064 = vadd.f32 0.0, %v1063
      %v1065 = vpop.f32.mrf.mxu0
      %1066 = vmatprep.mubr.bf16.mxu0 0
      %1067 = vmatmul.mubr.bf16.gmra.mxu0 %v689
      %v1068 = vpop.f32.mrf.mxu0
      %v1069 = vadd.f32 0.0, %v1068
      %v1070 = vpop.f32.mrf.mxu0
      %v1071 = vpop.f32.mrf.mxu0
      %v1072 = vadd.f32 0.0, %v1071
      %v1073 = vpop.f32.mrf.mxu0
      %1074 = vmatprep.mubr.bf16.mxu0 0
      %1075 = vmatmul.mubr.bf16.gmra.mxu0 %v692
      %v1076 = vpop.f32.mrf.mxu0
      %v1077 = vadd.f32 0.0, %v1076
      %v1078 = vpop.f32.mrf.mxu0
      %v1079 = vpop.f32.mrf.mxu0
      %v1080 = vadd.f32 0.0, %v1079
      %v1081 = vpop.f32.mrf.mxu0
      %1082 = vmatprep.mubr.bf16.mxu0 0
      %1083 = vmatmul.mubr.bf16.gmra.mxu0 %v695
      %v1084 = vpop.f32.mrf.mxu0
      %v1085 = vadd.f32 0.0, %v1084
      %v1086 = vpop.f32.mrf.mxu0
      %v1087 = vpop.f32.mrf.mxu0
      %v1088 = vadd.f32 0.0, %v1087
      %v1089 = vpop.f32.mrf.mxu0
      %1090 = vmatprep.mubr.bf16.mxu0 0
      %1091 = vmatmul.mubr.bf16.gmra.mxu0 %v698
      %v1092 = vpop.f32.mrf.mxu0
      %v1093 = vadd.f32 0.0, %v1092
      %v1094 = vpop.f32.mrf.mxu0
      %v1095 = vpop.f32.mrf.mxu0
      %v1096 = vadd.f32 0.0, %v1095
      %v1097 = vpop.f32.mrf.mxu0
      %1098 = vmatprep.mubr.bf16.mxu0 0
      %1099 = vmatmul.mubr.bf16.gmra.mxu0 %v701
      %v1100 = vpop.f32.mrf.mxu0
      %v1101 = vadd.f32 0.0, %v1100
      %v1102 = vpop.f32.mrf.mxu0
      %v1103 = vpop.f32.mrf.mxu0
      %v1104 = vadd.f32 0.0, %v1103
      %v1105 = vpop.f32.mrf.mxu0
      %1106 = vmatprep.mubr.bf16.mxu0 0
      %1107 = vmatmul.mubr.bf16.gmra.mxu0 %v704
      %v1108 = vpop.f32.mrf.mxu0
      %v1109 = vadd.f32 0.0, %v1108
      %v1110 = vpop.f32.mrf.mxu0
      %v1111 = vpop.f32.mrf.mxu0
      %v1112 = vadd.f32 0.0, %v1111
      %v1113 = vpop.f32.mrf.mxu0
      %1114 = vmatprep.mubr.bf16.mxu0 0
      %1115 = vmatmul.mubr.bf16.gmra.mxu0 %v707
      %v1116 = vpop.f32.mrf.mxu0
      %v1117 = vadd.f32 0.0, %v1116
      %v1118 = vpop.f32.mrf.mxu0
      %v1119 = vpop.f32.mrf.mxu0
      %v1120 = vadd.f32 0.0, %v1119
      %v1121 = vpop.f32.mrf.mxu0
      %1122 = vmatprep.mubr.bf16.mxu0 0
      %1123 = vmatmul.mubr.bf16.gmra.mxu0 %v710
      %v1124 = vpop.f32.mrf.mxu0
      %v1125 = vadd.f32 0.0, %v1124
      %v1126 = vpop.f32.mrf.mxu0
      %v1127 = vpop.f32.mrf.mxu0
      %v1128 = vadd.f32 0.0, %v1127
      %v1129 = vpop.f32.mrf.mxu0
      %1130 = vmatprep.mubr.bf16.mxu0 0
      %1131 = vmatmul.mubr.bf16.gmra.mxu0 %v713
      %v1132 = vpop.f32.mrf.mxu0
      %v1133 = vadd.f32 0.0, %v1132
      %v1134 = vpop.f32.mrf.mxu0
      %v1135 = vpop.f32.mrf.mxu0
      %v1136 = vadd.f32 0.0, %v1135
      %v1137 = vpop.f32.mrf.mxu0
      %1138 = vmatprep.mubr.bf16.mxu0 0
      %1139 = vmatmul.mubr.bf16.gmra.mxu0 %v716
      %v1140 = vpop.f32.mrf.mxu0
      %v1141 = vadd.f32 0.0, %v1140
      %v1142 = vpop.f32.mrf.mxu0
      %v1143 = vpop.f32.mrf.mxu0
      %v1144 = vadd.f32 0.0, %v1143
      %v1145 = vpop.f32.mrf.mxu0
      %1146 = vmatprep.mubr.bf16.mxu0 0
      %1147 = vmatmul.mubr.bf16.gmra.mxu0 %v719
      %v1148 = vpop.f32.mrf.mxu0
      %v1149 = vadd.f32 0.0, %v1148
      %v1150 = vpop.f32.mrf.mxu0
      %v1151 = vpop.f32.mrf.mxu0
      %v1152 = vadd.f32 0.0, %v1151
      %v1153 = vpop.f32.mrf.mxu0
      %1154 = vmatprep.mubr.bf16.mxu0 0
      %1155 = vmatmul.mubr.bf16.gmra.mxu0 %v722
      %v1156 = vpop.f32.mrf.mxu0
      %v1157 = vadd.f32 0.0, %v1156
      %v1158 = vpop.f32.mrf.mxu0
      %v1159 = vpop.f32.mrf.mxu0
      %v1160 = vadd.f32 0.0, %v1159
      %v1161 = vpop.f32.mrf.mxu0
      %1162 = vmatprep.mubr.bf16.mxu0 0
      %1163 = vmatmul.mubr.bf16.gmra.mxu0 %v725
      %v1164 = vpop.f32.mrf.mxu0
      %v1165 = vadd.f32 0.0, %v1164
      %v1166 = vpop.f32.mrf.mxu0
      %v1167 = vpop.f32.mrf.mxu0
      %v1168 = vadd.f32 0.0, %v1167
      %v1169 = vpop.f32.mrf.mxu0
      %1170 = vmatprep.mubr.bf16.mxu0 0
      %1171 = vmatmul.mubr.bf16.gmra.mxu0 %v728
      %v1172 = vpop.f32.mrf.mxu0
      %v1173 = vadd.f32 0.0, %v1172
      %v1174 = vpop.f32.mrf.mxu0
      %v1175 = vpop.f32.mrf.mxu0
      %v1176 = vadd.f32 0.0, %v1175
      %v1177 = vpop.f32.mrf.mxu0
      %1178 = vmatprep.mubr.bf16.mxu0 0
      %1179 = vmatmul.mubr.bf16.gmra.mxu0 %v731
      %v1180 = vpop.f32.mrf.mxu0
      %v1181 = vadd.f32 0.0, %v1180
      %v1182 = vpop.f32.mrf.mxu0
      %v1183 = vpop.f32.mrf.mxu0
      %v1184 = vadd.f32 0.0, %v1183
      %v1185 = vpop.f32.mrf.mxu0
      %1186 = vmatprep.mubr.bf16.mxu0 0
      %1187 = vmatmul.mubr.bf16.gmra.mxu0 %v734
      %v1188 = vpop.f32.mrf.mxu0
      %v1189 = vadd.f32 0.0, %v1188
      %v1190 = vpop.f32.mrf.mxu0
      %v1191 = vpop.f32.mrf.mxu0
      %v1192 = vadd.f32 0.0, %v1191
      %v1193 = vpop.f32.mrf.mxu0
      %1194 = vmatprep.mubr.bf16.mxu0 0
      %1195 = vmatmul.mubr.bf16.gmra.mxu0 %v737
      %v1196 = vpop.f32.mrf.mxu0
      %v1197 = vadd.f32 0.0, %v1196
      %v1198 = vpop.f32.mrf.mxu0
      %v1199 = vpop.f32.mrf.mxu0
      %v1200 = vadd.f32 0.0, %v1199
      %v1201 = vpop.f32.mrf.mxu0
      %1202 = vmatprep.mubr.bf16.mxu0 0
      %1203 = vmatmul.mubr.bf16.gmra.mxu0 %v740
      %v1204 = vpop.f32.mrf.mxu0
      %v1205 = vadd.f32 0.0, %v1204
      %v1206 = vpop.f32.mrf.mxu0
      %v1207 = vpop.f32.mrf.mxu0
      %v1208 = vadd.f32 0.0, %v1207
      %v1209 = vpop.f32.mrf.mxu0
      %1210 = vmatprep.mubr.bf16.mxu0 0
      %1211 = vmatmul.mubr.bf16.gmra.mxu0 %v743
      %v1212 = vpop.f32.mrf.mxu0
      %v1213 = vadd.f32 0.0, %v1212
      %v1214 = vpop.f32.mrf.mxu0
      %v1215 = vpop.f32.mrf.mxu0
      %v1216 = vadd.f32 0.0, %v1215
      %v1217 = vpop.f32.mrf.mxu0
      %1218 = vmatprep.mubr.bf16.mxu0 0
      %1219 = vmatmul.mubr.bf16.gmra.mxu0 %v746
      %v1220 = vpop.f32.mrf.mxu0
      %v1221 = vadd.f32 0.0, %v1220
      %v1222 = vpop.f32.mrf.mxu0
      %v1223 = vpop.f32.mrf.mxu0
      %v1224 = vadd.f32 0.0, %v1223
      %v1225 = vpop.f32.mrf.mxu0
      %1226 = vmatprep.mubr.bf16.mxu0 0
      %1227 = vmatmul.mubr.bf16.gmra.mxu0 %v749
      %v1228 = vpop.f32.mrf.mxu0
      %v1229 = vadd.f32 0.0, %v1228
      %v1230 = vpop.f32.mrf.mxu0
      %v1231 = vpop.f32.mrf.mxu0
      %v1232 = vadd.f32 0.0, %v1231
      %v1233 = vpop.f32.mrf.mxu0
      %1234 = vmatprep.mubr.bf16.mxu0 0
      %1235 = vmatmul.mubr.bf16.gmra.mxu0 %v752
      %v1236 = vpop.f32.mrf.mxu0
      %v1237 = vadd.f32 0.0, %v1236
      %v1238 = vpop.f32.mrf.mxu0
      %v1239 = vpop.f32.mrf.mxu0
      %v1240 = vadd.f32 0.0, %v1239
      %v1241 = vpop.f32.mrf.mxu0
      %1242 = vmatprep.mubr.bf16.mxu0 0
      %1243 = vmatmul.mubr.bf16.gmra.mxu0 %v755
      %v1244 = vpop.f32.mrf.mxu0
      %v1245 = vadd.f32 0.0, %v1244
      %v1246 = vpop.f32.mrf.mxu0
      %v1247 = vpop.f32.mrf.mxu0
      %v1248 = vadd.f32 0.0, %v1247
      %v1249 = vpop.f32.mrf.mxu0
      %1250 = vmatprep.mubr.bf16.mxu0 0
      %1251 = vmatmul.mubr.bf16.gmra.mxu0 %v758
      %v1252 = vpop.f32.mrf.mxu0
      %v1253 = vadd.f32 0.0, %v1252
      %v1254 = vpop.f32.mrf.mxu0
      %v1255 = vpop.f32.mrf.mxu0
      %v1256 = vadd.f32 0.0, %v1255
      %v1257 = vpop.f32.mrf.mxu0
      %1258 = vmatprep.mubr.bf16.mxu0 0
      %1259 = vmatmul.mubr.bf16.gmra.mxu0 %v761
      %v1260 = vpop.f32.mrf.mxu0
      %v1261 = vadd.f32 0.0, %v1260
      %v1262 = vpop.f32.mrf.mxu0
      %v1263 = vpop.f32.mrf.mxu0
      %v1264 = vadd.f32 0.0, %v1263
      %v1265 = vpop.f32.mrf.mxu0
      %1266 = vmatprep.mubr.bf16.mxu0 0
      %1267 = vmatmul.mubr.bf16.gmra.mxu0 %v764
      %v1268 = vpop.f32.mrf.mxu0
      %v1269 = vadd.f32 0.0, %v1268
      %v1270 = vpop.f32.mrf.mxu0
      %v1271 = vpop.f32.mrf.mxu0
      %v1272 = vadd.f32 0.0, %v1271
      %v1273 = vpop.f32.mrf.mxu0
      %1274 = vmatprep.mubr.bf16.mxu0 0
      %1275 = vmatmul.mubr.bf16.gmra.mxu0 %v767
      %v1276 = vpop.f32.mrf.mxu0
      %v1277 = vadd.f32 0.0, %v1276
      %v1278 = vpop.f32.mrf.mxu0
      %v1279 = vpop.f32.mrf.mxu0
      %v1280 = vadd.f32 0.0, %v1279
      %v1281 = vpop.f32.mrf.mxu0
      %1282 = vmatprep.mubr.bf16.mxu0 0
      %1283 = vmatmul.mubr.bf16.gmra.mxu0 %v770
      %v1284 = vpop.f32.mrf.mxu0
      %v1285 = vadd.f32 0.0, %v1284
      %v1286 = vpop.f32.mrf.mxu0
      %v1287 = vpop.f32.mrf.mxu0
      %v1288 = vadd.f32 0.0, %v1287
      %v1289 = vpop.f32.mrf.mxu0
      %1290 = vmatprep.mubr.bf16.mxu0 0
      %1291 = vmatmul.mubr.bf16.gmra.mxu0 %v773
      %v1292 = vpop.f32.mrf.mxu0
      %v1293 = vadd.f32 0.0, %v1292
      %v1294 = vpop.f32.mrf.mxu0
      %v1295 = vpop.f32.mrf.mxu0
      %v1296 = vadd.f32 0.0, %v1295
      %v1297 = vpop.f32.mrf.mxu0
      %1298 = vmatprep.mubr.bf16.mxu0 0
      %1299 = vmatmul.mubr.bf16.gmra.mxu0 %v776
      %v1300 = vpop.f32.mrf.mxu0
      %v1301 = vadd.f32 0.0, %v1300
      %v1302 = vpop.f32.mrf.mxu0
      %v1303 = vpop.f32.mrf.mxu0
      %v1304 = vadd.f32 0.0, %v1303
      %v1305 = vpop.f32.mrf.mxu0
      %1306 = vmatprep.mubr.bf16.mxu0 0
      %1307 = vmatmul.mubr.bf16.gmra.mxu0 %v779
      %v1308 = vpop.f32.mrf.mxu0
      %v1309 = vadd.f32 0.0, %v1308
      %v1310 = vpop.f32.mrf.mxu0
      %v1311 = vpop.f32.mrf.mxu0
      %v1312 = vadd.f32 0.0, %v1311
      %v1313 = vpop.f32.mrf.mxu0
      %1314 = vmatprep.mubr.bf16.mxu0 0
      %1315 = vmatmul.mubr.bf16.gmra.mxu0 %v782
      %v1316 = vpop.f32.mrf.mxu0
      %v1317 = vadd.f32 0.0, %v1316
      %v1318 = vpop.f32.mrf.mxu0
      %v1319 = vpop.f32.mrf.mxu0
      %v1320 = vadd.f32 0.0, %v1319
      %v1321 = vpop.f32.mrf.mxu0
      %1322 = vmatprep.mubr.bf16.mxu0 0
      %1323 = vmatmul.mubr.bf16.gmra.mxu0 %v785
      %v1324 = vpop.f32.mrf.mxu0
      %v1325 = vadd.f32 0.0, %v1324
      %v1326 = vpop.f32.mrf.mxu0
      %v1327 = vpop.f32.mrf.mxu0
      %v1328 = vadd.f32 0.0, %v1327
      %v1329 = vpop.f32.mrf.mxu0
      %1330 = vmatprep.mubr.bf16.mxu0 0
      %1331 = vmatmul.mubr.bf16.gmra.mxu0 %v788
      %v1332 = vpop.f32.mrf.mxu0
      %v1333 = vadd.f32 0.0, %v1332
      %v1334 = vpop.f32.mrf.mxu0
      %v1335 = vpop.f32.mrf.mxu0
      %v1336 = vadd.f32 0.0, %v1335
      %v1337 = vpop.f32.mrf.mxu0
      %1338 = vdwg.mxu0
      %vm1339 = vcmask 392192
      %1340 = vst.msk [vmem:[%s145] sm:$0xff] %vm1339, %v829
      %1341 = vst.msk [vmem:[%s145 + $0x8] sm:$0xff] %vm1339, %v832
      %1342 = vst.msk [vmem:[%s145 + $0x10] sm:$0xff] %vm1339, %v837
      %1343 = vst.msk [vmem:[%s145 + $0x18] sm:$0xff] %vm1339, %v840
      %1344 = vst.msk [vmem:[%s145 + $0x20] sm:$0xff] %vm1339, %v845
      %1345 = vst.msk [vmem:[%s145 + $0x28] sm:$0xff] %vm1339, %v848
      %1346 = vst.msk [vmem:[%s145 + $0x30] sm:$0xff] %vm1339, %v853
      %1347 = vst.msk [vmem:[%s145 + $0x38] sm:$0xff] %vm1339, %v856
      %1348 = vst.msk [vmem:[%s145 + $0x40] sm:$0xff] %vm1339, %v861
      %1349 = vst.msk [vmem:[%s145 + $0x48] sm:$0xff] %vm1339, %v864
      %1350 = vst.msk [vmem:[%s145 + $0x50] sm:$0xff] %vm1339, %v869
      %1351 = vst.msk [vmem:[%s145 + $0x58] sm:$0xff] %vm1339, %v872
      %1352 = vst.msk [vmem:[%s145 + $0x60] sm:$0xff] %vm1339, %v877
      %1353 = vst.msk [vmem:[%s145 + $0x68] sm:$0xff] %vm1339, %v880
      %1354 = vst.msk [vmem:[%s145 + $0x70] sm:$0xff] %vm1339, %v885
      %1355 = vst.msk [vmem:[%s145 + $0x78] sm:$0xff] %vm1339, %v888
      %1356 = vst.msk [vmem:[%s145 + $0x80] sm:$0xff] %vm1339, %v893
      %1357 = vst.msk [vmem:[%s145 + $0x88] sm:$0xff] %vm1339, %v896
      %1358 = vst.msk [vmem:[%s145 + $0x90] sm:$0xff] %vm1339, %v901
      %1359 = vst.msk [vmem:[%s145 + $0x98] sm:$0xff] %vm1339, %v904
      %1360 = vst.msk [vmem:[%s145 + $0xa0] sm:$0xff] %vm1339, %v909
      %1361 = vst.msk [vmem:[%s145 + $0xa8] sm:$0xff] %vm1339, %v912
      %1362 = vst.msk [vmem:[%s145 + $0xb0] sm:$0xff] %vm1339, %v917
      %1363 = vst.msk [vmem:[%s145 + $0xb8] sm:$0xff] %vm1339, %v920
      %1364 = vst.msk [vmem:[%s145 + $0xc0] sm:$0xff] %vm1339, %v925
      %1365 = vst.msk [vmem:[%s145 + $0xc8] sm:$0xff] %vm1339, %v928
      %1366 = vst.msk [vmem:[%s145 + $0xd0] sm:$0xff] %vm1339, %v933
      %1367 = vst.msk [vmem:[%s145 + $0xd8] sm:$0xff] %vm1339, %v936
      %1368 = vst.msk [vmem:[%s145 + $0xe0] sm:$0xff] %vm1339, %v941
      %1369 = vst.msk [vmem:[%s145 + $0xe8] sm:$0xff] %vm1339, %v944
      %1370 = vst.msk [vmem:[%s145 + $0xf0] sm:$0xff] %vm1339, %v949
      %1371 = vst.msk [vmem:[%s145 + $0xf8] sm:$0xff] %vm1339, %v952
      %1372 = vst.msk [vmem:[%s145 + $0x100] sm:$0xff] %vm1339, %v957
      %1373 = vst.msk [vmem:[%s145 + $0x108] sm:$0xff] %vm1339, %v960
      %1374 = vst.msk [vmem:[%s145 + $0x110] sm:$0xff] %vm1339, %v965
      %1375 = vst.msk [vmem:[%s145 + $0x118] sm:$0xff] %vm1339, %v968
      %1376 = vst.msk [vmem:[%s145 + $0x120] sm:$0xff] %vm1339, %v973
      %1377 = vst.msk [vmem:[%s145 + $0x128] sm:$0xff] %vm1339, %v976
      %1378 = vst.msk [vmem:[%s145 + $0x130] sm:$0xff] %vm1339, %v981
      %1379 = vst.msk [vmem:[%s145 + $0x138] sm:$0xff] %vm1339, %v984
      %1380 = vst.msk [vmem:[%s145 + $0x140] sm:$0xff] %vm1339, %v989
      %1381 = vst.msk [vmem:[%s145 + $0x148] sm:$0xff] %vm1339, %v992
      %1382 = vst.msk [vmem:[%s145 + $0x150] sm:$0xff] %vm1339, %v997
      %1383 = vst.msk [vmem:[%s145 + $0x158] sm:$0xff] %vm1339, %v1000
      %1384 = vst.msk [vmem:[%s145 + $0x160] sm:$0xff] %vm1339, %v1005
      %1385 = vst.msk [vmem:[%s145 + $0x168] sm:$0xff] %vm1339, %v1008
      %1386 = vst.msk [vmem:[%s145 + $0x170] sm:$0xff] %vm1339, %v1013
      %1387 = vst.msk [vmem:[%s145 + $0x178] sm:$0xff] %vm1339, %v1016
      %1388 = vst.msk [vmem:[%s145 + $0x180] sm:$0xff] %vm1339, %v1021
      %1389 = vst.msk [vmem:[%s145 + $0x188] sm:$0xff] %vm1339, %v1024
      %1390 = vst.msk [vmem:[%s145 + $0x190] sm:$0xff] %vm1339, %v1029
      %1391 = vst.msk [vmem:[%s145 + $0x198] sm:$0xff] %vm1339, %v1032
      %1392 = vst.msk [vmem:[%s145 + $0x1a0] sm:$0xff] %vm1339, %v1037
      %1393 = vst.msk [vmem:[%s145 + $0x1a8] sm:$0xff] %vm1339, %v1040
      %1394 = vst.msk [vmem:[%s145 + $0x1b0] sm:$0xff] %vm1339, %v1045
      %1395 = vst.msk [vmem:[%s145 + $0x1b8] sm:$0xff] %vm1339, %v1048
      %1396 = vst.msk [vmem:[%s145 + $0x1c0] sm:$0xff] %vm1339, %v1053
      %1397 = vst.msk [vmem:[%s145 + $0x1c8] sm:$0xff] %vm1339, %v1056
      %1398 = vst.msk [vmem:[%s145 + $0x1d0] sm:$0xff] %vm1339, %v1061
      %1399 = vst.msk [vmem:[%s145 + $0x1d8] sm:$0xff] %vm1339, %v1064
      %1400 = vst.msk [vmem:[%s145 + $0x1e0] sm:$0xff] %vm1339, %v1069
      %1401 = vst.msk [vmem:[%s145 + $0x1e8] sm:$0xff] %vm1339, %v1072
      %1402 = vst.msk [vmem:[%s145 + $0x1f0] sm:$0xff] %vm1339, %v1077
      %1403 = vst.msk [vmem:[%s145 + $0x1f8] sm:$0xff] %vm1339, %v1080
      %1404 = vst.msk [vmem:[%s145 + $0x200] sm:$0xff] %vm1339, %v1085
      %1405 = vst.msk [vmem:[%s145 + $0x208] sm:$0xff] %vm1339, %v1088
      %1406 = vst.msk [vmem:[%s145 + $0x210] sm:$0xff] %vm1339, %v1093
      %1407 = vst.msk [vmem:[%s145 + $0x218] sm:$0xff] %vm1339, %v1096
      %1408 = vst.msk [vmem:[%s145 + $0x220] sm:$0xff] %vm1339, %v1101
      %1409 = vst.msk [vmem:[%s145 + $0x228] sm:$0xff] %vm1339, %v1104
      %1410 = vst.msk [vmem:[%s145 + $0x230] sm:$0xff] %vm1339, %v1109
      %1411 = vst.msk [vmem:[%s145 + $0x238] sm:$0xff] %vm1339, %v1112
      %1412 = vst.msk [vmem:[%s145 + $0x240] sm:$0xff] %vm1339, %v1117
      %1413 = vst.msk [vmem:[%s145 + $0x248] sm:$0xff] %vm1339, %v1120
      %1414 = vst.msk [vmem:[%s145 + $0x250] sm:$0xff] %vm1339, %v1125
      %1415 = vst.msk [vmem:[%s145 + $0x258] sm:$0xff] %vm1339, %v1128
      %1416 = vst.msk [vmem:[%s145 + $0x260] sm:$0xff] %vm1339, %v1133
      %1417 = vst.msk [vmem:[%s145 + $0x268] sm:$0xff] %vm1339, %v1136
      %1418 = vst.msk [vmem:[%s145 + $0x270] sm:$0xff] %vm1339, %v1141
      %1419 = vst.msk [vmem:[%s145 + $0x278] sm:$0xff] %vm1339, %v1144
      %1420 = vst.msk [vmem:[%s145 + $0x280] sm:$0xff] %vm1339, %v1149
      %1421 = vst.msk [vmem:[%s145 + $0x288] sm:$0xff] %vm1339, %v1152
      %1422 = vst.msk [vmem:[%s145 + $0x290] sm:$0xff] %vm1339, %v1157
      %1423 = vst.msk [vmem:[%s145 + $0x298] sm:$0xff] %vm1339, %v1160
      %1424 = vst.msk [vmem:[%s145 + $0x2a0] sm:$0xff] %vm1339, %v1165
      %1425 = vst.msk [vmem:[%s145 + $0x2a8] sm:$0xff] %vm1339, %v1168
      %1426 = vst.msk [vmem:[%s145 + $0x2b0] sm:$0xff] %vm1339, %v1173
      %1427 = vst.msk [vmem:[%s145 + $0x2b8] sm:$0xff] %vm1339, %v1176
      %1428 = vst.msk [vmem:[%s145 + $0x2c0] sm:$0xff] %vm1339, %v1181
      %1429 = vst.msk [vmem:[%s145 + $0x2c8] sm:$0xff] %vm1339, %v1184
      %1430 = vst.msk [vmem:[%s145 + $0x2d0] sm:$0xff] %vm1339, %v1189
      %1431 = vst.msk [vmem:[%s145 + $0x2d8] sm:$0xff] %vm1339, %v1192
      %1432 = vst.msk [vmem:[%s145 + $0x2e0] sm:$0xff] %vm1339, %v1197
      %1433 = vst.msk [vmem:[%s145 + $0x2e8] sm:$0xff] %vm1339, %v1200
      %1434 = vst.msk [vmem:[%s145 + $0x2f0] sm:$0xff] %vm1339, %v1205
      %1435 = vst.msk [vmem:[%s145 + $0x2f8] sm:$0xff] %vm1339, %v1208
      %1436 = vst.msk [vmem:[%s145 + $0x300] sm:$0xff] %vm1339, %v1213
      %1437 = vst.msk [vmem:[%s145 + $0x308] sm:$0xff] %vm1339, %v1216
      %1438 = vst.msk [vmem:[%s145 + $0x310] sm:$0xff] %vm1339, %v1221
      %1439 = vst.msk [vmem:[%s145 + $0x318] sm:$0xff] %vm1339, %v1224
      %1440 = vst.msk [vmem:[%s145 + $0x320] sm:$0xff] %vm1339, %v1229
      %1441 = vst.msk [vmem:[%s145 + $0x328] sm:$0xff] %vm1339, %v1232
      %1442 = vst.msk [vmem:[%s145 + $0x330] sm:$0xff] %vm1339, %v1237
      %1443 = vst.msk [vmem:[%s145 + $0x338] sm:$0xff] %vm1339, %v1240
      %1444 = vst.msk [vmem:[%s145 + $0x340] sm:$0xff] %vm1339, %v1245
      %1445 = vst.msk [vmem:[%s145 + $0x348] sm:$0xff] %vm1339, %v1248
      %1446 = vst.msk [vmem:[%s145 + $0x350] sm:$0xff] %vm1339, %v1253
      %1447 = vst.msk [vmem:[%s145 + $0x358] sm:$0xff] %vm1339, %v1256
      %1448 = vst.msk [vmem:[%s145 + $0x360] sm:$0xff] %vm1339, %v1261
      %1449 = vst.msk [vmem:[%s145 + $0x368] sm:$0xff] %vm1339, %v1264
      %1450 = vst.msk [vmem:[%s145 + $0x370] sm:$0xff] %vm1339, %v1269
      %1451 = vst.msk [vmem:[%s145 + $0x378] sm:$0xff] %vm1339, %v1272
      %1452 = vst.msk [vmem:[%s145 + $0x380] sm:$0xff] %vm1339, %v1277
      %1453 = vst.msk [vmem:[%s145 + $0x388] sm:$0xff] %vm1339, %v1280
      %1454 = vst.msk [vmem:[%s145 + $0x390] sm:$0xff] %vm1339, %v1285
      %1455 = vst.msk [vmem:[%s145 + $0x398] sm:$0xff] %vm1339, %v1288
      %1456 = vst.msk [vmem:[%s145 + $0x3a0] sm:$0xff] %vm1339, %v1293
      %1457 = vst.msk [vmem:[%s145 + $0x3a8] sm:$0xff] %vm1339, %v1296
      %1458 = vst.msk [vmem:[%s145 + $0x3b0] sm:$0xff] %vm1339, %v1301
      %1459 = vst.msk [vmem:[%s145 + $0x3b8] sm:$0xff] %vm1339, %v1304
      %1460 = vst.msk [vmem:[%s145 + $0x3c0] sm:$0xff] %vm1339, %v1309
      %1461 = vst.msk [vmem:[%s145 + $0x3c8] sm:$0xff] %vm1339, %v1312
      %1462 = vst.msk [vmem:[%s145 + $0x3d0] sm:$0xff] %vm1339, %v1317
      %1463 = vst.msk [vmem:[%s145 + $0x3d8] sm:$0xff] %vm1339, %v1320
      %1464 = vst.msk [vmem:[%s145 + $0x3e0] sm:$0xff] %vm1339, %v1325
      %1465 = vst.msk [vmem:[%s145 + $0x3e8] sm:$0xff] %vm1339, %v1328
      %1466 = vst.msk [vmem:[%s145 + $0x3f0] sm:$0xff] %vm1339, %v1333
      %1467 = vst.msk [vmem:[%s145 + $0x3f8] sm:$0xff] %vm1339, %v1336
      %s1468 = smul.u32 128, %s13
      %p1469 = scmp.lt.s32.totalorder %s1468, 255
      %s1470 = scalar_select %p1469, %s1468, 255
      %s1471 = smul.addr %s1470, 8
      %s1472 = scalar_lea.vmem %s2, %s1471
      // Predicated region
      $region29: #{generator_forward.26} parent=27 // pred_check
        %p1473 = pneg %p78
      $region30: #{generator_forward.26} parent=27 // pred_check_branch
        %1475 = sbr.rel (%p1473) target = $region32
      $region31: #{generator_forward.26} parent=27 // pred_region
        %s1476 = smul.u32 128, %s13
      $region32: #{generator_forward.26} parent=27 // pred_fallthru
        _
    $region28: #{generator_forward.26} parent=5 // pred_fallthru
      _
    %p1477 = scmp.le.s32.totalorder 2, %s8
    // Predicated region
    $region33: #{generator_forward.26} parent=5 // pred_check
      %p1478 = pneg %p1477
    $region34: #{generator_forward.26} parent=5 // pred_check_branch
      %1480 = sbr.rel (%p1478) target = $region36
    $region35: #{generator_forward.26} parent=5 // pred_region
      %s1481 = ssub.s32 %s8, 2
      // Predicated region
      $region37: #{generator_forward.26} parent=35 // pred_check
        %p1482 = pneg %p84
      $region38: #{generator_forward.26} parent=35 // pred_check_branch
        %1484 = sbr.rel (%p1482) target = $region40
      $region39: #{generator_forward.26} parent=35 // pred_region
        %s1485 = smul.u32 128, %s14
        %p1486 = scmp.lt.s32.totalorder %s1485, 255
        %s1487 = scalar_select %p1486, %s1485, 255
        %s1488 = smul.addr %s1487, 8
        %s1489 = scalar_lea.vmem %s2, %s1488
      $region40: #{generator_forward.26} parent=35 // pred_fallthru
        _
    $region36: #{generator_forward.26} parent=5 // pred_fallthru
      _
  $region6: #{generator_forward.26} parent=0 // loop_footer
    %s12 = sadd.s32 1, %s8
  $region7: #{generator_forward.26} parent=0 // loop_footer_branch
    %7 = sbr.rel target = $region3
  $region8: #{generator_forward.26} parent=0 // loop_exit
    _

// kernel: tile.37
$region0: #{tile.37}
  #allocation0 [shape = 's32[1]{0}', space=sflag, size = 0x4, scoped, tag = 'scoped memory for tile.37']
  %s0 = inlined_call_operand.<no memory space> [shape: f32[], index: 0, kind: input, shape index: {}]
  %s1 = inlined_call_operand.vmem [shape: f32[1,384], index: 1, kind: output, shape index: {}]
  %v2 = vstv %s0
  %3 = vst [vmem:[%s1] sm:$0x1] %v2
  %s4 = scalar_lea.vmem %s1, 1
  %5 = vst [vmem:[%s4] sm:$0x1] %v2
  %s6 = scalar_lea.vmem %s1, 2
  %7 = vst [vmem:[%s6] sm:$0x1] %v2

// kernel: generator_forward.27
$region0: #{generator_forward.27}
  #allocation0 [shape = 'u32[]', space=smem, size = 0x4, offset = 0x4, fixed_abs, tag = 'smem constant byte address 0x4 - core index']
  #allocation1 [shape = 'u32[144,128]{1,0:T(1,128)}', space=vmem, size = 0x12000, scoped, tag = 'internal scratch']
  %s0 = inlined_call_operand.vmem [shape: f32[64,384], index: 0, kind: input, shape index: {}]
  %s1 = inlined_call_operand.vmem [shape: f32[1,384], index: 1, kind: input, shape index: {}]
  %s2 = inlined_call_operand.vmem [shape: f32[1,384], index: 2, kind: input, shape index: {}]
  %s3 = inlined_call_operand.vmem [shape: f32[64,384], index: 3, kind: output, shape index: {}]
  %s4 = sld [smem:[#allocation0]]
  $region22: #{generator_forward.27} parent=0
    _
  %s6 = ssub.s32 1, %s4
  %s7 = scalar_select 0, %s6, %s4
  // Predicated region
  $region2: #{generator_forward.27} parent=0 // pred_check
    _
  $region3: #{generator_forward.27} parent=0 // pred_check_branch
    %9 = sbr.rel (0) target = $region5
  $region4: #{generator_forward.27} parent=0 // pred_region
    _
  $region5: #{generator_forward.27} parent=0 // pred_fallthru
    _
  // Predicated region
  $region6: #{generator_forward.27} parent=0 // pred_check
    _
  $region7: #{generator_forward.27} parent=0 // pred_check_branch
    %11 = sbr.rel (0) target = $region9
  $region8: #{generator_forward.27} parent=0 // pred_region
    _
  $region9: #{generator_forward.27} parent=0 // pred_fallthru
    _
  // Predicated region
  $region10: #{generator_forward.27} parent=0 // pred_check
    _
  $region11: #{generator_forward.27} parent=0 // pred_check_branch
    %13 = sbr.rel (0) target = $region13
  $region12: #{generator_forward.27} parent=0 // pred_region
    _
  $region13: #{generator_forward.27} parent=0 // pred_fallthru
    _
  %v14 = vld [vmem:[%s0] sm:$0xff]
  %v15 = vld [vmem:[%s0 + $0x8] sm:$0xff]
  %v16 = vld [vmem:[%s0 + $0x10] sm:$0xff]
  %v17 = vld [vmem:[%s0 + $0x18] sm:$0xff]
  %v18 = vld [vmem:[%s0 + $0x20] sm:$0xff]
  %v19 = vld [vmem:[%s0 + $0x28] sm:$0xff]
  %v20 = vld [vmem:[%s0 + $0x30] sm:$0xff]
  %v21 = vld [vmem:[%s0 + $0x38] sm:$0xff]
  %v22 = vld [vmem:[%s0 + $0x40] sm:$0xff]
  %v23 = vld [vmem:[%s0 + $0x48] sm:$0xff]
  %v24 = vld [vmem:[%s0 + $0x50] sm:$0xff]
  %v25 = vld [vmem:[%s0 + $0x58] sm:$0xff]
  %v26 = vld [vmem:[%s0 + $0x60] sm:$0xff]
  %v27 = vld [vmem:[%s0 + $0x68] sm:$0xff]
  %v28 = vld [vmem:[%s0 + $0x70] sm:$0xff]
  %v29 = vld [vmem:[%s0 + $0x78] sm:$0xff]
  %v30 = vld [vmem:[%s0 + $0x80] sm:$0xff]
  %v31 = vld [vmem:[%s0 + $0x88] sm:$0xff]
  %v32 = vld [vmem:[%s0 + $0x90] sm:$0xff]
  %v33 = vld [vmem:[%s0 + $0x98] sm:$0xff]
  %v34 = vld [vmem:[%s0 + $0xa0] sm:$0xff]
  %v35 = vld [vmem:[%s0 + $0xa8] sm:$0xff]
  %v36 = vld [vmem:[%s0 + $0xb0] sm:$0xff]
  %v37 = vld [vmem:[%s0 + $0xb8] sm:$0xff]
  %v38 = vld [vmem:[%s1] sm:$0x7]
  %v40 = vlaneseq
  %v41 = vshrl.u32 %v40, 7
  %v42 = vsub.s32 0, %v41
  %v43 = vrot.slane %v38, %v42
  %v44 = vlaneseq
  %v45 = vshrl.u32 %v44, 7
  %v46 = vsub.s32 1, %v45
  %v47 = vrot.slane %v38, %v46
  %v48 = vlaneseq
  %v49 = vshrl.u32 %v48, 7
  %v50 = vsub.s32 2, %v49
  %v51 = vrot.slane %v38, %v50
  %v55 = vmul.f32 %v14, %v43
  %v56 = vmul.f32 %v15, %v47
  %v57 = vmul.f32 %v16, %v51
  %v58 = vmul.f32 %v17, %v43
  %v59 = vmul.f32 %v18, %v47
  %v60 = vmul.f32 %v19, %v51
  %v61 = vmul.f32 %v20, %v43
  %v62 = vmul.f32 %v21, %v47
  %v63 = vmul.f32 %v22, %v51
  %v64 = vmul.f32 %v23, %v43
  %v65 = vmul.f32 %v24, %v47
  %v66 = vmul.f32 %v25, %v51
  %v67 = vmul.f32 %v26, %v43
  %v68 = vmul.f32 %v27, %v47
  %v69 = vmul.f32 %v28, %v51
  %v70 = vmul.f32 %v29, %v43
  %v71 = vmul.f32 %v30, %v47
  %v72 = vmul.f32 %v31, %v51
  %v73 = vmul.f32 %v32, %v43
  %v74 = vmul.f32 %v33, %v47
  %v75 = vmul.f32 %v34, %v51
  %v76 = vmul.f32 %v35, %v43
  %v77 = vmul.f32 %v36, %v47
  %v78 = vmul.f32 %v37, %v51
  %v79 = vld [vmem:[%s2] sm:$0x7]
  %v81 = vlaneseq
  %v82 = vshrl.u32 %v81, 7
  %v83 = vsub.s32 0, %v82
  %v84 = vrot.slane %v79, %v83
  %v85 = vlaneseq
  %v86 = vshrl.u32 %v85, 7
  %v87 = vsub.s32 1, %v86
  %v88 = vrot.slane %v79, %v87
  %v89 = vlaneseq
  %v90 = vshrl.u32 %v89, 7
  %v91 = vsub.s32 2, %v90
  %v92 = vrot.slane %v79, %v91
  %v96 = vadd.f32 %v55, %v84
  %v97 = vadd.f32 %v56, %v88
  %v98 = vadd.f32 %v57, %v92
  %v99 = vadd.f32 %v58, %v84
  %v100 = vadd.f32 %v59, %v88
  %v101 = vadd.f32 %v60, %v92
  %v102 = vadd.f32 %v61, %v84
  %v103 = vadd.f32 %v62, %v88
  %v104 = vadd.f32 %v63, %v92
  %v105 = vadd.f32 %v64, %v84
  %v106 = vadd.f32 %v65, %v88
  %v107 = vadd.f32 %v66, %v92
  %v108 = vadd.f32 %v67, %v84
  %v109 = vadd.f32 %v68, %v88
  %v110 = vadd.f32 %v69, %v92
  %v111 = vadd.f32 %v70, %v84
  %v112 = vadd.f32 %v71, %v88
  %v113 = vadd.f32 %v72, %v92
  %v114 = vadd.f32 %v73, %v84
  %v115 = vadd.f32 %v74, %v88
  %v116 = vadd.f32 %v75, %v92
  %v117 = vadd.f32 %v76, %v84
  %v118 = vadd.f32 %v77, %v88
  %v119 = vadd.f32 %v78, %v92
  %v120 = vtanh.pop %v96
  %v121 = vtanh.pop %v97
  %v122 = vtanh.pop %v98
  %v123 = vtanh.pop %v99
  %v124 = vtanh.pop %v100
  %v125 = vtanh.pop %v101
  %v126 = vtanh.pop %v102
  %v127 = vtanh.pop %v103
  %v128 = vtanh.pop %v104
  %v129 = vtanh.pop %v105
  %v130 = vtanh.pop %v106
  %v131 = vtanh.pop %v107
  %v132 = vtanh.pop %v108
  %v133 = vtanh.pop %v109
  %v134 = vtanh.pop %v110
  %v135 = vtanh.pop %v111
  %v136 = vtanh.pop %v112
  %v137 = vtanh.pop %v113
  %v138 = vtanh.pop %v114
  %v139 = vtanh.pop %v115
  %v140 = vtanh.pop %v116
  %v141 = vtanh.pop %v117
  %v142 = vtanh.pop %v118
  %v143 = vtanh.pop %v119
  %144 = vst [vmem:[%s3] sm:$0xff] %v120
  %145 = vst [vmem:[%s3 + $0x8] sm:$0xff] %v121
  %146 = vst [vmem:[%s3 + $0x10] sm:$0xff] %v122
  %147 = vst [vmem:[%s3 + $0x18] sm:$0xff] %v123
  %148 = vst [vmem:[%s3 + $0x20] sm:$0xff] %v124
  %149 = vst [vmem:[%s3 + $0x28] sm:$0xff] %v125
  %150 = vst [vmem:[%s3 + $0x30] sm:$0xff] %v126
  %151 = vst [vmem:[%s3 + $0x38] sm:$0xff] %v127
  %152 = vst [vmem:[%s3 + $0x40] sm:$0xff] %v128
  %153 = vst [vmem:[%s3 + $0x48] sm:$0xff] %v129
  %154 = vst [vmem:[%s3 + $0x50] sm:$0xff] %v130
  %155 = vst [vmem:[%s3 + $0x58] sm:$0xff] %v131
  %156 = vst [vmem:[%s3 + $0x60] sm:$0xff] %v132
  %157 = vst [vmem:[%s3 + $0x68] sm:$0xff] %v133
  %158 = vst [vmem:[%s3 + $0x70] sm:$0xff] %v134
  %159 = vst [vmem:[%s3 + $0x78] sm:$0xff] %v135
  %160 = vst [vmem:[%s3 + $0x80] sm:$0xff] %v136
  %161 = vst [vmem:[%s3 + $0x88] sm:$0xff] %v137
  %162 = vst [vmem:[%s3 + $0x90] sm:$0xff] %v138
  %163 = vst [vmem:[%s3 + $0x98] sm:$0xff] %v139
  %164 = vst [vmem:[%s3 + $0xa0] sm:$0xff] %v140
  %165 = vst [vmem:[%s3 + $0xa8] sm:$0xff] %v141
  %166 = vst [vmem:[%s3 + $0xb0] sm:$0xff] %v142
  %167 = vst [vmem:[%s3 + $0xb8] sm:$0xff] %v143
  // Predicated region
  $region14: #{generator_forward.27} parent=0 // pred_check
    _
  $region15: #{generator_forward.27} parent=0 // pred_check_branch
    %169 = sbr.rel (0) target = $region17
  $region16: #{generator_forward.27} parent=0 // pred_region
    _
  $region17: #{generator_forward.27} parent=0 // pred_fallthru
    _
  // Predicated region
  $region18: #{generator_forward.27} parent=0 // pred_check
    _
  $region19: #{generator_forward.27} parent=0 // pred_check_branch
    %171 = sbr.rel (0) target = $region21
  $region20: #{generator_forward.27} parent=0 // pred_region
    _
  $region21: #{generator_forward.27} parent=0 // pred_fallthru
    _

</llo_original>
